<compile_context>
chip_gen: v7x
topology: tpu7x:2x2x1
jax: 0.10.0
libtpu: 0.0.40
codegen_flags: <defaults>
</compile_context>

<pallas_src>
import jax
import jax.numpy as jnp
from jax.experimental import pallas as pl
from jax.experimental.pallas import tpu as pltpu

C = 200          # conv in/out channels
K = 5            # conv kernel size
POOL = 5         # maxpool kernel/stride
H = 64           # LSTM hidden size
NUM_LAYERS = 3   # LSTM layers
NUM_CLASSES = 20
BN_EPS = 1e-5


# ----------------------------------------------------------------------------
# One fused kernel: conv+BN+ReLU+pool -> 3 LSTM layers -> fc on last step.
# Grid is over batch blocks; each program handles Bblk batch elements.
# ----------------------------------------------------------------------------
def fused_kernel(x_ref, cw_ref, cb_ref,
                 wih0_ref, whh0_ref, b0_ref,
                 wih1_ref, whh1_ref, b1_ref,
                 wih2_ref, whh2_ref, b2_ref,
                 fcw_ref, fcb_ref, o_ref):
    # x_ref:   (Bblk, L, C) bf16   time-major, channels on lanes
    # cw_ref:  (K*C, C)     bf16   BN-folded conv weight, im2col row order (k, cin)
    # cb_ref:  (1, C)       f32    BN-folded conv bias
    # wihX:    (Din, 4H)    bf16   transposed W_ih  (Din = 200 for layer 0, else 64)
    # whhX:    (H, 4H)      bf16   transposed W_hh
    # bX:      (1, 4H)      f32    b_ih + b_hh
    # fcw_ref: (H, 20) bf16, fcb_ref: (1, 20) f32
    # o_ref:   (Bblk, 20)   f32
    Bblk, L, _ = x_ref.shape
    L_out = L - K + 1
    T = L_out // POOL                      # pooled sequence length (floor mode)

    x = x_ref[...]                                         # (Bblk, L, C) bf16

    # ---- Conv1d(valid) + folded BN + ReLU as ONE MXU contraction -----------
    # im2col along the lane axis, then (Bblk*L_out, K*C) @ (K*C, C).
    xim = jnp.concatenate([x[:, k:k + L_out, :] for k in range(K)], axis=2)
    xim = xim.reshape(Bblk * L_out, K * C)
    acc = jnp.dot(xim, cw_ref[...], preferred_element_type=jnp.float32)
    acc = jnp.maximum(acc + cb_ref[...], 0.0)              # (Bblk*L_out, C) f32

    # ---- MaxPool1d(kernel=5, stride=5): reshape + sublane max-reduce -------
    if L_out != T * POOL:                                  # floor mode remainder
        acc = acc.reshape(Bblk, L_out, C)[:, :T * POOL, :].reshape(
            Bblk * T, POOL, C)
    else:
        acc = acc.reshape(Bblk * T, POOL, C)
    pooled = jnp.max(acc, axis=1)                          # (Bblk*T, C) batch-major

    # ---- 3-layer LSTM with batched (Bblk, H) state --------------------------
    def recurrence(xw3, whh, time_leading):
        # xw3: (T, Bblk, 4H) if time_leading else (Bblk, T, 4H); whh bf16 (H, 4H)
        h = jnp.zeros((Bblk, H), jnp.float32)
        c = jnp.zeros((Bblk, H), jnp.float32)
        hs = []
        for t in range(T):                                 # small T, unrolled
            g_x = xw3[t] if time_leading else xw3[:, t, :]
            gates = g_x + jnp.dot(h.astype(jnp.bfloat16), whh,
                                  preferred_element_type=jnp.float32)
            sig = jax.nn.sigmoid(gates)                    # full-width EUP
            tah = jnp.tanh(gates)
            i_g = sig[:, 0 * H:1 * H]                      # PyTorch order i,f,g,o
            f_g = sig[:, 1 * H:2 * H]
            g_g = tah[:, 2 * H:3 * H]
            o_g = sig[:, 3 * H:4 * H]
            c = f_g * c + i_g * g_g
            h = o_g * jnp.tanh(c)
            hs.append(h)
        return hs

    # Layer 0: input projection hoisted out of the recurrence:
    # one (Bblk*T, 200) @ (200, 256) matmul.
    xw0 = (jnp.dot(pooled.astype(jnp.bfloat16), wih0_ref[...],
                   preferred_element_type=jnp.float32) + b0_ref[...])
    hs = recurrence(xw0.reshape(Bblk, T, 4 * H), whh0_ref[...], False)

    # Layers 1 & 2 run time-major: concat of (Bblk, H) steps along axis 0 is a
    # clean sublane concat and the per-step gate slab is a leading-index slice.
    for wih_ref, whh_ref, b_ref in ((wih1_ref, whh1_ref, b1_ref),
                                    (wih2_ref, whh2_ref, b2_ref)):
        seq_tm = jnp.concatenate(hs, axis=0)               # (T*Bblk, H), (t, b) order
        xw = (jnp.dot(seq_tm.astype(jnp.bfloat16), wih_ref[...],
                      preferred_element_type=jnp.float32) + b_ref[...])
        hs = recurrence(xw.reshape(T, Bblk, 4 * H), whh_ref[...], True)

    h_last = hs[-1]                                        # (Bblk, H) f32

    # ---- Final Linear(64 -> 20) on the last timestep -------------------------
    o_ref[...] = (jnp.dot(h_last.astype(jnp.bfloat16), fcw_ref[...],
                          preferred_element_type=jnp.float32) + fcb_ref[...])


def _pick_bblk(B):
    # Keep >= 2 grid steps so the "parallel" axis can shard across both v7x TCs;
    # cap the block at 8 (plenty of MXU rows once multiplied by L_out).
    if B <= 2:
        return 1
    if B < 16:
        return max(1, B // 2)
    return 8


def forward(params, x):
    # x: (B, 200, L) float32  (NCL, like the PyTorch Conv1d input)
    B, _, L = x.shape
    # Layout plumbing outside the kernel: time-major so channels sit on lanes;
    # bf16 halves the input DMA and feeds the MXU its fast path.
    x_seq = jnp.transpose(x, (0, 2, 1)).astype(jnp.bfloat16)   # (B, L, C)

    bblk = _pick_bblk(B)
    n_blocks = pl.cdiv(B, bblk)
    b_pad = n_blocks * bblk
    if b_pad != B:
        x_seq = jnp.pad(x_seq, ((0, b_pad - B), (0, 0), (0, 0)))

    w2 = lambda i: (0, 0)
    out = pl.pallas_call(
        fused_kernel,
        out_shape=jax.ShapeDtypeStruct((n_blocks, bblk, NUM_CLASSES), jnp.float32),
        grid=(n_blocks,),
        in_specs=[
            pl.BlockSpec((bblk, L, C), lambda i: (i, 0, 0)),   # x, per batch block
            pl.BlockSpec((K * C, C), w2),                      # conv weight (im2col)
            pl.BlockSpec((1, C), w2),                          # conv bias (BN folded)
            pl.BlockSpec((C, 4 * H), w2),                      # lstm0 W_ih^T
            pl.BlockSpec((H, 4 * H), w2),                      # lstm0 W_hh^T
            pl.BlockSpec((1, 4 * H), w2),                      # lstm0 bias
            pl.BlockSpec((H, 4 * H), w2),                      # lstm1 W_ih^T
            pl.BlockSpec((H, 4 * H), w2),                      # lstm1 W_hh^T
            pl.BlockSpec((1, 4 * H), w2),                      # lstm1 bias
            pl.BlockSpec((H, 4 * H), w2),                      # lstm2 W_ih^T
            pl.BlockSpec((H, 4 * H), w2),                      # lstm2 W_hh^T
            pl.BlockSpec((1, 4 * H), w2),                      # lstm2 bias
            pl.BlockSpec((H, NUM_CLASSES), w2),                # fc weight^T
            pl.BlockSpec((1, NUM_CLASSES), w2),                # fc bias
        ],
        out_specs=pl.BlockSpec((None, bblk, NUM_CLASSES), lambda i: (i, 0, 0)),
        compiler_params=pltpu.CompilerParams(
            dimension_semantics=("parallel",)),
    )(x_seq, params["conv_w"], params["conv_b"],
      *params["lstm"][0], *params["lstm"][1], *params["lstm"][2],
      params["fc_w"], params["fc_b"])
    return out.reshape(b_pad, NUM_CLASSES)[:B]


# ----------------------------------------------------------------------------
# Deterministic parameter construction (BN folded into conv, bf16 MXU weights)
# ----------------------------------------------------------------------------
def init_params(key):
    keys = jax.random.split(key, 16)
    p = {}
    # Conv1d(200, 200, 5), PyTorch layout (Cout, Cin, K)
    s = 1.0 / jnp.sqrt(C * K)
    conv_w = jax.random.uniform(keys[0], (C, C, K), jnp.float32, -s, s)
    conv_b = jax.random.uniform(keys[1], (C,), jnp.float32, -s, s)
    # BatchNorm1d(200) inference-mode defaults: gamma=1, beta=0, mean=0, var=1
    gamma = jnp.ones((C,), jnp.float32)
    beta = jnp.zeros((C,), jnp.float32)
    mean = jnp.zeros((C,), jnp.float32)
    var = jnp.ones((C,), jnp.float32)
    scale = gamma / jnp.sqrt(var + BN_EPS)
    shift = beta - mean * scale
    w_folded = conv_w * scale[:, None, None]              # scale per out-channel
    b_folded = conv_b * scale + shift
    # (Cout, Cin, K) -> (K, Cin, Cout) -> (K*Cin, Cout); matches im2col row order.
    p["conv_w"] = jnp.transpose(w_folded, (2, 1, 0)).reshape(K * C, C).astype(
        jnp.bfloat16)
    p["conv_b"] = b_folded.reshape(1, C)
    # LSTM(200, 64, 3), PyTorch gate order i, f, g, o
    s_l = 1.0 / jnp.sqrt(H)
    p["lstm"] = []
    kidx = 2
    for layer in range(NUM_LAYERS):
        din = C if layer == 0 else H
        w_ih = jax.random.uniform(keys[kidx], (4 * H, din), jnp.float32, -s_l, s_l)
        w_hh = jax.random.uniform(keys[kidx + 1], (4 * H, H), jnp.float32, -s_l, s_l)
        b_ih = jax.random.uniform(keys[kidx + 2], (4 * H,), jnp.float32, -s_l, s_l)
        b_hh = jax.random.uniform(keys[kidx + 3], (4 * H,), jnp.float32, -s_l, s_l)
        kidx += 4
        p["lstm"].append((w_ih.T.astype(jnp.bfloat16),
                          w_hh.T.astype(jnp.bfloat16),
                          (b_ih + b_hh).reshape(1, 4 * H)))
    # Linear(64, 20)
    fc_w = jax.random.uniform(keys[14], (NUM_CLASSES, H), jnp.float32, -s_l, s_l)
    fc_b = jax.random.uniform(keys[15], (NUM_CLASSES,), jnp.float32, -s_l, s_l)
    p["fc_w"] = fc_w.T.astype(jnp.bfloat16)
    p["fc_b"] = fc_b.reshape(1, NUM_CLASSES)
    return p


if __name__ == "__main__":
    key = jax.random.PRNGKey(0)
    pkey, xkey = jax.random.split(key)
    params = init_params(pkey)

    B, L = 2, 24   # conv: 24 -> 20, maxpool: 20 -> 4 time steps
    x = jax.random.normal(xkey, (B, C, L), jnp.float32)

    fwd = jax.jit(forward)
    out = jax.block_until_ready(fwd(params, x))
    assert out.shape == (B, NUM_CLASSES), out.shape
    print("KERNEL_OK")
</pallas_src>

<mosaic_0001>
module attributes {stable_mosaic.version = 11 : i64} {
  func.func @fused_kernel(%arg0: i32, %arg1: memref<1x24x200xbf16, #tpu.memory_space<vmem>>, %arg2: memref<1000x200xbf16, #tpu.memory_space<vmem>>, %arg3: memref<1x200xf32, #tpu.memory_space<vmem>>, %arg4: memref<200x256xbf16, #tpu.memory_space<vmem>>, %arg5: memref<64x256xbf16, #tpu.memory_space<vmem>>, %arg6: memref<1x256xf32, #tpu.memory_space<vmem>>, %arg7: memref<64x256xbf16, #tpu.memory_space<vmem>>, %arg8: memref<64x256xbf16, #tpu.memory_space<vmem>>, %arg9: memref<1x256xf32, #tpu.memory_space<vmem>>, %arg10: memref<64x256xbf16, #tpu.memory_space<vmem>>, %arg11: memref<64x256xbf16, #tpu.memory_space<vmem>>, %arg12: memref<1x256xf32, #tpu.memory_space<vmem>>, %arg13: memref<64x20xbf16, #tpu.memory_space<vmem>>, %arg14: memref<1x20xf32, #tpu.memory_space<vmem>>, %arg15: memref<1x1x20xf32, #tpu.memory_space<vmem>>) attributes {dimension_semantics = [#tpu.dimension_semantics<parallel>], iteration_bounds = array<i64: 2>, scalar_prefetch = 0 : i64, scratch_operands = 0 : i64, tpu.core_type = #tpu.core_type<tc>, window_params = [{transform_indices = @transform_0, window_bounds = array<i64: 1, 24, 200>}, {pipeline_mode = #tpu.pipeline_mode<synchronous>, transform_indices = @transform_1, window_bounds = array<i64: 1000, 200>}, {pipeline_mode = #tpu.pipeline_mode<synchronous>, transform_indices = @transform_2, window_bounds = array<i64: 1, 200>}, {pipeline_mode = #tpu.pipeline_mode<synchronous>, transform_indices = @transform_3, window_bounds = array<i64: 200, 256>}, {pipeline_mode = #tpu.pipeline_mode<synchronous>, transform_indices = @transform_4, window_bounds = array<i64: 64, 256>}, {pipeline_mode = #tpu.pipeline_mode<synchronous>, transform_indices = @transform_5, window_bounds = array<i64: 1, 256>}, {pipeline_mode = #tpu.pipeline_mode<synchronous>, transform_indices = @transform_6, window_bounds = array<i64: 64, 256>}, {pipeline_mode = #tpu.pipeline_mode<synchronous>, transform_indices = @transform_7, window_bounds = array<i64: 64, 256>}, {pipeline_mode = #tpu.pipeline_mode<synchronous>, transform_indices = @transform_8, window_bounds = array<i64: 1, 256>}, {pipeline_mode = #tpu.pipeline_mode<synchronous>, transform_indices = @transform_9, window_bounds = array<i64: 64, 256>}, {pipeline_mode = #tpu.pipeline_mode<synchronous>, transform_indices = @transform_10, window_bounds = array<i64: 64, 256>}, {pipeline_mode = #tpu.pipeline_mode<synchronous>, transform_indices = @transform_11, window_bounds = array<i64: 1, 256>}, {pipeline_mode = #tpu.pipeline_mode<synchronous>, transform_indices = @transform_12, window_bounds = array<i64: 64, 20>}, {pipeline_mode = #tpu.pipeline_mode<synchronous>, transform_indices = @transform_13, window_bounds = array<i64: 1, 20>}, {transform_indices = @transform_14, window_bounds = array<i64: 1, 1, 20>}]} {
    %c0 = arith.constant 0 : index
    %c0_0 = arith.constant 0 : index
    %c0_1 = arith.constant 0 : index
    %0 = vector.load %arg1[%c0, %c0_0, %c0_1] : memref<1x24x200xbf16, #tpu.memory_space<vmem>>, vector<1x24x200xbf16>
    %1 = vector.extract_strided_slice %0 {offsets = [0, 0, 0], sizes = [1, 20, 200], strides = [1, 1, 1]} : vector<1x24x200xbf16> to vector<1x20x200xbf16>
    %2 = vector.extract_strided_slice %0 {offsets = [0, 1, 0], sizes = [1, 20, 200], strides = [1, 1, 1]} : vector<1x24x200xbf16> to vector<1x20x200xbf16>
    %3 = vector.extract_strided_slice %0 {offsets = [0, 2, 0], sizes = [1, 20, 200], strides = [1, 1, 1]} : vector<1x24x200xbf16> to vector<1x20x200xbf16>
    %4 = vector.extract_strided_slice %0 {offsets = [0, 3, 0], sizes = [1, 20, 200], strides = [1, 1, 1]} : vector<1x24x200xbf16> to vector<1x20x200xbf16>
    %5 = vector.extract_strided_slice %0 {offsets = [0, 4, 0], sizes = [1, 20, 200], strides = [1, 1, 1]} : vector<1x24x200xbf16> to vector<1x20x200xbf16>
    %6 = tpu.concatenate %1, %2, %3, %4, %5 in 2 : vector<1x20x200xbf16>, vector<1x20x200xbf16>, vector<1x20x200xbf16>, vector<1x20x200xbf16>, vector<1x20x200xbf16> -> vector<1x20x1000xbf16>
    %7 = vector.shape_cast %6 : vector<1x20x1000xbf16> to vector<20x1000xbf16>
    %c0_2 = arith.constant 0 : index
    %c0_3 = arith.constant 0 : index
    %8 = vector.load %arg2[%c0_2, %c0_3] : memref<1000x200xbf16, #tpu.memory_space<vmem>>, vector<1000x200xbf16>
    %cst = arith.constant dense<0.000000e+00> : vector<20x200xf32>
    %9 = tpu.matmul %7, %8, %cst {dimension_numbers = #tpu.dot_dimension_numbers<[1], [0], [0], [1], [0, 0, 1, 1], [], []>} : vector<20x1000xbf16>, vector<1000x200xbf16>, vector<20x200xf32> -> vector<20x200xf32>
    %c0_4 = arith.constant 0 : index
    %c0_5 = arith.constant 0 : index
    %10 = vector.load %arg3[%c0_4, %c0_5] : memref<1x200xf32, #tpu.memory_space<vmem>>, vector<1x200xf32>
    %11 = vector.broadcast %10 : vector<1x200xf32> to vector<20x200xf32>
    %12 = arith.addf %9, %11 : vector<20x200xf32>
    %cst_6 = arith.constant 0.000000e+00 : f32
    %13 = vector.broadcast %cst_6 : f32 to vector<20x200xf32>
    %14 = arith.maximumf %12, %13 : vector<20x200xf32>
    %15 = vector.shape_cast %14 : vector<20x200xf32> to vector<4x5x200xf32>
    %cst_7 = arith.constant dense<0xFF800000> : vector<4x200xf32>
    %16 = vector.multi_reduction <maximumf>, %15, %cst_7 [1] : vector<4x5x200xf32> to vector<4x200xf32>
    %17 = arith.truncf %16 : vector<4x200xf32> to vector<4x200xbf16>
    %c0_8 = arith.constant 0 : index
    %c0_9 = arith.constant 0 : index
    %18 = vector.load %arg4[%c0_8, %c0_9] : memref<200x256xbf16, #tpu.memory_space<vmem>>, vector<200x256xbf16>
    %cst_10 = arith.constant dense<0.000000e+00> : vector<4x256xf32>
    %19 = tpu.matmul %17, %18, %cst_10 {dimension_numbers = #tpu.dot_dimension_numbers<[1], [0], [0], [1], [0, 0, 1, 1], [], []>} : vector<4x200xbf16>, vector<200x256xbf16>, vector<4x256xf32> -> vector<4x256xf32>
    %c0_11 = arith.constant 0 : index
    %c0_12 = arith.constant 0 : index
    %20 = vector.load %arg6[%c0_11, %c0_12] : memref<1x256xf32, #tpu.memory_space<vmem>>, vector<1x256xf32>
    %21 = vector.broadcast %20 : vector<1x256xf32> to vector<4x256xf32>
    %22 = arith.addf %19, %21 : vector<4x256xf32>
    %23 = vector.shape_cast %22 : vector<4x256xf32> to vector<1x4x256xf32>
    %c0_13 = arith.constant 0 : index
    %c0_14 = arith.constant 0 : index
    %24 = vector.load %arg5[%c0_13, %c0_14] : memref<64x256xbf16, #tpu.memory_space<vmem>>, vector<64x256xbf16>
    %cst_15 = arith.constant 0.000000e+00 : f32
    %25 = vector.broadcast %cst_15 : f32 to vector<1x64xf32>
    %cst_16 = arith.constant 0.000000e+00 : f32
    %26 = vector.broadcast %cst_16 : f32 to vector<1x64xf32>
    %27 = vector.extract_strided_slice %23 {offsets = [0, 0, 0], sizes = [1, 1, 256], strides = [1, 1, 1]} : vector<1x4x256xf32> to vector<1x1x256xf32>
    %28 = vector.shape_cast %27 : vector<1x1x256xf32> to vector<1x256xf32>
    %29 = arith.truncf %25 : vector<1x64xf32> to vector<1x64xbf16>
    %cst_17 = arith.constant dense<0.000000e+00> : vector<1x256xf32>
    %30 = tpu.matmul %29, %24, %cst_17 {dimension_numbers = #tpu.dot_dimension_numbers<[1], [0], [0], [1], [0, 0, 1, 1], [], []>} : vector<1x64xbf16>, vector<64x256xbf16>, vector<1x256xf32> -> vector<1x256xf32>
    %31 = arith.addf %28, %30 : vector<1x256xf32>
    %32 = arith.negf %31 : vector<1x256xf32>
    %33 = math.exp %32 : vector<1x256xf32>
    %cst_18 = arith.constant 1.000000e+00 : f32
    %34 = vector.broadcast %cst_18 : f32 to vector<1x256xf32>
    %35 = arith.addf %34, %33 : vector<1x256xf32>
    %36 = arith.divf %34, %35 : vector<1x256xf32>
    %37 = math.tanh %31 : vector<1x256xf32>
    %38 = vector.extract_strided_slice %36 {offsets = [0, 0], sizes = [1, 64], strides = [1, 1]} : vector<1x256xf32> to vector<1x64xf32>
    %39 = vector.extract_strided_slice %36 {offsets = [0, 64], sizes = [1, 64], strides = [1, 1]} : vector<1x256xf32> to vector<1x64xf32>
    %40 = vector.extract_strided_slice %37 {offsets = [0, 128], sizes = [1, 64], strides = [1, 1]} : vector<1x256xf32> to vector<1x64xf32>
    %41 = vector.extract_strided_slice %36 {offsets = [0, 192], sizes = [1, 64], strides = [1, 1]} : vector<1x256xf32> to vector<1x64xf32>
    %42 = arith.mulf %39, %26 : vector<1x64xf32>
    %43 = arith.mulf %38, %40 : vector<1x64xf32>
    %44 = arith.addf %42, %43 : vector<1x64xf32>
    %45 = math.tanh %44 : vector<1x64xf32>
    %46 = arith.mulf %41, %45 : vector<1x64xf32>
    %47 = vector.extract_strided_slice %23 {offsets = [0, 1, 0], sizes = [1, 1, 256], strides = [1, 1, 1]} : vector<1x4x256xf32> to vector<1x1x256xf32>
    %48 = vector.shape_cast %47 : vector<1x1x256xf32> to vector<1x256xf32>
    %49 = arith.truncf %46 : vector<1x64xf32> to vector<1x64xbf16>
    %cst_19 = arith.constant dense<0.000000e+00> : vector<1x256xf32>
    %50 = tpu.matmul %49, %24, %cst_19 {dimension_numbers = #tpu.dot_dimension_numbers<[1], [0], [0], [1], [0, 0, 1, 1], [], []>} : vector<1x64xbf16>, vector<64x256xbf16>, vector<1x256xf32> -> vector<1x256xf32>
    %51 = arith.addf %48, %50 : vector<1x256xf32>
    %52 = arith.negf %51 : vector<1x256xf32>
    %53 = math.exp %52 : vector<1x256xf32>
    %cst_20 = arith.constant 1.000000e+00 : f32
    %54 = vector.broadcast %cst_20 : f32 to vector<1x256xf32>
    %55 = arith.addf %54, %53 : vector<1x256xf32>
    %56 = arith.divf %54, %55 : vector<1x256xf32>
    %57 = math.tanh %51 : vector<1x256xf32>
    %58 = vector.extract_strided_slice %56 {offsets = [0, 0], sizes = [1, 64], strides = [1, 1]} : vector<1x256xf32> to vector<1x64xf32>
    %59 = vector.extract_strided_slice %56 {offsets = [0, 64], sizes = [1, 64], strides = [1, 1]} : vector<1x256xf32> to vector<1x64xf32>
    %60 = vector.extract_strided_slice %57 {offsets = [0, 128], sizes = [1, 64], strides = [1, 1]} : vector<1x256xf32> to vector<1x64xf32>
    %61 = vector.extract_strided_slice %56 {offsets = [0, 192], sizes = [1, 64], strides = [1, 1]} : vector<1x256xf32> to vector<1x64xf32>
    %62 = arith.mulf %59, %44 : vector<1x64xf32>
    %63 = arith.mulf %58, %60 : vector<1x64xf32>
    %64 = arith.addf %62, %63 : vector<1x64xf32>
    %65 = math.tanh %64 : vector<1x64xf32>
    %66 = arith.mulf %61, %65 : vector<1x64xf32>
    %67 = vector.extract_strided_slice %23 {offsets = [0, 2, 0], sizes = [1, 1, 256], strides = [1, 1, 1]} : vector<1x4x256xf32> to vector<1x1x256xf32>
    %68 = vector.shape_cast %67 : vector<1x1x256xf32> to vector<1x256xf32>
    %69 = arith.truncf %66 : vector<1x64xf32> to vector<1x64xbf16>
    %cst_21 = arith.constant dense<0.000000e+00> : vector<1x256xf32>
    %70 = tpu.matmul %69, %24, %cst_21 {dimension_numbers = #tpu.dot_dimension_numbers<[1], [0], [0], [1], [0, 0, 1, 1], [], []>} : vector<1x64xbf16>, vector<64x256xbf16>, vector<1x256xf32> -> vector<1x256xf32>
    %71 = arith.addf %68, %70 : vector<1x256xf32>
    %72 = arith.negf %71 : vector<1x256xf32>
    %73 = math.exp %72 : vector<1x256xf32>
    %cst_22 = arith.constant 1.000000e+00 : f32
    %74 = vector.broadcast %cst_22 : f32 to vector<1x256xf32>
    %75 = arith.addf %74, %73 : vector<1x256xf32>
    %76 = arith.divf %74, %75 : vector<1x256xf32>
    %77 = math.tanh %71 : vector<1x256xf32>
    %78 = vector.extract_strided_slice %76 {offsets = [0, 0], sizes = [1, 64], strides = [1, 1]} : vector<1x256xf32> to vector<1x64xf32>
    %79 = vector.extract_strided_slice %76 {offsets = [0, 64], sizes = [1, 64], strides = [1, 1]} : vector<1x256xf32> to vector<1x64xf32>
    %80 = vector.extract_strided_slice %77 {offsets = [0, 128], sizes = [1, 64], strides = [1, 1]} : vector<1x256xf32> to vector<1x64xf32>
    %81 = vector.extract_strided_slice %76 {offsets = [0, 192], sizes = [1, 64], strides = [1, 1]} : vector<1x256xf32> to vector<1x64xf32>
    %82 = arith.mulf %79, %64 : vector<1x64xf32>
    %83 = arith.mulf %78, %80 : vector<1x64xf32>
    %84 = arith.addf %82, %83 : vector<1x64xf32>
    %85 = math.tanh %84 : vector<1x64xf32>
    %86 = arith.mulf %81, %85 : vector<1x64xf32>
    %87 = vector.extract_strided_slice %23 {offsets = [0, 3, 0], sizes = [1, 1, 256], strides = [1, 1, 1]} : vector<1x4x256xf32> to vector<1x1x256xf32>
    %88 = vector.shape_cast %87 : vector<1x1x256xf32> to vector<1x256xf32>
    %89 = arith.truncf %86 : vector<1x64xf32> to vector<1x64xbf16>
    %cst_23 = arith.constant dense<0.000000e+00> : vector<1x256xf32>
    %90 = tpu.matmul %89, %24, %cst_23 {dimension_numbers = #tpu.dot_dimension_numbers<[1], [0], [0], [1], [0, 0, 1, 1], [], []>} : vector<1x64xbf16>, vector<64x256xbf16>, vector<1x256xf32> -> vector<1x256xf32>
    %91 = arith.addf %88, %90 : vector<1x256xf32>
    %92 = arith.negf %91 : vector<1x256xf32>
    %93 = math.exp %92 : vector<1x256xf32>
    %cst_24 = arith.constant 1.000000e+00 : f32
    %94 = vector.broadcast %cst_24 : f32 to vector<1x256xf32>
    %95 = arith.addf %94, %93 : vector<1x256xf32>
    %96 = arith.divf %94, %95 : vector<1x256xf32>
    %97 = math.tanh %91 : vector<1x256xf32>
    %98 = vector.extract_strided_slice %96 {offsets = [0, 0], sizes = [1, 64], strides = [1, 1]} : vector<1x256xf32> to vector<1x64xf32>
    %99 = vector.extract_strided_slice %96 {offsets = [0, 64], sizes = [1, 64], strides = [1, 1]} : vector<1x256xf32> to vector<1x64xf32>
    %100 = vector.extract_strided_slice %97 {offsets = [0, 128], sizes = [1, 64], strides = [1, 1]} : vector<1x256xf32> to vector<1x64xf32>
    %101 = vector.extract_strided_slice %96 {offsets = [0, 192], sizes = [1, 64], strides = [1, 1]} : vector<1x256xf32> to vector<1x64xf32>
    %102 = arith.mulf %99, %84 : vector<1x64xf32>
    %103 = arith.mulf %98, %100 : vector<1x64xf32>
    %104 = arith.addf %102, %103 : vector<1x64xf32>
    %105 = math.tanh %104 : vector<1x64xf32>
    %106 = arith.mulf %101, %105 : vector<1x64xf32>
    %107 = tpu.concatenate %46, %66, %86, %106 in 0 : vector<1x64xf32>, vector<1x64xf32>, vector<1x64xf32>, vector<1x64xf32> -> vector<4x64xf32>
    %108 = arith.truncf %107 : vector<4x64xf32> to vector<4x64xbf16>
    %c0_25 = arith.constant 0 : index
    %c0_26 = arith.constant 0 : index
    %109 = vector.load %arg7[%c0_25, %c0_26] : memref<64x256xbf16, #tpu.memory_space<vmem>>, vector<64x256xbf16>
    %cst_27 = arith.constant dense<0.000000e+00> : vector<4x256xf32>
    %110 = tpu.matmul %108, %109, %cst_27 {dimension_numbers = #tpu.dot_dimension_numbers<[1], [0], [0], [1], [0, 0, 1, 1], [], []>} : vector<4x64xbf16>, vector<64x256xbf16>, vector<4x256xf32> -> vector<4x256xf32>
    %c0_28 = arith.constant 0 : index
    %c0_29 = arith.constant 0 : index
    %111 = vector.load %arg9[%c0_28, %c0_29] : memref<1x256xf32, #tpu.memory_space<vmem>>, vector<1x256xf32>
    %112 = vector.broadcast %111 : vector<1x256xf32> to vector<4x256xf32>
    %113 = arith.addf %110, %112 : vector<4x256xf32>
    %114 = vector.shape_cast %113 : vector<4x256xf32> to vector<4x1x256xf32>
    %c0_30 = arith.constant 0 : index
    %c0_31 = arith.constant 0 : index
    %115 = vector.load %arg8[%c0_30, %c0_31] : memref<64x256xbf16, #tpu.memory_space<vmem>>, vector<64x256xbf16>
    %cst_32 = arith.constant 0.000000e+00 : f32
    %116 = vector.broadcast %cst_32 : f32 to vector<1x64xf32>
    %cst_33 = arith.constant 0.000000e+00 : f32
    %117 = vector.broadcast %cst_33 : f32 to vector<1x64xf32>
    %118 = vector.extract_strided_slice %114 {offsets = [0, 0, 0], sizes = [1, 1, 256], strides = [1, 1, 1]} : vector<4x1x256xf32> to vector<1x1x256xf32>
    %119 = vector.shape_cast %118 : vector<1x1x256xf32> to vector<1x256xf32>
    %120 = arith.truncf %116 : vector<1x64xf32> to vector<1x64xbf16>
    %cst_34 = arith.constant dense<0.000000e+00> : vector<1x256xf32>
    %121 = tpu.matmul %120, %115, %cst_34 {dimension_numbers = #tpu.dot_dimension_numbers<[1], [0], [0], [1], [0, 0, 1, 1], [], []>} : vector<1x64xbf16>, vector<64x256xbf16>, vector<1x256xf32> -> vector<1x256xf32>
    %122 = arith.addf %119, %121 : vector<1x256xf32>
    %123 = arith.negf %122 : vector<1x256xf32>
    %124 = math.exp %123 : vector<1x256xf32>
    %cst_35 = arith.constant 1.000000e+00 : f32
    %125 = vector.broadcast %cst_35 : f32 to vector<1x256xf32>
    %126 = arith.addf %125, %124 : vector<1x256xf32>
    %127 = arith.divf %125, %126 : vector<1x256xf32>
    %128 = math.tanh %122 : vector<1x256xf32>
    %129 = vector.extract_strided_slice %127 {offsets = [0, 0], sizes = [1, 64], strides = [1, 1]} : vector<1x256xf32> to vector<1x64xf32>
    %130 = vector.extract_strided_slice %127 {offsets = [0, 64], sizes = [1, 64], strides = [1, 1]} : vector<1x256xf32> to vector<1x64xf32>
    %131 = vector.extract_strided_slice %128 {offsets = [0, 128], sizes = [1, 64], strides = [1, 1]} : vector<1x256xf32> to vector<1x64xf32>
    %132 = vector.extract_strided_slice %127 {offsets = [0, 192], sizes = [1, 64], strides = [1, 1]} : vector<1x256xf32> to vector<1x64xf32>
    %133 = arith.mulf %130, %117 : vector<1x64xf32>
    %134 = arith.mulf %129, %131 : vector<1x64xf32>
    %135 = arith.addf %133, %134 : vector<1x64xf32>
    %136 = math.tanh %135 : vector<1x64xf32>
    %137 = arith.mulf %132, %136 : vector<1x64xf32>
    %138 = vector.extract_strided_slice %114 {offsets = [1, 0, 0], sizes = [1, 1, 256], strides = [1, 1, 1]} : vector<4x1x256xf32> to vector<1x1x256xf32>
    %139 = vector.shape_cast %138 : vector<1x1x256xf32> to vector<1x256xf32>
    %140 = arith.truncf %137 : vector<1x64xf32> to vector<1x64xbf16>
    %cst_36 = arith.constant dense<0.000000e+00> : vector<1x256xf32>
    %141 = tpu.matmul %140, %115, %cst_36 {dimension_numbers = #tpu.dot_dimension_numbers<[1], [0], [0], [1], [0, 0, 1, 1], [], []>} : vector<1x64xbf16>, vector<64x256xbf16>, vector<1x256xf32> -> vector<1x256xf32>
    %142 = arith.addf %139, %141 : vector<1x256xf32>
    %143 = arith.negf %142 : vector<1x256xf32>
    %144 = math.exp %143 : vector<1x256xf32>
    %cst_37 = arith.constant 1.000000e+00 : f32
    %145 = vector.broadcast %cst_37 : f32 to vector<1x256xf32>
    %146 = arith.addf %145, %144 : vector<1x256xf32>
    %147 = arith.divf %145, %146 : vector<1x256xf32>
    %148 = math.tanh %142 : vector<1x256xf32>
    %149 = vector.extract_strided_slice %147 {offsets = [0, 0], sizes = [1, 64], strides = [1, 1]} : vector<1x256xf32> to vector<1x64xf32>
    %150 = vector.extract_strided_slice %147 {offsets = [0, 64], sizes = [1, 64], strides = [1, 1]} : vector<1x256xf32> to vector<1x64xf32>
    %151 = vector.extract_strided_slice %148 {offsets = [0, 128], sizes = [1, 64], strides = [1, 1]} : vector<1x256xf32> to vector<1x64xf32>
    %152 = vector.extract_strided_slice %147 {offsets = [0, 192], sizes = [1, 64], strides = [1, 1]} : vector<1x256xf32> to vector<1x64xf32>
    %153 = arith.mulf %150, %135 : vector<1x64xf32>
    %154 = arith.mulf %149, %151 : vector<1x64xf32>
    %155 = arith.addf %153, %154 : vector<1x64xf32>
    %156 = math.tanh %155 : vector<1x64xf32>
    %157 = arith.mulf %152, %156 : vector<1x64xf32>
    %158 = vector.extract_strided_slice %114 {offsets = [2, 0, 0], sizes = [1, 1, 256], strides = [1, 1, 1]} : vector<4x1x256xf32> to vector<1x1x256xf32>
    %159 = vector.shape_cast %158 : vector<1x1x256xf32> to vector<1x256xf32>
    %160 = arith.truncf %157 : vector<1x64xf32> to vector<1x64xbf16>
    %cst_38 = arith.constant dense<0.000000e+00> : vector<1x256xf32>
    %161 = tpu.matmul %160, %115, %cst_38 {dimension_numbers = #tpu.dot_dimension_numbers<[1], [0], [0], [1], [0, 0, 1, 1], [], []>} : vector<1x64xbf16>, vector<64x256xbf16>, vector<1x256xf32> -> vector<1x256xf32>
    %162 = arith.addf %159, %161 : vector<1x256xf32>
    %163 = arith.negf %162 : vector<1x256xf32>
    %164 = math.exp %163 : vector<1x256xf32>
    %cst_39 = arith.constant 1.000000e+00 : f32
    %165 = vector.broadcast %cst_39 : f32 to vector<1x256xf32>
    %166 = arith.addf %165, %164 : vector<1x256xf32>
    %167 = arith.divf %165, %166 : vector<1x256xf32>
    %168 = math.tanh %162 : vector<1x256xf32>
    %169 = vector.extract_strided_slice %167 {offsets = [0, 0], sizes = [1, 64], strides = [1, 1]} : vector<1x256xf32> to vector<1x64xf32>
    %170 = vector.extract_strided_slice %167 {offsets = [0, 64], sizes = [1, 64], strides = [1, 1]} : vector<1x256xf32> to vector<1x64xf32>
    %171 = vector.extract_strided_slice %168 {offsets = [0, 128], sizes = [1, 64], strides = [1, 1]} : vector<1x256xf32> to vector<1x64xf32>
    %172 = vector.extract_strided_slice %167 {offsets = [0, 192], sizes = [1, 64], strides = [1, 1]} : vector<1x256xf32> to vector<1x64xf32>
    %173 = arith.mulf %170, %155 : vector<1x64xf32>
    %174 = arith.mulf %169, %171 : vector<1x64xf32>
    %175 = arith.addf %173, %174 : vector<1x64xf32>
    %176 = math.tanh %175 : vector<1x64xf32>
    %177 = arith.mulf %172, %176 : vector<1x64xf32>
    %178 = vector.extract_strided_slice %114 {offsets = [3, 0, 0], sizes = [1, 1, 256], strides = [1, 1, 1]} : vector<4x1x256xf32> to vector<1x1x256xf32>
    %179 = vector.shape_cast %178 : vector<1x1x256xf32> to vector<1x256xf32>
    %180 = arith.truncf %177 : vector<1x64xf32> to vector<1x64xbf16>
    %cst_40 = arith.constant dense<0.000000e+00> : vector<1x256xf32>
    %181 = tpu.matmul %180, %115, %cst_40 {dimension_numbers = #tpu.dot_dimension_numbers<[1], [0], [0], [1], [0, 0, 1, 1], [], []>} : vector<1x64xbf16>, vector<64x256xbf16>, vector<1x256xf32> -> vector<1x256xf32>
    %182 = arith.addf %179, %181 : vector<1x256xf32>
    %183 = arith.negf %182 : vector<1x256xf32>
    %184 = math.exp %183 : vector<1x256xf32>
    %cst_41 = arith.constant 1.000000e+00 : f32
    %185 = vector.broadcast %cst_41 : f32 to vector<1x256xf32>
    %186 = arith.addf %185, %184 : vector<1x256xf32>
    %187 = arith.divf %185, %186 : vector<1x256xf32>
    %188 = math.tanh %182 : vector<1x256xf32>
    %189 = vector.extract_strided_slice %187 {offsets = [0, 0], sizes = [1, 64], strides = [1, 1]} : vector<1x256xf32> to vector<1x64xf32>
    %190 = vector.extract_strided_slice %187 {offsets = [0, 64], sizes = [1, 64], strides = [1, 1]} : vector<1x256xf32> to vector<1x64xf32>
    %191 = vector.extract_strided_slice %188 {offsets = [0, 128], sizes = [1, 64], strides = [1, 1]} : vector<1x256xf32> to vector<1x64xf32>
    %192 = vector.extract_strided_slice %187 {offsets = [0, 192], sizes = [1, 64], strides = [1, 1]} : vector<1x256xf32> to vector<1x64xf32>
    %193 = arith.mulf %190, %175 : vector<1x64xf32>
    %194 = arith.mulf %189, %191 : vector<1x64xf32>
    %195 = arith.addf %193, %194 : vector<1x64xf32>
    %196 = math.tanh %195 : vector<1x64xf32>
    %197 = arith.mulf %192, %196 : vector<1x64xf32>
    %198 = tpu.concatenate %137, %157, %177, %197 in 0 : vector<1x64xf32>, vector<1x64xf32>, vector<1x64xf32>, vector<1x64xf32> -> vector<4x64xf32>
    %199 = arith.truncf %198 : vector<4x64xf32> to vector<4x64xbf16>
    %c0_42 = arith.constant 0 : index
    %c0_43 = arith.constant 0 : index
    %200 = vector.load %arg10[%c0_42, %c0_43] : memref<64x256xbf16, #tpu.memory_space<vmem>>, vector<64x256xbf16>
    %cst_44 = arith.constant dense<0.000000e+00> : vector<4x256xf32>
    %201 = tpu.matmul %199, %200, %cst_44 {dimension_numbers = #tpu.dot_dimension_numbers<[1], [0], [0], [1], [0, 0, 1, 1], [], []>} : vector<4x64xbf16>, vector<64x256xbf16>, vector<4x256xf32> -> vector<4x256xf32>
    %c0_45 = arith.constant 0 : index
    %c0_46 = arith.constant 0 : index
    %202 = vector.load %arg12[%c0_45, %c0_46] : memref<1x256xf32, #tpu.memory_space<vmem>>, vector<1x256xf32>
    %203 = vector.broadcast %202 : vector<1x256xf32> to vector<4x256xf32>
    %204 = arith.addf %201, %203 : vector<4x256xf32>
    %205 = vector.shape_cast %204 : vector<4x256xf32> to vector<4x1x256xf32>
    %c0_47 = arith.constant 0 : index
    %c0_48 = arith.constant 0 : index
    %206 = vector.load %arg11[%c0_47, %c0_48] : memref<64x256xbf16, #tpu.memory_space<vmem>>, vector<64x256xbf16>
    %cst_49 = arith.constant 0.000000e+00 : f32
    %207 = vector.broadcast %cst_49 : f32 to vector<1x64xf32>
    %cst_50 = arith.constant 0.000000e+00 : f32
    %208 = vector.broadcast %cst_50 : f32 to vector<1x64xf32>
    %209 = vector.extract_strided_slice %205 {offsets = [0, 0, 0], sizes = [1, 1, 256], strides = [1, 1, 1]} : vector<4x1x256xf32> to vector<1x1x256xf32>
    %210 = vector.shape_cast %209 : vector<1x1x256xf32> to vector<1x256xf32>
    %211 = arith.truncf %207 : vector<1x64xf32> to vector<1x64xbf16>
    %cst_51 = arith.constant dense<0.000000e+00> : vector<1x256xf32>
    %212 = tpu.matmul %211, %206, %cst_51 {dimension_numbers = #tpu.dot_dimension_numbers<[1], [0], [0], [1], [0, 0, 1, 1], [], []>} : vector<1x64xbf16>, vector<64x256xbf16>, vector<1x256xf32> -> vector<1x256xf32>
    %213 = arith.addf %210, %212 : vector<1x256xf32>
    %214 = arith.negf %213 : vector<1x256xf32>
    %215 = math.exp %214 : vector<1x256xf32>
    %cst_52 = arith.constant 1.000000e+00 : f32
    %216 = vector.broadcast %cst_52 : f32 to vector<1x256xf32>
    %217 = arith.addf %216, %215 : vector<1x256xf32>
    %218 = arith.divf %216, %217 : vector<1x256xf32>
    %219 = math.tanh %213 : vector<1x256xf32>
    %220 = vector.extract_strided_slice %218 {offsets = [0, 0], sizes = [1, 64], strides = [1, 1]} : vector<1x256xf32> to vector<1x64xf32>
    %221 = vector.extract_strided_slice %218 {offsets = [0, 64], sizes = [1, 64], strides = [1, 1]} : vector<1x256xf32> to vector<1x64xf32>
    %222 = vector.extract_strided_slice %219 {offsets = [0, 128], sizes = [1, 64], strides = [1, 1]} : vector<1x256xf32> to vector<1x64xf32>
    %223 = vector.extract_strided_slice %218 {offsets = [0, 192], sizes = [1, 64], strides = [1, 1]} : vector<1x256xf32> to vector<1x64xf32>
    %224 = arith.mulf %221, %208 : vector<1x64xf32>
    %225 = arith.mulf %220, %222 : vector<1x64xf32>
    %226 = arith.addf %224, %225 : vector<1x64xf32>
    %227 = math.tanh %226 : vector<1x64xf32>
    %228 = arith.mulf %223, %227 : vector<1x64xf32>
    %229 = vector.extract_strided_slice %205 {offsets = [1, 0, 0], sizes = [1, 1, 256], strides = [1, 1, 1]} : vector<4x1x256xf32> to vector<1x1x256xf32>
    %230 = vector.shape_cast %229 : vector<1x1x256xf32> to vector<1x256xf32>
    %231 = arith.truncf %228 : vector<1x64xf32> to vector<1x64xbf16>
    %cst_53 = arith.constant dense<0.000000e+00> : vector<1x256xf32>
    %232 = tpu.matmul %231, %206, %cst_53 {dimension_numbers = #tpu.dot_dimension_numbers<[1], [0], [0], [1], [0, 0, 1, 1], [], []>} : vector<1x64xbf16>, vector<64x256xbf16>, vector<1x256xf32> -> vector<1x256xf32>
    %233 = arith.addf %230, %232 : vector<1x256xf32>
    %234 = arith.negf %233 : vector<1x256xf32>
    %235 = math.exp %234 : vector<1x256xf32>
    %cst_54 = arith.constant 1.000000e+00 : f32
    %236 = vector.broadcast %cst_54 : f32 to vector<1x256xf32>
    %237 = arith.addf %236, %235 : vector<1x256xf32>
    %238 = arith.divf %236, %237 : vector<1x256xf32>
    %239 = math.tanh %233 : vector<1x256xf32>
    %240 = vector.extract_strided_slice %238 {offsets = [0, 0], sizes = [1, 64], strides = [1, 1]} : vector<1x256xf32> to vector<1x64xf32>
    %241 = vector.extract_strided_slice %238 {offsets = [0, 64], sizes = [1, 64], strides = [1, 1]} : vector<1x256xf32> to vector<1x64xf32>
    %242 = vector.extract_strided_slice %239 {offsets = [0, 128], sizes = [1, 64], strides = [1, 1]} : vector<1x256xf32> to vector<1x64xf32>
    %243 = vector.extract_strided_slice %238 {offsets = [0, 192], sizes = [1, 64], strides = [1, 1]} : vector<1x256xf32> to vector<1x64xf32>
    %244 = arith.mulf %241, %226 : vector<1x64xf32>
    %245 = arith.mulf %240, %242 : vector<1x64xf32>
    %246 = arith.addf %244, %245 : vector<1x64xf32>
    %247 = math.tanh %246 : vector<1x64xf32>
    %248 = arith.mulf %243, %247 : vector<1x64xf32>
    %249 = vector.extract_strided_slice %205 {offsets = [2, 0, 0], sizes = [1, 1, 256], strides = [1, 1, 1]} : vector<4x1x256xf32> to vector<1x1x256xf32>
    %250 = vector.shape_cast %249 : vector<1x1x256xf32> to vector<1x256xf32>
    %251 = arith.truncf %248 : vector<1x64xf32> to vector<1x64xbf16>
    %cst_55 = arith.constant dense<0.000000e+00> : vector<1x256xf32>
    %252 = tpu.matmul %251, %206, %cst_55 {dimension_numbers = #tpu.dot_dimension_numbers<[1], [0], [0], [1], [0, 0, 1, 1], [], []>} : vector<1x64xbf16>, vector<64x256xbf16>, vector<1x256xf32> -> vector<1x256xf32>
    %253 = arith.addf %250, %252 : vector<1x256xf32>
    %254 = arith.negf %253 : vector<1x256xf32>
    %255 = math.exp %254 : vector<1x256xf32>
    %cst_56 = arith.constant 1.000000e+00 : f32
    %256 = vector.broadcast %cst_56 : f32 to vector<1x256xf32>
    %257 = arith.addf %256, %255 : vector<1x256xf32>
    %258 = arith.divf %256, %257 : vector<1x256xf32>
    %259 = math.tanh %253 : vector<1x256xf32>
    %260 = vector.extract_strided_slice %258 {offsets = [0, 0], sizes = [1, 64], strides = [1, 1]} : vector<1x256xf32> to vector<1x64xf32>
    %261 = vector.extract_strided_slice %258 {offsets = [0, 64], sizes = [1, 64], strides = [1, 1]} : vector<1x256xf32> to vector<1x64xf32>
    %262 = vector.extract_strided_slice %259 {offsets = [0, 128], sizes = [1, 64], strides = [1, 1]} : vector<1x256xf32> to vector<1x64xf32>
    %263 = vector.extract_strided_slice %258 {offsets = [0, 192], sizes = [1, 64], strides = [1, 1]} : vector<1x256xf32> to vector<1x64xf32>
    %264 = arith.mulf %261, %246 : vector<1x64xf32>
    %265 = arith.mulf %260, %262 : vector<1x64xf32>
    %266 = arith.addf %264, %265 : vector<1x64xf32>
    %267 = math.tanh %266 : vector<1x64xf32>
    %268 = arith.mulf %263, %267 : vector<1x64xf32>
    %269 = vector.extract_strided_slice %205 {offsets = [3, 0, 0], sizes = [1, 1, 256], strides = [1, 1, 1]} : vector<4x1x256xf32> to vector<1x1x256xf32>
    %270 = vector.shape_cast %269 : vector<1x1x256xf32> to vector<1x256xf32>
    %271 = arith.truncf %268 : vector<1x64xf32> to vector<1x64xbf16>
    %cst_57 = arith.constant dense<0.000000e+00> : vector<1x256xf32>
    %272 = tpu.matmul %271, %206, %cst_57 {dimension_numbers = #tpu.dot_dimension_numbers<[1], [0], [0], [1], [0, 0, 1, 1], [], []>} : vector<1x64xbf16>, vector<64x256xbf16>, vector<1x256xf32> -> vector<1x256xf32>
    %273 = arith.addf %270, %272 : vector<1x256xf32>
    %274 = arith.negf %273 : vector<1x256xf32>
    %275 = math.exp %274 : vector<1x256xf32>
    %cst_58 = arith.constant 1.000000e+00 : f32
    %276 = vector.broadcast %cst_58 : f32 to vector<1x256xf32>
    %277 = arith.addf %276, %275 : vector<1x256xf32>
    %278 = arith.divf %276, %277 : vector<1x256xf32>
    %279 = math.tanh %273 : vector<1x256xf32>
    %280 = vector.extract_strided_slice %278 {offsets = [0, 0], sizes = [1, 64], strides = [1, 1]} : vector<1x256xf32> to vector<1x64xf32>
    %281 = vector.extract_strided_slice %278 {offsets = [0, 64], sizes = [1, 64], strides = [1, 1]} : vector<1x256xf32> to vector<1x64xf32>
    %282 = vector.extract_strided_slice %279 {offsets = [0, 128], sizes = [1, 64], strides = [1, 1]} : vector<1x256xf32> to vector<1x64xf32>
    %283 = vector.extract_strided_slice %278 {offsets = [0, 192], sizes = [1, 64], strides = [1, 1]} : vector<1x256xf32> to vector<1x64xf32>
    %284 = arith.mulf %281, %266 : vector<1x64xf32>
    %285 = arith.mulf %280, %282 : vector<1x64xf32>
    %286 = arith.addf %284, %285 : vector<1x64xf32>
    %287 = math.tanh %286 : vector<1x64xf32>
    %288 = arith.mulf %283, %287 : vector<1x64xf32>
    %289 = arith.truncf %288 : vector<1x64xf32> to vector<1x64xbf16>
    %c0_59 = arith.constant 0 : index
    %c0_60 = arith.constant 0 : index
    %290 = vector.load %arg13[%c0_59, %c0_60] : memref<64x20xbf16, #tpu.memory_space<vmem>>, vector<64x20xbf16>
    %cst_61 = arith.constant dense<0.000000e+00> : vector<1x20xf32>
    %291 = tpu.matmul %289, %290, %cst_61 {dimension_numbers = #tpu.dot_dimension_numbers<[1], [0], [0], [1], [0, 0, 1, 1], [], []>} : vector<1x64xbf16>, vector<64x20xbf16>, vector<1x20xf32> -> vector<1x20xf32>
    %c0_62 = arith.constant 0 : index
    %c0_63 = arith.constant 0 : index
    %292 = vector.load %arg14[%c0_62, %c0_63] : memref<1x20xf32, #tpu.memory_space<vmem>>, vector<1x20xf32>
    %293 = arith.addf %291, %292 : vector<1x20xf32>
    %c0_64 = arith.constant 0 : index
    %c0_65 = arith.constant 0 : index
    %c0_66 = arith.constant 0 : index
    %294 = vector.load %arg15[%c0_64, %c0_65, %c0_66] : memref<1x1x20xf32, #tpu.memory_space<vmem>>, vector<1x1x20xf32>
    %295 = vector.shape_cast %294 : vector<1x1x20xf32> to vector<1x20xf32>
    %296 = vector.shape_cast %293 : vector<1x20xf32> to vector<1x1x20xf32>
    tpu.vector_store %arg15[%c0_64, %c0_65, %c0_66], %296 {strides = array<i32>} : memref<1x1x20xf32, #tpu.memory_space<vmem>>, vector<1x1x20xf32>,
    return
  }
  func.func @transform_0(%arg0: i32) -> (i32, i32, i32) {
    %c0_i32 = arith.constant 0 : i32
    %c0_i32_0 = arith.constant 0 : i32
    %c0_i32_1 = arith.constant 0 : i32
    return %arg0, %c0_i32, %c0_i32_0 : i32, i32, i32
  }
  func.func @transform_1(%arg0: i32) -> (i32, i32) {
    %c0_i32 = arith.constant 0 : i32
    %c0_i32_0 = arith.constant 0 : i32
    %c0_i32_1 = arith.constant 0 : i32
    return %c0_i32, %c0_i32_0 : i32, i32
  }
  func.func @transform_2(%arg0: i32) -> (i32, i32) {
    %c0_i32 = arith.constant 0 : i32
    %c0_i32_0 = arith.constant 0 : i32
    %c0_i32_1 = arith.constant 0 : i32
    return %c0_i32, %c0_i32_0 : i32, i32
  }
  func.func @transform_3(%arg0: i32) -> (i32, i32) {
    %c0_i32 = arith.constant 0 : i32
    %c0_i32_0 = arith.constant 0 : i32
    %c0_i32_1 = arith.constant 0 : i32
    return %c0_i32, %c0_i32_0 : i32, i32
  }
  func.func @transform_4(%arg0: i32) -> (i32, i32) {
    %c0_i32 = arith.constant 0 : i32
    %c0_i32_0 = arith.constant 0 : i32
    %c0_i32_1 = arith.constant 0 : i32
    return %c0_i32, %c0_i32_0 : i32, i32
  }
  func.func @transform_5(%arg0: i32) -> (i32, i32) {
    %c0_i32 = arith.constant 0 : i32
    %c0_i32_0 = arith.constant 0 : i32
    %c0_i32_1 = arith.constant 0 : i32
    return %c0_i32, %c0_i32_0 : i32, i32
  }
  func.func @transform_6(%arg0: i32) -> (i32, i32) {
    %c0_i32 = arith.constant 0 : i32
    %c0_i32_0 = arith.constant 0 : i32
    %c0_i32_1 = arith.constant 0 : i32
    return %c0_i32, %c0_i32_0 : i32, i32
  }
  func.func @transform_7(%arg0: i32) -> (i32, i32) {
    %c0_i32 = arith.constant 0 : i32
    %c0_i32_0 = arith.constant 0 : i32
    %c0_i32_1 = arith.constant 0 : i32
    return %c0_i32, %c0_i32_0 : i32, i32
  }
  func.func @transform_8(%arg0: i32) -> (i32, i32) {
    %c0_i32 = arith.constant 0 : i32
    %c0_i32_0 = arith.constant 0 : i32
    %c0_i32_1 = arith.constant 0 : i32
    return %c0_i32, %c0_i32_0 : i32, i32
  }
  func.func @transform_9(%arg0: i32) -> (i32, i32) {
    %c0_i32 = arith.constant 0 : i32
    %c0_i32_0 = arith.constant 0 : i32
    %c0_i32_1 = arith.constant 0 : i32
    return %c0_i32, %c0_i32_0 : i32, i32
  }
  func.func @transform_10(%arg0: i32) -> (i32, i32) {
    %c0_i32 = arith.constant 0 : i32
    %c0_i32_0 = arith.constant 0 : i32
    %c0_i32_1 = arith.constant 0 : i32
    return %c0_i32, %c0_i32_0 : i32, i32
  }
  func.func @transform_11(%arg0: i32) -> (i32, i32) {
    %c0_i32 = arith.constant 0 : i32
    %c0_i32_0 = arith.constant 0 : i32
    %c0_i32_1 = arith.constant 0 : i32
    return %c0_i32, %c0_i32_0 : i32, i32
  }
  func.func @transform_12(%arg0: i32) -> (i32, i32) {
    %c0_i32 = arith.constant 0 : i32
    %c0_i32_0 = arith.constant 0 : i32
    %c0_i32_1 = arith.constant 0 : i32
    return %c0_i32, %c0_i32_0 : i32, i32
  }
  func.func @transform_13(%arg0: i32) -> (i32, i32) {
    %c0_i32 = arith.constant 0 : i32
    %c0_i32_0 = arith.constant 0 : i32
    %c0_i32_1 = arith.constant 0 : i32
    return %c0_i32, %c0_i32_0 : i32, i32
  }
  func.func @transform_14(%arg0: i32) -> (i32, i32, i32) {
    %c0_i32 = arith.constant 0 : i32
    %c0_i32_0 = arith.constant 0 : i32
    %c0_i32_1 = arith.constant 0 : i32
    return %arg0, %c0_i32, %c0_i32_0 : i32, i32, i32
  }
}

</mosaic_0001>

<llo_original>
// kernel: forward.1
$region0: #{forward.1}
  #allocation0 [shape = 'u32[]', space=smem, size = 0x4, offset = 0x4, fixed_abs, tag = 'smem constant byte address 0x4 - core index']
  #allocation1 [shape = 'u32[144,128]{1,0:T(1,128)}', space=vmem, size = 0x12000, scoped, tag = 'internal scratch']
  %s0 = inlined_call_operand.vmem [shape: bf16[2,24,200], index: 0, kind: input, shape index: {}]
  %s1 = inlined_call_operand.vmem [shape: bf16[1000,200], index: 1, kind: input, shape index: {}]
  %s2 = inlined_call_operand.vmem [shape: f32[1,200], index: 2, kind: input, shape index: {}]
  %s3 = inlined_call_operand.vmem [shape: bf16[200,256], index: 3, kind: input, shape index: {}]
  %s4 = inlined_call_operand.vmem [shape: bf16[64,256], index: 4, kind: input, shape index: {}]
  %s5 = inlined_call_operand.vmem [shape: f32[1,256], index: 5, kind: input, shape index: {}]
  %s6 = inlined_call_operand.vmem [shape: bf16[64,256], index: 6, kind: input, shape index: {}]
  %s7 = inlined_call_operand.vmem [shape: bf16[64,256], index: 7, kind: input, shape index: {}]
  %s8 = inlined_call_operand.vmem [shape: f32[1,256], index: 8, kind: input, shape index: {}]
  %s9 = inlined_call_operand.vmem [shape: bf16[64,256], index: 9, kind: input, shape index: {}]
  %s10 = inlined_call_operand.vmem [shape: bf16[64,256], index: 10, kind: input, shape index: {}]
  %s11 = inlined_call_operand.vmem [shape: f32[1,256], index: 11, kind: input, shape index: {}]
  %s12 = inlined_call_operand.vmem [shape: bf16[64,20], index: 12, kind: input, shape index: {}]
  %s13 = inlined_call_operand.vmem [shape: f32[1,20], index: 13, kind: input, shape index: {}]
  %s14 = inlined_call_operand.hbm [shape: f32[2,1,20], index: 14, kind: output, shape index: {}]
  %s15 = sld [smem:[#allocation0]]
  $region89: #{forward.1} parent=0
    _
  %s17 = ssub.s32 1, %s15
  %s18 = scalar_select 0, %s17, %s15
  $region1: #{forward.1} parent=0
    #allocation2 [shape = 'u8[1024]{0}', space=vmem, size = 0x400, scoped, tag = 'output window, operand 0']
    #allocation3 [shape = 's32[2]{0}', space=sflag, size = 0x8, scoped, tag = 'scoped memory for forward.1']
    %19 = vsyncpa [#allocation3], 0
    %s20 = scalar_lea.sflag [#allocation3], 1
    %21 = vsyncpa %s20, 0
    loop: start=0, step=1, limit=4
    $region2: #{forward.1} parent=1 // loop_pre_header
      _
    $region3: #{forward.1} parent=1 // loop_header
      %s23 = sphi 0, %s27
      %p24 = scmp.ge.s32.totalorder %s23, 4
      %s33 = sphi 0, %s35
      %s36 = sphi 0, %s33
      %s37 = sphi 0, %s36
      %s53 = sphi 0, %s37
      %s57 = sphi 0, %s57
      %s59 = sphi 0, %s57
      %s60 = sphi 0, %s59
      %s74 = sphi 0, %s60
      %s78 = sphi 0, %s78
      %s80 = sphi 0, %s78
      %s81 = sphi 0, %s80
      %s95 = sphi 0, %s81
      %s99 = sphi 0, %s99
      %s101 = sphi 0, %s99
      %s102 = sphi 0, %s101
      %s116 = sphi 0, %s102
      %s120 = sphi 0, %s120
      %s122 = sphi 0, %s120
      %s123 = sphi 0, %s122
      %s137 = sphi 0, %s123
      %s141 = sphi 0, %s141
      %s143 = sphi 0, %s141
      %s144 = sphi 0, %s143
      %s158 = sphi 0, %s144
      %s162 = sphi 0, %s162
      %s164 = sphi 0, %s162
      %s165 = sphi 0, %s164
      %s179 = sphi 0, %s165
      %s183 = sphi 0, %s183
      %s185 = sphi 0, %s183
      %s186 = sphi 0, %s185
      %s200 = sphi 0, %s186
      %s204 = sphi 0, %s204
      %s206 = sphi 0, %s204
      %s207 = sphi 0, %s206
      %s221 = sphi 0, %s207
      %s225 = sphi 0, %s225
      %s227 = sphi 0, %s225
      %s228 = sphi 0, %s227
      %s242 = sphi 0, %s228
      %s246 = sphi 0, %s246
      %s248 = sphi 0, %s246
      %s249 = sphi 0, %s248
      %s263 = sphi 0, %s249
      %s267 = sphi 0, %s267
      %s269 = sphi 0, %s267
      %s270 = sphi 0, %s269
      %s284 = sphi 0, %s270
      %s288 = sphi 0, %s288
      %s290 = sphi 0, %s288
      %s291 = sphi 0, %s290
      %s305 = sphi 0, %s291
      %s309 = sphi 0, %s309
      %s311 = sphi 0, %s309
      %s312 = sphi 0, %s311
      %s326 = sphi 0, %s312
      %s332 = sphi 0, %s334
      %s335 = sphi 0, %s332
      %s336 = sphi 0, %s335
      %s352 = sphi 0, %s336
    $region4: #{forward.1} parent=1 // loop_header_branch
      %26 = sbr.rel (%p24) target = $region8
    $region5: #{forward.1} parent=1 // loop_body
      %s28 = ssub.s32 %s23, 1
      %s29 = ssub.s32 %s23, 2
      %s30 = sadd.s32 %s23, 1
      %s31 = ssub.s32 %s23, %s30
      %p32 = scmp.eq.s32.totalorder %s31, 0
      %s34 = sadd.s32 %s33, 1
      %s35 = scalar_select %p32, %s33, %s34
      %p38 = pneg %p32
      %p39 = scmp.eq.s32.totalorder %s23, 1
      %p40 = por %p38, %p39
      %p41 = scmp.ne.s32.totalorder %s33, %s36
      %p42 = scmp.eq.s32.totalorder %s23, 0
      %p43 = por %p41, %p42
      %p44 = scmp.ne.s32.totalorder %s33, %s36
      %p45 = scmp.eq.s32.totalorder %s28, 1
      %p46 = por %p44, %p45
      %p47 = scmp.ne.s32.totalorder %s36, %s37
      %p48 = scmp.eq.s32.totalorder %s28, 0
      %p49 = por %p47, %p48
      %p50 = scmp.ne.s32.totalorder %s36, %s37
      %p51 = scmp.eq.s32.totalorder %s29, 1
      %p52 = por %p50, %p51
      %p54 = scmp.ne.s32.totalorder %s37, %s53
      %p55 = scmp.eq.s32.totalorder %s29, 0
      %p56 = por %p54, %p55
      %s58 = sadd.s32 %s57, 1
      %p61 = scmp.eq.s32.totalorder %s23, 1
      %p62 = scmp.ne.s32.totalorder %s57, %s59
      %p63 = scmp.eq.s32.totalorder %s23, 0
      %p64 = por %p62, %p63
      %p65 = scmp.ne.s32.totalorder %s57, %s59
      %p66 = scmp.eq.s32.totalorder %s28, 1
      %p67 = por %p65, %p66
      %p68 = scmp.ne.s32.totalorder %s59, %s60
      %p69 = scmp.eq.s32.totalorder %s28, 0
      %p70 = por %p68, %p69
      %p71 = scmp.ne.s32.totalorder %s59, %s60
      %p72 = scmp.eq.s32.totalorder %s29, 1
      %p73 = por %p71, %p72
      %p75 = scmp.ne.s32.totalorder %s60, %s74
      %p76 = scmp.eq.s32.totalorder %s29, 0
      %p77 = por %p75, %p76
      %s79 = sadd.s32 %s78, 1
      %p82 = scmp.eq.s32.totalorder %s23, 1
      %p83 = scmp.ne.s32.totalorder %s78, %s80
      %p84 = scmp.eq.s32.totalorder %s23, 0
      %p85 = por %p83, %p84
      %p86 = scmp.ne.s32.totalorder %s78, %s80
      %p87 = scmp.eq.s32.totalorder %s28, 1
      %p88 = por %p86, %p87
      %p89 = scmp.ne.s32.totalorder %s80, %s81
      %p90 = scmp.eq.s32.totalorder %s28, 0
      %p91 = por %p89, %p90
      %p92 = scmp.ne.s32.totalorder %s80, %s81
      %p93 = scmp.eq.s32.totalorder %s29, 1
      %p94 = por %p92, %p93
      %p96 = scmp.ne.s32.totalorder %s81, %s95
      %p97 = scmp.eq.s32.totalorder %s29, 0
      %p98 = por %p96, %p97
      %s100 = sadd.s32 %s99, 1
      %p103 = scmp.eq.s32.totalorder %s23, 1
      %p104 = scmp.ne.s32.totalorder %s99, %s101
      %p105 = scmp.eq.s32.totalorder %s23, 0
      %p106 = por %p104, %p105
      %p107 = scmp.ne.s32.totalorder %s99, %s101
      %p108 = scmp.eq.s32.totalorder %s28, 1
      %p109 = por %p107, %p108
      %p110 = scmp.ne.s32.totalorder %s101, %s102
      %p111 = scmp.eq.s32.totalorder %s28, 0
      %p112 = por %p110, %p111
      %p113 = scmp.ne.s32.totalorder %s101, %s102
      %p114 = scmp.eq.s32.totalorder %s29, 1
      %p115 = por %p113, %p114
      %p117 = scmp.ne.s32.totalorder %s102, %s116
      %p118 = scmp.eq.s32.totalorder %s29, 0
      %p119 = por %p117, %p118
      %s121 = sadd.s32 %s120, 1
      %p124 = scmp.eq.s32.totalorder %s23, 1
      %p125 = scmp.ne.s32.totalorder %s120, %s122
      %p126 = scmp.eq.s32.totalorder %s23, 0
      %p127 = por %p125, %p126
      %p128 = scmp.ne.s32.totalorder %s120, %s122
      %p129 = scmp.eq.s32.totalorder %s28, 1
      %p130 = por %p128, %p129
      %p131 = scmp.ne.s32.totalorder %s122, %s123
      %p132 = scmp.eq.s32.totalorder %s28, 0
      %p133 = por %p131, %p132
      %p134 = scmp.ne.s32.totalorder %s122, %s123
      %p135 = scmp.eq.s32.totalorder %s29, 1
      %p136 = por %p134, %p135
      %p138 = scmp.ne.s32.totalorder %s123, %s137
      %p139 = scmp.eq.s32.totalorder %s29, 0
      %p140 = por %p138, %p139
      %s142 = sadd.s32 %s141, 1
      %p145 = scmp.eq.s32.totalorder %s23, 1
      %p146 = scmp.ne.s32.totalorder %s141, %s143
      %p147 = scmp.eq.s32.totalorder %s23, 0
      %p148 = por %p146, %p147
      %p149 = scmp.ne.s32.totalorder %s141, %s143
      %p150 = scmp.eq.s32.totalorder %s28, 1
      %p151 = por %p149, %p150
      %p152 = scmp.ne.s32.totalorder %s143, %s144
      %p153 = scmp.eq.s32.totalorder %s28, 0
      %p154 = por %p152, %p153
      %p155 = scmp.ne.s32.totalorder %s143, %s144
      %p156 = scmp.eq.s32.totalorder %s29, 1
      %p157 = por %p155, %p156
      %p159 = scmp.ne.s32.totalorder %s144, %s158
      %p160 = scmp.eq.s32.totalorder %s29, 0
      %p161 = por %p159, %p160
      %s163 = sadd.s32 %s162, 1
      %p166 = scmp.eq.s32.totalorder %s23, 1
      %p167 = scmp.ne.s32.totalorder %s162, %s164
      %p168 = scmp.eq.s32.totalorder %s23, 0
      %p169 = por %p167, %p168
      %p170 = scmp.ne.s32.totalorder %s162, %s164
      %p171 = scmp.eq.s32.totalorder %s28, 1
      %p172 = por %p170, %p171
      %p173 = scmp.ne.s32.totalorder %s164, %s165
      %p174 = scmp.eq.s32.totalorder %s28, 0
      %p175 = por %p173, %p174
      %p176 = scmp.ne.s32.totalorder %s164, %s165
      %p177 = scmp.eq.s32.totalorder %s29, 1
      %p178 = por %p176, %p177
      %p180 = scmp.ne.s32.totalorder %s165, %s179
      %p181 = scmp.eq.s32.totalorder %s29, 0
      %p182 = por %p180, %p181
      %s184 = sadd.s32 %s183, 1
      %p187 = scmp.eq.s32.totalorder %s23, 1
      %p188 = scmp.ne.s32.totalorder %s183, %s185
      %p189 = scmp.eq.s32.totalorder %s23, 0
      %p190 = por %p188, %p189
      %p191 = scmp.ne.s32.totalorder %s183, %s185
      %p192 = scmp.eq.s32.totalorder %s28, 1
      %p193 = por %p191, %p192
      %p194 = scmp.ne.s32.totalorder %s185, %s186
      %p195 = scmp.eq.s32.totalorder %s28, 0
      %p196 = por %p194, %p195
      %p197 = scmp.ne.s32.totalorder %s185, %s186
      %p198 = scmp.eq.s32.totalorder %s29, 1
      %p199 = por %p197, %p198
      %p201 = scmp.ne.s32.totalorder %s186, %s200
      %p202 = scmp.eq.s32.totalorder %s29, 0
      %p203 = por %p201, %p202
      %s205 = sadd.s32 %s204, 1
      %p208 = scmp.eq.s32.totalorder %s23, 1
      %p209 = scmp.ne.s32.totalorder %s204, %s206
      %p210 = scmp.eq.s32.totalorder %s23, 0
      %p211 = por %p209, %p210
      %p212 = scmp.ne.s32.totalorder %s204, %s206
      %p213 = scmp.eq.s32.totalorder %s28, 1
      %p214 = por %p212, %p213
      %p215 = scmp.ne.s32.totalorder %s206, %s207
      %p216 = scmp.eq.s32.totalorder %s28, 0
      %p217 = por %p215, %p216
      %p218 = scmp.ne.s32.totalorder %s206, %s207
      %p219 = scmp.eq.s32.totalorder %s29, 1
      %p220 = por %p218, %p219
      %p222 = scmp.ne.s32.totalorder %s207, %s221
      %p223 = scmp.eq.s32.totalorder %s29, 0
      %p224 = por %p222, %p223
      %s226 = sadd.s32 %s225, 1
      %p229 = scmp.eq.s32.totalorder %s23, 1
      %p230 = scmp.ne.s32.totalorder %s225, %s227
      %p231 = scmp.eq.s32.totalorder %s23, 0
      %p232 = por %p230, %p231
      %p233 = scmp.ne.s32.totalorder %s225, %s227
      %p234 = scmp.eq.s32.totalorder %s28, 1
      %p235 = por %p233, %p234
      %p236 = scmp.ne.s32.totalorder %s227, %s228
      %p237 = scmp.eq.s32.totalorder %s28, 0
      %p238 = por %p236, %p237
      %p239 = scmp.ne.s32.totalorder %s227, %s228
      %p240 = scmp.eq.s32.totalorder %s29, 1
      %p241 = por %p239, %p240
      %p243 = scmp.ne.s32.totalorder %s228, %s242
      %p244 = scmp.eq.s32.totalorder %s29, 0
      %p245 = por %p243, %p244
      %s247 = sadd.s32 %s246, 1
      %p250 = scmp.eq.s32.totalorder %s23, 1
      %p251 = scmp.ne.s32.totalorder %s246, %s248
      %p252 = scmp.eq.s32.totalorder %s23, 0
      %p253 = por %p251, %p252
      %p254 = scmp.ne.s32.totalorder %s246, %s248
      %p255 = scmp.eq.s32.totalorder %s28, 1
      %p256 = por %p254, %p255
      %p257 = scmp.ne.s32.totalorder %s248, %s249
      %p258 = scmp.eq.s32.totalorder %s28, 0
      %p259 = por %p257, %p258
      %p260 = scmp.ne.s32.totalorder %s248, %s249
      %p261 = scmp.eq.s32.totalorder %s29, 1
      %p262 = por %p260, %p261
      %p264 = scmp.ne.s32.totalorder %s249, %s263
      %p265 = scmp.eq.s32.totalorder %s29, 0
      %p266 = por %p264, %p265
      %s268 = sadd.s32 %s267, 1
      %p271 = scmp.eq.s32.totalorder %s23, 1
      %p272 = scmp.ne.s32.totalorder %s267, %s269
      %p273 = scmp.eq.s32.totalorder %s23, 0
      %p274 = por %p272, %p273
      %p275 = scmp.ne.s32.totalorder %s267, %s269
      %p276 = scmp.eq.s32.totalorder %s28, 1
      %p277 = por %p275, %p276
      %p278 = scmp.ne.s32.totalorder %s269, %s270
      %p279 = scmp.eq.s32.totalorder %s28, 0
      %p280 = por %p278, %p279
      %p281 = scmp.ne.s32.totalorder %s269, %s270
      %p282 = scmp.eq.s32.totalorder %s29, 1
      %p283 = por %p281, %p282
      %p285 = scmp.ne.s32.totalorder %s270, %s284
      %p286 = scmp.eq.s32.totalorder %s29, 0
      %p287 = por %p285, %p286
      %s289 = sadd.s32 %s288, 1
      %p292 = scmp.eq.s32.totalorder %s23, 1
      %p293 = scmp.ne.s32.totalorder %s288, %s290
      %p294 = scmp.eq.s32.totalorder %s23, 0
      %p295 = por %p293, %p294
      %p296 = scmp.ne.s32.totalorder %s288, %s290
      %p297 = scmp.eq.s32.totalorder %s28, 1
      %p298 = por %p296, %p297
      %p299 = scmp.ne.s32.totalorder %s290, %s291
      %p300 = scmp.eq.s32.totalorder %s28, 0
      %p301 = por %p299, %p300
      %p302 = scmp.ne.s32.totalorder %s290, %s291
      %p303 = scmp.eq.s32.totalorder %s29, 1
      %p304 = por %p302, %p303
      %p306 = scmp.ne.s32.totalorder %s291, %s305
      %p307 = scmp.eq.s32.totalorder %s29, 0
      %p308 = por %p306, %p307
      %s310 = sadd.s32 %s309, 1
      %p313 = scmp.eq.s32.totalorder %s23, 1
      %p314 = scmp.ne.s32.totalorder %s309, %s311
      %p315 = scmp.eq.s32.totalorder %s23, 0
      %p316 = por %p314, %p315
      %p317 = scmp.ne.s32.totalorder %s309, %s311
      %p318 = scmp.eq.s32.totalorder %s28, 1
      %p319 = por %p317, %p318
      %p320 = scmp.ne.s32.totalorder %s311, %s312
      %p321 = scmp.eq.s32.totalorder %s28, 0
      %p322 = por %p320, %p321
      %p323 = scmp.ne.s32.totalorder %s311, %s312
      %p324 = scmp.eq.s32.totalorder %s29, 1
      %p325 = por %p323, %p324
      %p327 = scmp.ne.s32.totalorder %s312, %s326
      %p328 = scmp.eq.s32.totalorder %s29, 0
      %p329 = por %p327, %p328
      %s330 = ssub.s32 %s23, %s30
      %p331 = scmp.eq.s32.totalorder %s330, 0
      %s333 = sadd.s32 %s332, 1
      %s334 = scalar_select %p331, %s332, %s333
      %p337 = pneg %p331
      %p338 = scmp.eq.s32.totalorder %s23, 1
      %p339 = por %p337, %p338
      %p340 = scmp.ne.s32.totalorder %s332, %s335
      %p341 = scmp.eq.s32.totalorder %s23, 0
      %p342 = por %p340, %p341
      %p343 = scmp.ne.s32.totalorder %s332, %s335
      %p344 = scmp.eq.s32.totalorder %s28, 1
      %p345 = por %p343, %p344
      %p346 = scmp.ne.s32.totalorder %s335, %s336
      %p347 = scmp.eq.s32.totalorder %s28, 0
      %p348 = por %p346, %p347
      %p349 = scmp.ne.s32.totalorder %s335, %s336
      %p350 = scmp.eq.s32.totalorder %s29, 1
      %p351 = por %p349, %p350
      %p353 = scmp.ne.s32.totalorder %s336, %s352
      %p354 = scmp.eq.s32.totalorder %s29, 0
      %p355 = por %p353, %p354
      %p356 = scmp.le.s32.totalorder 1, %s23
      %p357 = scmp.lt.s32.totalorder %s23, 3
      %p358 = pnand %p356, %p357
      %p359 = pneg %p358
      // Predicated region
      $region9: #{forward.1} parent=5 // pred_check
        _
      $region10: #{forward.1} parent=5 // pred_check_branch
        %361 = sbr.rel (%p358) target = $region12
      $region11: #{forward.1} parent=5 // pred_region
        %s362 = ssub.s32 %s23, 1
        // Predicated region
        $region13: #{forward.1} parent=11 // pred_check
          %p363 = pneg %p70
        $region14: #{forward.1} parent=11 // pred_check_branch
          %365 = sbr.rel (%p363) target = $region16
        $region15: #{forward.1} parent=11 // pred_region
          _
        $region16: #{forward.1} parent=11 // pred_fallthru
          _
        // Predicated region
        $region17: #{forward.1} parent=11 // pred_check
          %p366 = pneg %p91
        $region18: #{forward.1} parent=11 // pred_check_branch
          %368 = sbr.rel (%p366) target = $region20
        $region19: #{forward.1} parent=11 // pred_region
          _
        $region20: #{forward.1} parent=11 // pred_fallthru
          _
        // Predicated region
        $region21: #{forward.1} parent=11 // pred_check
          %p369 = pneg %p112
        $region22: #{forward.1} parent=11 // pred_check_branch
          %371 = sbr.rel (%p369) target = $region24
        $region23: #{forward.1} parent=11 // pred_region
          _
        $region24: #{forward.1} parent=11 // pred_fallthru
          _
        // Predicated region
        $region25: #{forward.1} parent=11 // pred_check
          %p372 = pneg %p133
        $region26: #{forward.1} parent=11 // pred_check_branch
          %374 = sbr.rel (%p372) target = $region28
        $region27: #{forward.1} parent=11 // pred_region
          _
        $region28: #{forward.1} parent=11 // pred_fallthru
          _
        // Predicated region
        $region29: #{forward.1} parent=11 // pred_check
          %p375 = pneg %p154
        $region30: #{forward.1} parent=11 // pred_check_branch
          %377 = sbr.rel (%p375) target = $region32
        $region31: #{forward.1} parent=11 // pred_region
          _
        $region32: #{forward.1} parent=11 // pred_fallthru
          _
        // Predicated region
        $region33: #{forward.1} parent=11 // pred_check
          %p378 = pneg %p175
        $region34: #{forward.1} parent=11 // pred_check_branch
          %380 = sbr.rel (%p378) target = $region36
        $region35: #{forward.1} parent=11 // pred_region
          _
        $region36: #{forward.1} parent=11 // pred_fallthru
          _
        // Predicated region
        $region37: #{forward.1} parent=11 // pred_check
          %p381 = pneg %p196
        $region38: #{forward.1} parent=11 // pred_check_branch
          %383 = sbr.rel (%p381) target = $region40
        $region39: #{forward.1} parent=11 // pred_region
          _
        $region40: #{forward.1} parent=11 // pred_fallthru
          _
        // Predicated region
        $region41: #{forward.1} parent=11 // pred_check
          %p384 = pneg %p217
        $region42: #{forward.1} parent=11 // pred_check_branch
          %386 = sbr.rel (%p384) target = $region44
        $region43: #{forward.1} parent=11 // pred_region
          _
        $region44: #{forward.1} parent=11 // pred_fallthru
          _
        // Predicated region
        $region45: #{forward.1} parent=11 // pred_check
          %p387 = pneg %p238
        $region46: #{forward.1} parent=11 // pred_check_branch
          %389 = sbr.rel (%p387) target = $region48
        $region47: #{forward.1} parent=11 // pred_region
          _
        $region48: #{forward.1} parent=11 // pred_fallthru
          _
        // Predicated region
        $region49: #{forward.1} parent=11 // pred_check
          %p390 = pneg %p259
        $region50: #{forward.1} parent=11 // pred_check_branch
          %392 = sbr.rel (%p390) target = $region52
        $region51: #{forward.1} parent=11 // pred_region
          _
        $region52: #{forward.1} parent=11 // pred_fallthru
          _
        // Predicated region
        $region53: #{forward.1} parent=11 // pred_check
          %p393 = pneg %p280
        $region54: #{forward.1} parent=11 // pred_check_branch
          %395 = sbr.rel (%p393) target = $region56
        $region55: #{forward.1} parent=11 // pred_region
          _
        $region56: #{forward.1} parent=11 // pred_fallthru
          _
        // Predicated region
        $region57: #{forward.1} parent=11 // pred_check
          %p396 = pneg %p301
        $region58: #{forward.1} parent=11 // pred_check_branch
          %398 = sbr.rel (%p396) target = $region60
        $region59: #{forward.1} parent=11 // pred_region
          _
        $region60: #{forward.1} parent=11 // pred_fallthru
          _
        // Predicated region
        $region61: #{forward.1} parent=11 // pred_check
          %p399 = pneg %p322
        $region62: #{forward.1} parent=11 // pred_check_branch
          %401 = sbr.rel (%p399) target = $region64
        $region63: #{forward.1} parent=11 // pred_region
          _
        $region64: #{forward.1} parent=11 // pred_fallthru
          _
      $region12: #{forward.1} parent=5 // pred_fallthru
        _
      %p402 = scmp.lt.s32.totalorder %s23, 2
      // Predicated region
      $region65: #{forward.1} parent=5 // pred_check
        %p403 = pneg %p402
      $region66: #{forward.1} parent=5 // pred_check_branch
        %405 = sbr.rel (%p403) target = $region68
      $region67: #{forward.1} parent=5 // pred_region
        // Predicated region
        $region69: #{forward.1} parent=67 // pred_check
          %p406 = pneg %p43
        $region70: #{forward.1} parent=67 // pred_check_branch
          %408 = sbr.rel (%p406) target = $region72
        $region71: #{forward.1} parent=67 // pred_region
          %p409 = scmp.lt.s32.totalorder %s23, 1
          %s410 = scalar_select %p409, %s23, 1
          %s411 = smul.addr %s410, 6
          %s412 = smul.addr %s411, 4
          %s413 = scalar_lea.vmem %s0, %s412
        $region72: #{forward.1} parent=67 // pred_fallthru
          _
      $region68: #{forward.1} parent=5 // pred_fallthru
        _
      %p414 = scmp.le.s32.totalorder 1, %s23
      %p415 = scmp.lt.s32.totalorder %s23, 3
      %p416 = pnand %p414, %p415
      %p417 = pneg %p416
      // Predicated region
      $region73: #{forward.1} parent=5 // pred_check
        _
      $region74: #{forward.1} parent=5 // pred_check_branch
        %419 = sbr.rel (%p416) target = $region76
      $region75: #{forward.1} parent=5 // pred_region
        %s420 = ssub.s32 %s23, 1
        %p421 = scmp.lt.s32.totalorder %s28, 1
        %s422 = scalar_select %p421, %s28, 1
        %s423 = smul.addr %s422, 6
        %s424 = smul.addr %s423, 4
        %s425 = scalar_lea.vmem %s0, %s424
        %p426 = pneg %p49
        %p427 = pneg %p46
        %p428 = pneg %p70
        %p429 = pneg %p67
        %p430 = pneg %p91
        %p431 = pneg %p88
        %p432 = pneg %p112
        %p433 = pneg %p109
        %p434 = pneg %p133
        %p435 = pneg %p130
        %p436 = pneg %p154
        %p437 = pneg %p151
        %p438 = pneg %p175
        %p439 = pneg %p172
        %p440 = pneg %p196
        %p441 = pneg %p193
        %p442 = pneg %p217
        %p443 = pneg %p214
        %p444 = pneg %p238
        %p445 = pneg %p235
        %p446 = pneg %p259
        %p447 = pneg %p256
        %p448 = pneg %p280
        %p449 = pneg %p277
        %p450 = pneg %p301
        %p451 = pneg %p298
        %p452 = pneg %p322
        %p453 = pneg %p319
        %p454 = pneg %p348
        %p455 = pneg %p345
        %s456 = sand.u32 %s335, 1
        %s457 = scalar_lea.sflag [#allocation3], %s456
        %s458 = sand.u32 %s335, 1
        %s459 = scalar_lea.vmem [#allocation2], %s458
        %p460 = scmp.lt.s32.totalorder %s28, 1
        %s461 = scalar_select %p460, %s28, 1
        %s462 = smul.addr %s461, 6
        %s463 = smul.addr %s462, 4
        %s464 = scalar_lea.vmem %s0, %s463
        %v466 = vld [vmem:[%s464] sm:$0xff]
        %v467 = vld [vmem:[%s464 + $0x8] sm:$0xff]
        %v468 = vld [vmem:[%s464 + $0x10] sm:$0xff]
        %v472 = vunpack.c.l.b16 %v466
        %v473 = vunpack.c.h.b16 %v466
        %v474 = vunpack.c.l.b16 %v467
        %v475 = vunpack.c.h.b16 %v467
        %v476 = vunpack.c.l.b16 %v468
        %v477 = vunpack.c.h.b16 %v468
        %v478 = vpack.c.b16 %v474, %v472
        %v479 = vpack.c.b16 %v475, %v473
        %v480 = vpack.c.b16 %v476, %v476
        %v481 = vpack.c.b16 %v477, %v477
        %vm484 = vsmask.f32 7424
        %v486 = vshrl.u32 %v478, 16
        %v488 = vshll.u32 %v478, 16
        %v490 = vrot.slane %v488, 1
        %v491 = vor.u32 %v486, %v490
        %v493 = vshll.u32 %v480, 16
        %v495 = vrot.slane %v493, 1
        %v496 = vsel %vm484, %v491, %v495
        %v498 = vshrl.u32 %v479, 16
        %v500 = vshll.u32 %v479, 16
        %v502 = vrot.slane %v500, 1
        %v503 = vor.u32 %v498, %v502
        %v505 = vshll.u32 %v481, 16
        %v507 = vrot.slane %v505, 1
        %v508 = vsel %vm484, %v503, %v507
        %v509 = vshrl.u32 %v480, 16
        %v511 = vor.u32 %v509, %v495
        %v512 = vshrl.u32 %v481, 16
        %v514 = vor.u32 %v512, %v507
        %515 = vrot.lane.b32.xlu0 %v496, 72
        %v516 = vpop.permute.xlu0 %515
        %517 = vrot.lane.b32.xlu0 %v508, 72
        %v518 = vpop.permute.xlu0 %517
        %519 = vrot.lane.b32.xlu0 %v511, 72
        %v520 = vpop.permute.xlu0 %519
        %521 = vrot.lane.b32.xlu0 %v514, 72
        %v522 = vpop.permute.xlu0 %521
        %vm523 = vcmask 588800
        %v524 = vsel %vm523, %v516, %v518
        %v525 = vsel %vm523, %v520, %v522
        %vm528 = vcmask 1046528
        %v529 = vrot.slane %v478, 1
        %v530 = vrot.slane %v480, 1
        %v531 = vsel %vm528, %v529, %v530
        %v532 = vrot.slane %v479, 1
        %v533 = vrot.slane %v481, 1
        %v534 = vsel %vm528, %v532, %v533
        %535 = vrot.lane.b32.xlu0 %v531, 16
        %v536 = vpop.permute.xlu0 %535
        %537 = vrot.lane.b32.xlu0 %v534, 16
        %v538 = vpop.permute.xlu0 %537
        %539 = vrot.lane.b32.xlu0 %v530, 16
        %v540 = vpop.permute.xlu0 %539
        %541 = vrot.lane.b32.xlu0 %v533, 16
        %v542 = vpop.permute.xlu0 %541
        %vm543 = vcmask 130048
        %v544 = vsel %vm543, %v536, %v538
        %v545 = vsel %vm543, %v540, %v542
        %vm546 = vsmask.f32 6400
        %v547 = vrot.slane %v486, 1
        %v548 = vrot.slane %v488, 2
        %v549 = vor.u32 %v547, %v548
        %v550 = vrot.slane %v509, 1
        %v551 = vrot.slane %v493, 2
        %v552 = vor.u32 %v550, %v551
        %v553 = vsel %vm546, %v549, %v552
        %v554 = vrot.slane %v498, 1
        %v555 = vrot.slane %v500, 2
        %v556 = vor.u32 %v554, %v555
        %v557 = vrot.slane %v512, 1
        %v558 = vrot.slane %v505, 2
        %v559 = vor.u32 %v557, %v558
        %v560 = vsel %vm546, %v556, %v559
        %561 = vrot.lane.b32.xlu0 %v553, 88
        %v562 = vpop.permute.xlu0 %561
        %563 = vrot.lane.b32.xlu0 %v560, 88
        %v564 = vpop.permute.xlu0 %563
        %565 = vrot.lane.b32.xlu0 %v552, 88
        %v566 = vpop.permute.xlu0 %565
        %567 = vrot.lane.b32.xlu0 %v559, 88
        %v568 = vpop.permute.xlu0 %567
        %vm569 = vcmask 719872
        %v570 = vsel %vm569, %v562, %v564
        %v571 = vsel %vm569, %v566, %v568
        %vm574 = vcmask 1045504
        %v575 = vrot.slane %v478, 2
        %v576 = vrot.slane %v480, 2
        %v577 = vsel %vm574, %v575, %v576
        %v578 = vrot.slane %v479, 2
        %v579 = vrot.slane %v481, 2
        %v580 = vsel %vm574, %v578, %v579
        %581 = vrot.lane.b32.xlu0 %v577, 32
        %v582 = vpop.permute.xlu0 %581
        %583 = vrot.lane.b32.xlu0 %v580, 32
        %v584 = vpop.permute.xlu0 %583
        %585 = vrot.lane.b32.xlu0 %v576, 32
        %v586 = vpop.permute.xlu0 %585
        %587 = vrot.lane.b32.xlu0 %v579, 32
        %v588 = vpop.permute.xlu0 %587
        %vm589 = vcmask 261120
        %v590 = vsel %vm589, %v582, %v584
        %v591 = vsel %vm589, %v586, %v588
        %vm592 = vcmask 588800
        %v594 = vsel %vm592, %v479, %v516
        %v597 = vsel %vm592, %v481, %v520
        %vm599 = vcmask 130048
        %v602 = vsel %vm599, %v518, %v536
        %v606 = vsel %vm599, %v522, %v540
        %vm608 = vcmask 719872
        %v611 = vsel %vm608, %v544, %v562
        %v615 = vsel %vm608, %v545, %v566
        %vm617 = vcmask 261120
        %v620 = vsel %vm617, %v564, %v582
        %v624 = vsel %vm617, %v568, %v586
        %v626 = vld [vmem:[%s1] sm:$0xff]
        %v627 = vld [vmem:[%s1 + $0x8] sm:$0xff]
        %v628 = vld [vmem:[%s1 + $0x10] sm:$0xff]
        %v629 = vld [vmem:[%s1 + $0x18] sm:$0xff]
        %v630 = vld [vmem:[%s1 + $0x20] sm:$0xff]
        %v631 = vld [vmem:[%s1 + $0x28] sm:$0xff]
        %v632 = vld [vmem:[%s1 + $0x30] sm:$0xff]
        %v633 = vld [vmem:[%s1 + $0x38] sm:$0xff]
        %v634 = vld [vmem:[%s1 + $0x40] sm:$0xff]
        %v635 = vld [vmem:[%s1 + $0x48] sm:$0xff]
        %v636 = vld [vmem:[%s1 + $0x50] sm:$0xff]
        %v637 = vld [vmem:[%s1 + $0x58] sm:$0xff]
        %v638 = vld [vmem:[%s1 + $0x60] sm:$0xff]
        %v639 = vld [vmem:[%s1 + $0x68] sm:$0xff]
        %v640 = vld [vmem:[%s1 + $0x70] sm:$0xff]
        %v641 = vld [vmem:[%s1 + $0x78] sm:$0xff]
        %v642 = vld [vmem:[%s1 + $0x80] sm:$0xff]
        %v643 = vld [vmem:[%s1 + $0x88] sm:$0xff]
        %v644 = vld [vmem:[%s1 + $0x90] sm:$0xff]
        %v645 = vld [vmem:[%s1 + $0x98] sm:$0xff]
        %v646 = vld [vmem:[%s1 + $0xa0] sm:$0xff]
        %v647 = vld [vmem:[%s1 + $0xa8] sm:$0xff]
        %v648 = vld [vmem:[%s1 + $0xb0] sm:$0xff]
        %v649 = vld [vmem:[%s1 + $0xb8] sm:$0xff]
        %v650 = vld [vmem:[%s1 + $0xc0] sm:$0xff]
        %v651 = vld [vmem:[%s1 + $0xc8] sm:$0xff]
        %v652 = vld [vmem:[%s1 + $0xd0] sm:$0xff]
        %v653 = vld [vmem:[%s1 + $0xd8] sm:$0xff]
        %v654 = vld [vmem:[%s1 + $0xe0] sm:$0xff]
        %v655 = vld [vmem:[%s1 + $0xe8] sm:$0xff]
        %v656 = vld [vmem:[%s1 + $0xf0] sm:$0xff]
        %v657 = vld [vmem:[%s1 + $0xf8] sm:$0xff]
        %v658 = vld [vmem:[%s1 + $0x100] sm:$0xff]
        %v659 = vld [vmem:[%s1 + $0x108] sm:$0xff]
        %v660 = vld [vmem:[%s1 + $0x110] sm:$0xff]
        %v661 = vld [vmem:[%s1 + $0x118] sm:$0xff]
        %v662 = vld [vmem:[%s1 + $0x120] sm:$0xff]
        %v663 = vld [vmem:[%s1 + $0x128] sm:$0xff]
        %v664 = vld [vmem:[%s1 + $0x130] sm:$0xff]
        %v665 = vld [vmem:[%s1 + $0x138] sm:$0xff]
        %v666 = vld [vmem:[%s1 + $0x140] sm:$0xff]
        %v667 = vld [vmem:[%s1 + $0x148] sm:$0xff]
        %v668 = vld [vmem:[%s1 + $0x150] sm:$0xff]
        %v669 = vld [vmem:[%s1 + $0x158] sm:$0xff]
        %v670 = vld [vmem:[%s1 + $0x160] sm:$0xff]
        %v671 = vld [vmem:[%s1 + $0x168] sm:$0xff]
        %v672 = vld [vmem:[%s1 + $0x170] sm:$0xff]
        %v673 = vld [vmem:[%s1 + $0x178] sm:$0xff]
        %v674 = vld [vmem:[%s1 + $0x180] sm:$0xff]
        %v675 = vld [vmem:[%s1 + $0x188] sm:$0xff]
        %v676 = vld [vmem:[%s1 + $0x190] sm:$0xff]
        %v677 = vld [vmem:[%s1 + $0x198] sm:$0xff]
        %v678 = vld [vmem:[%s1 + $0x1a0] sm:$0xff]
        %v679 = vld [vmem:[%s1 + $0x1a8] sm:$0xff]
        %v680 = vld [vmem:[%s1 + $0x1b0] sm:$0xff]
        %v681 = vld [vmem:[%s1 + $0x1b8] sm:$0xff]
        %v682 = vld [vmem:[%s1 + $0x1c0] sm:$0xff]
        %v683 = vld [vmem:[%s1 + $0x1c8] sm:$0xff]
        %v684 = vld [vmem:[%s1 + $0x1d0] sm:$0xff]
        %v685 = vld [vmem:[%s1 + $0x1d8] sm:$0xff]
        %v686 = vld [vmem:[%s1 + $0x1e0] sm:$0xff]
        %v687 = vld [vmem:[%s1 + $0x1e8] sm:$0xff]
        %v688 = vld [vmem:[%s1 + $0x1f0] sm:$0xff]
        %v689 = vld [vmem:[%s1 + $0x1f8] sm:$0xff]
        %v690 = vld [vmem:[%s1 + $0x200] sm:$0xff]
        %v691 = vld [vmem:[%s1 + $0x208] sm:$0xff]
        %v692 = vld [vmem:[%s1 + $0x210] sm:$0xff]
        %v693 = vld [vmem:[%s1 + $0x218] sm:$0xff]
        %v694 = vld [vmem:[%s1 + $0x220] sm:$0xff]
        %v695 = vld [vmem:[%s1 + $0x228] sm:$0xff]
        %v696 = vld [vmem:[%s1 + $0x230] sm:$0xff]
        %v697 = vld [vmem:[%s1 + $0x238] sm:$0xff]
        %v698 = vld [vmem:[%s1 + $0x240] sm:$0xff]
        %v699 = vld [vmem:[%s1 + $0x248] sm:$0xff]
        %v700 = vld [vmem:[%s1 + $0x250] sm:$0xff]
        %v701 = vld [vmem:[%s1 + $0x258] sm:$0xff]
        %v702 = vld [vmem:[%s1 + $0x260] sm:$0xff]
        %v703 = vld [vmem:[%s1 + $0x268] sm:$0xff]
        %v704 = vld [vmem:[%s1 + $0x270] sm:$0xff]
        %v705 = vld [vmem:[%s1 + $0x278] sm:$0xff]
        %v706 = vld [vmem:[%s1 + $0x280] sm:$0xff]
        %v707 = vld [vmem:[%s1 + $0x288] sm:$0xff]
        %v708 = vld [vmem:[%s1 + $0x290] sm:$0xff]
        %v709 = vld [vmem:[%s1 + $0x298] sm:$0xff]
        %v710 = vld [vmem:[%s1 + $0x2a0] sm:$0xff]
        %v711 = vld [vmem:[%s1 + $0x2a8] sm:$0xff]
        %v712 = vld [vmem:[%s1 + $0x2b0] sm:$0xff]
        %v713 = vld [vmem:[%s1 + $0x2b8] sm:$0xff]
        %v714 = vld [vmem:[%s1 + $0x2c0] sm:$0xff]
        %v715 = vld [vmem:[%s1 + $0x2c8] sm:$0xff]
        %v716 = vld [vmem:[%s1 + $0x2d0] sm:$0xff]
        %v717 = vld [vmem:[%s1 + $0x2d8] sm:$0xff]
        %v718 = vld [vmem:[%s1 + $0x2e0] sm:$0xff]
        %v719 = vld [vmem:[%s1 + $0x2e8] sm:$0xff]
        %v720 = vld [vmem:[%s1 + $0x2f0] sm:$0xff]
        %v721 = vld [vmem:[%s1 + $0x2f8] sm:$0xff]
        %v722 = vld [vmem:[%s1 + $0x300] sm:$0xff]
        %v723 = vld [vmem:[%s1 + $0x308] sm:$0xff]
        %v724 = vld [vmem:[%s1 + $0x310] sm:$0xff]
        %v725 = vld [vmem:[%s1 + $0x318] sm:$0xff]
        %v726 = vld [vmem:[%s1 + $0x320] sm:$0xff]
        %v727 = vld [vmem:[%s1 + $0x328] sm:$0xff]
        %v728 = vld [vmem:[%s1 + $0x330] sm:$0xff]
        %v729 = vld [vmem:[%s1 + $0x338] sm:$0xff]
        %v730 = vld [vmem:[%s1 + $0x340] sm:$0xff]
        %v731 = vld [vmem:[%s1 + $0x348] sm:$0xff]
        %v732 = vld [vmem:[%s1 + $0x350] sm:$0xff]
        %v733 = vld [vmem:[%s1 + $0x358] sm:$0xff]
        %v734 = vld [vmem:[%s1 + $0x360] sm:$0xff]
        %v735 = vld [vmem:[%s1 + $0x368] sm:$0xff]
        %v736 = vld [vmem:[%s1 + $0x370] sm:$0xff]
        %v737 = vld [vmem:[%s1 + $0x378] sm:$0xff]
        %v738 = vld [vmem:[%s1 + $0x380] sm:$0xff]
        %v739 = vld [vmem:[%s1 + $0x388] sm:$0xff]
        %v740 = vld [vmem:[%s1 + $0x390] sm:$0xff]
        %v741 = vld [vmem:[%s1 + $0x398] sm:$0xff]
        %v742 = vld [vmem:[%s1 + $0x3a0] sm:$0xff]
        %v743 = vld [vmem:[%s1 + $0x3a8] sm:$0xff]
        %v744 = vld [vmem:[%s1 + $0x3b0] sm:$0xff]
        %v745 = vld [vmem:[%s1 + $0x3b8] sm:$0xff]
        %v746 = vld [vmem:[%s1 + $0x3c0] sm:$0xff]
        %v747 = vld [vmem:[%s1 + $0x3c8] sm:$0xff]
        %v748 = vld [vmem:[%s1 + $0x3d0] sm:$0xff]
        %v749 = vld [vmem:[%s1 + $0x3d8] sm:$0xff]
        %v750 = vld [vmem:[%s1 + $0x3e0] sm:$0xff]
        %v751 = vld [vmem:[%s2] sm:$0x3]
        %v753 = vlaneseq
        %v754 = vshrl.u32 %v753, 7
        %v755 = vsub.s32 0, %v754
        %v756 = vrot.slane %v751, %v755
        %v757 = vlaneseq
        %v758 = vshrl.u32 %v757, 7
        %v759 = vsub.s32 1, %v758
        %v760 = vrot.slane %v751, %v759
        %v888 = vunpack.c.l.b16 %v626
        %v889 = vunpack.c.h.b16 %v626
        %v890 = vunpack.c.l.b16 %v627
        %v891 = vunpack.c.h.b16 %v627
        %v892 = vunpack.c.l.b16 %v628
        %v893 = vunpack.c.h.b16 %v628
        %v894 = vunpack.c.l.b16 %v629
        %v895 = vunpack.c.h.b16 %v629
        %v896 = vunpack.c.l.b16 %v630
        %v897 = vunpack.c.h.b16 %v630
        %v898 = vunpack.c.l.b16 %v631
        %v899 = vunpack.c.h.b16 %v631
        %v900 = vunpack.c.l.b16 %v632
        %v901 = vunpack.c.h.b16 %v632
        %v902 = vunpack.c.l.b16 %v633
        %v903 = vunpack.c.h.b16 %v633
        %v904 = vunpack.c.l.b16 %v634
        %v905 = vunpack.c.h.b16 %v634
        %v906 = vunpack.c.l.b16 %v635
        %v907 = vunpack.c.h.b16 %v635
        %v908 = vunpack.c.l.b16 %v636
        %v909 = vunpack.c.h.b16 %v636
        %v910 = vunpack.c.l.b16 %v637
        %v911 = vunpack.c.h.b16 %v637
        %v912 = vunpack.c.l.b16 %v638
        %v913 = vunpack.c.h.b16 %v638
        %v914 = vunpack.c.l.b16 %v639
        %v915 = vunpack.c.h.b16 %v639
        %v916 = vunpack.c.l.b16 %v640
        %v917 = vunpack.c.h.b16 %v640
        %v918 = vunpack.c.l.b16 %v641
        %v919 = vunpack.c.h.b16 %v641
        %v920 = vunpack.c.l.b16 %v642
        %v921 = vunpack.c.h.b16 %v642
        %v922 = vunpack.c.l.b16 %v643
        %v923 = vunpack.c.h.b16 %v643
        %v924 = vunpack.c.l.b16 %v644
        %v925 = vunpack.c.h.b16 %v644
        %v926 = vunpack.c.l.b16 %v645
        %v927 = vunpack.c.h.b16 %v645
        %v928 = vunpack.c.l.b16 %v646
        %v929 = vunpack.c.h.b16 %v646
        %v930 = vunpack.c.l.b16 %v647
        %v931 = vunpack.c.h.b16 %v647
        %v932 = vunpack.c.l.b16 %v648
        %v933 = vunpack.c.h.b16 %v648
        %v934 = vunpack.c.l.b16 %v649
        %v935 = vunpack.c.h.b16 %v649
        %v936 = vunpack.c.l.b16 %v650
        %v937 = vunpack.c.h.b16 %v650
        %v938 = vunpack.c.l.b16 %v651
        %v939 = vunpack.c.h.b16 %v651
        %v940 = vunpack.c.l.b16 %v652
        %v941 = vunpack.c.h.b16 %v652
        %v942 = vunpack.c.l.b16 %v653
        %v943 = vunpack.c.h.b16 %v653
        %v944 = vunpack.c.l.b16 %v654
        %v945 = vunpack.c.h.b16 %v654
        %v946 = vunpack.c.l.b16 %v655
        %v947 = vunpack.c.h.b16 %v655
        %v948 = vunpack.c.l.b16 %v656
        %v949 = vunpack.c.h.b16 %v656
        %v950 = vunpack.c.l.b16 %v657
        %v951 = vunpack.c.h.b16 %v657
        %v952 = vunpack.c.l.b16 %v658
        %v953 = vunpack.c.h.b16 %v658
        %v954 = vunpack.c.l.b16 %v659
        %v955 = vunpack.c.h.b16 %v659
        %v956 = vunpack.c.l.b16 %v660
        %v957 = vunpack.c.h.b16 %v660
        %v958 = vunpack.c.l.b16 %v661
        %v959 = vunpack.c.h.b16 %v661
        %v960 = vunpack.c.l.b16 %v662
        %v961 = vunpack.c.h.b16 %v662
        %v962 = vunpack.c.l.b16 %v663
        %v963 = vunpack.c.h.b16 %v663
        %v964 = vunpack.c.l.b16 %v664
        %v965 = vunpack.c.h.b16 %v664
        %v966 = vunpack.c.l.b16 %v665
        %v967 = vunpack.c.h.b16 %v665
        %v968 = vunpack.c.l.b16 %v666
        %v969 = vunpack.c.h.b16 %v666
        %v970 = vunpack.c.l.b16 %v667
        %v971 = vunpack.c.h.b16 %v667
        %v972 = vunpack.c.l.b16 %v668
        %v973 = vunpack.c.h.b16 %v668
        %v974 = vunpack.c.l.b16 %v669
        %v975 = vunpack.c.h.b16 %v669
        %v976 = vunpack.c.l.b16 %v670
        %v977 = vunpack.c.h.b16 %v670
        %v978 = vunpack.c.l.b16 %v671
        %v979 = vunpack.c.h.b16 %v671
        %v980 = vunpack.c.l.b16 %v672
        %v981 = vunpack.c.h.b16 %v672
        %v982 = vunpack.c.l.b16 %v673
        %v983 = vunpack.c.h.b16 %v673
        %v984 = vunpack.c.l.b16 %v674
        %v985 = vunpack.c.h.b16 %v674
        %v986 = vunpack.c.l.b16 %v675
        %v987 = vunpack.c.h.b16 %v675
        %v988 = vunpack.c.l.b16 %v676
        %v989 = vunpack.c.h.b16 %v676
        %v990 = vunpack.c.l.b16 %v677
        %v991 = vunpack.c.h.b16 %v677
        %v992 = vunpack.c.l.b16 %v678
        %v993 = vunpack.c.h.b16 %v678
        %v994 = vunpack.c.l.b16 %v679
        %v995 = vunpack.c.h.b16 %v679
        %v996 = vunpack.c.l.b16 %v680
        %v997 = vunpack.c.h.b16 %v680
        %v998 = vunpack.c.l.b16 %v681
        %v999 = vunpack.c.h.b16 %v681
        %v1000 = vunpack.c.l.b16 %v682
        %v1001 = vunpack.c.h.b16 %v682
        %v1002 = vunpack.c.l.b16 %v683
        %v1003 = vunpack.c.h.b16 %v683
        %v1004 = vunpack.c.l.b16 %v684
        %v1005 = vunpack.c.h.b16 %v684
        %v1006 = vunpack.c.l.b16 %v685
        %v1007 = vunpack.c.h.b16 %v685
        %v1008 = vunpack.c.l.b16 %v686
        %v1009 = vunpack.c.h.b16 %v686
        %v1010 = vunpack.c.l.b16 %v687
        %v1011 = vunpack.c.h.b16 %v687
        %v1012 = vunpack.c.l.b16 %v688
        %v1013 = vunpack.c.h.b16 %v688
        %v1014 = vunpack.c.l.b16 %v689
        %v1015 = vunpack.c.h.b16 %v689
        %v1016 = vunpack.c.l.b16 %v690
        %v1017 = vunpack.c.h.b16 %v690
        %v1018 = vunpack.c.l.b16 %v691
        %v1019 = vunpack.c.h.b16 %v691
        %v1020 = vunpack.c.l.b16 %v692
        %v1021 = vunpack.c.h.b16 %v692
        %v1022 = vunpack.c.l.b16 %v693
        %v1023 = vunpack.c.h.b16 %v693
        %v1024 = vunpack.c.l.b16 %v694
        %v1025 = vunpack.c.h.b16 %v694
        %v1026 = vunpack.c.l.b16 %v695
        %v1027 = vunpack.c.h.b16 %v695
        %v1028 = vunpack.c.l.b16 %v696
        %v1029 = vunpack.c.h.b16 %v696
        %v1030 = vunpack.c.l.b16 %v697
        %v1031 = vunpack.c.h.b16 %v697
        %v1032 = vunpack.c.l.b16 %v698
        %v1033 = vunpack.c.h.b16 %v698
        %v1034 = vunpack.c.l.b16 %v699
        %v1035 = vunpack.c.h.b16 %v699
        %v1036 = vunpack.c.l.b16 %v700
        %v1037 = vunpack.c.h.b16 %v700
        %v1038 = vunpack.c.l.b16 %v701
        %v1039 = vunpack.c.h.b16 %v701
        %v1040 = vunpack.c.l.b16 %v702
        %v1041 = vunpack.c.h.b16 %v702
        %v1042 = vunpack.c.l.b16 %v703
        %v1043 = vunpack.c.h.b16 %v703
        %v1044 = vunpack.c.l.b16 %v704
        %v1045 = vunpack.c.h.b16 %v704
        %v1046 = vunpack.c.l.b16 %v705
        %v1047 = vunpack.c.h.b16 %v705
        %v1048 = vunpack.c.l.b16 %v706
        %v1049 = vunpack.c.h.b16 %v706
        %v1050 = vunpack.c.l.b16 %v707
        %v1051 = vunpack.c.h.b16 %v707
        %v1052 = vunpack.c.l.b16 %v708
        %v1053 = vunpack.c.h.b16 %v708
        %v1054 = vunpack.c.l.b16 %v709
        %v1055 = vunpack.c.h.b16 %v709
        %v1056 = vunpack.c.l.b16 %v710
        %v1057 = vunpack.c.h.b16 %v710
        %v1058 = vunpack.c.l.b16 %v711
        %v1059 = vunpack.c.h.b16 %v711
        %v1060 = vunpack.c.l.b16 %v712
        %v1061 = vunpack.c.h.b16 %v712
        %v1062 = vunpack.c.l.b16 %v713
        %v1063 = vunpack.c.h.b16 %v713
        %v1064 = vunpack.c.l.b16 %v714
        %v1065 = vunpack.c.h.b16 %v714
        %v1066 = vunpack.c.l.b16 %v715
        %v1067 = vunpack.c.h.b16 %v715
        %v1068 = vunpack.c.l.b16 %v716
        %v1069 = vunpack.c.h.b16 %v716
        %v1070 = vunpack.c.l.b16 %v717
        %v1071 = vunpack.c.h.b16 %v717
        %v1072 = vunpack.c.l.b16 %v718
        %v1073 = vunpack.c.h.b16 %v718
        %v1074 = vunpack.c.l.b16 %v719
        %v1075 = vunpack.c.h.b16 %v719
        %v1076 = vunpack.c.l.b16 %v720
        %v1077 = vunpack.c.h.b16 %v720
        %v1078 = vunpack.c.l.b16 %v721
        %v1079 = vunpack.c.h.b16 %v721
        %v1080 = vunpack.c.l.b16 %v722
        %v1081 = vunpack.c.h.b16 %v722
        %v1082 = vunpack.c.l.b16 %v723
        %v1083 = vunpack.c.h.b16 %v723
        %v1084 = vunpack.c.l.b16 %v724
        %v1085 = vunpack.c.h.b16 %v724
        %v1086 = vunpack.c.l.b16 %v725
        %v1087 = vunpack.c.h.b16 %v725
        %v1088 = vunpack.c.l.b16 %v726
        %v1089 = vunpack.c.h.b16 %v726
        %v1090 = vunpack.c.l.b16 %v727
        %v1091 = vunpack.c.h.b16 %v727
        %v1092 = vunpack.c.l.b16 %v728
        %v1093 = vunpack.c.h.b16 %v728
        %v1094 = vunpack.c.l.b16 %v729
        %v1095 = vunpack.c.h.b16 %v729
        %v1096 = vunpack.c.l.b16 %v730
        %v1097 = vunpack.c.h.b16 %v730
        %v1098 = vunpack.c.l.b16 %v731
        %v1099 = vunpack.c.h.b16 %v731
        %v1100 = vunpack.c.l.b16 %v732
        %v1101 = vunpack.c.h.b16 %v732
        %v1102 = vunpack.c.l.b16 %v733
        %v1103 = vunpack.c.h.b16 %v733
        %v1104 = vunpack.c.l.b16 %v734
        %v1105 = vunpack.c.h.b16 %v734
        %v1106 = vunpack.c.l.b16 %v735
        %v1107 = vunpack.c.h.b16 %v735
        %v1108 = vunpack.c.l.b16 %v736
        %v1109 = vunpack.c.h.b16 %v736
        %v1110 = vunpack.c.l.b16 %v737
        %v1111 = vunpack.c.h.b16 %v737
        %v1112 = vunpack.c.l.b16 %v738
        %v1113 = vunpack.c.h.b16 %v738
        %v1114 = vunpack.c.l.b16 %v739
        %v1115 = vunpack.c.h.b16 %v739
        %v1116 = vunpack.c.l.b16 %v740
        %v1117 = vunpack.c.h.b16 %v740
        %v1118 = vunpack.c.l.b16 %v741
        %v1119 = vunpack.c.h.b16 %v741
        %v1120 = vunpack.c.l.b16 %v742
        %v1121 = vunpack.c.h.b16 %v742
        %v1122 = vunpack.c.l.b16 %v743
        %v1123 = vunpack.c.h.b16 %v743
        %v1124 = vunpack.c.l.b16 %v744
        %v1125 = vunpack.c.h.b16 %v744
        %v1126 = vunpack.c.l.b16 %v745
        %v1127 = vunpack.c.h.b16 %v745
        %v1128 = vunpack.c.l.b16 %v746
        %v1129 = vunpack.c.h.b16 %v746
        %v1130 = vunpack.c.l.b16 %v747
        %v1131 = vunpack.c.h.b16 %v747
        %v1132 = vunpack.c.l.b16 %v748
        %v1133 = vunpack.c.h.b16 %v748
        %v1134 = vunpack.c.l.b16 %v749
        %v1135 = vunpack.c.h.b16 %v749
        %v1136 = vunpack.c.l.b16 %v750
        %v1137 = vunpack.c.h.b16 %v750
        %v1138 = vpack.c.b16 %v890, %v888
        %v1139 = vpack.c.b16 %v891, %v889
        %v1140 = vpack.c.b16 %v894, %v892
        %v1141 = vpack.c.b16 %v895, %v893
        %v1142 = vpack.c.b16 %v898, %v896
        %v1143 = vpack.c.b16 %v899, %v897
        %v1144 = vpack.c.b16 %v902, %v900
        %v1145 = vpack.c.b16 %v903, %v901
        %v1146 = vpack.c.b16 %v906, %v904
        %v1147 = vpack.c.b16 %v907, %v905
        %v1148 = vpack.c.b16 %v910, %v908
        %v1149 = vpack.c.b16 %v911, %v909
        %v1150 = vpack.c.b16 %v914, %v912
        %v1151 = vpack.c.b16 %v915, %v913
        %v1152 = vpack.c.b16 %v918, %v916
        %v1153 = vpack.c.b16 %v919, %v917
        %v1154 = vpack.c.b16 %v922, %v920
        %v1155 = vpack.c.b16 %v923, %v921
        %v1156 = vpack.c.b16 %v926, %v924
        %v1157 = vpack.c.b16 %v927, %v925
        %v1158 = vpack.c.b16 %v930, %v928
        %v1159 = vpack.c.b16 %v931, %v929
        %v1160 = vpack.c.b16 %v934, %v932
        %v1161 = vpack.c.b16 %v935, %v933
        %v1162 = vpack.c.b16 %v938, %v936
        %v1163 = vpack.c.b16 %v939, %v937
        %v1164 = vpack.c.b16 %v942, %v940
        %v1165 = vpack.c.b16 %v943, %v941
        %v1166 = vpack.c.b16 %v946, %v944
        %v1167 = vpack.c.b16 %v947, %v945
        %v1168 = vpack.c.b16 %v950, %v948
        %v1169 = vpack.c.b16 %v951, %v949
        %v1170 = vpack.c.b16 %v954, %v952
        %v1171 = vpack.c.b16 %v955, %v953
        %v1172 = vpack.c.b16 %v958, %v956
        %v1173 = vpack.c.b16 %v959, %v957
        %v1174 = vpack.c.b16 %v962, %v960
        %v1175 = vpack.c.b16 %v963, %v961
        %v1176 = vpack.c.b16 %v966, %v964
        %v1177 = vpack.c.b16 %v967, %v965
        %v1178 = vpack.c.b16 %v970, %v968
        %v1179 = vpack.c.b16 %v971, %v969
        %v1180 = vpack.c.b16 %v974, %v972
        %v1181 = vpack.c.b16 %v975, %v973
        %v1182 = vpack.c.b16 %v978, %v976
        %v1183 = vpack.c.b16 %v979, %v977
        %v1184 = vpack.c.b16 %v982, %v980
        %v1185 = vpack.c.b16 %v983, %v981
        %v1186 = vpack.c.b16 %v986, %v984
        %v1187 = vpack.c.b16 %v987, %v985
        %v1188 = vpack.c.b16 %v990, %v988
        %v1189 = vpack.c.b16 %v991, %v989
        %v1190 = vpack.c.b16 %v994, %v992
        %v1191 = vpack.c.b16 %v995, %v993
        %v1192 = vpack.c.b16 %v998, %v996
        %v1193 = vpack.c.b16 %v999, %v997
        %v1194 = vpack.c.b16 %v1002, %v1000
        %v1195 = vpack.c.b16 %v1003, %v1001
        %v1196 = vpack.c.b16 %v1006, %v1004
        %v1197 = vpack.c.b16 %v1007, %v1005
        %v1198 = vpack.c.b16 %v1010, %v1008
        %v1199 = vpack.c.b16 %v1011, %v1009
        %v1200 = vpack.c.b16 %v1014, %v1012
        %v1201 = vpack.c.b16 %v1015, %v1013
        %v1202 = vpack.c.b16 %v1018, %v1016
        %v1203 = vpack.c.b16 %v1019, %v1017
        %v1204 = vpack.c.b16 %v1022, %v1020
        %v1205 = vpack.c.b16 %v1023, %v1021
        %v1206 = vpack.c.b16 %v1026, %v1024
        %v1207 = vpack.c.b16 %v1027, %v1025
        %v1208 = vpack.c.b16 %v1030, %v1028
        %v1209 = vpack.c.b16 %v1031, %v1029
        %v1210 = vpack.c.b16 %v1034, %v1032
        %v1211 = vpack.c.b16 %v1035, %v1033
        %v1212 = vpack.c.b16 %v1038, %v1036
        %v1213 = vpack.c.b16 %v1039, %v1037
        %v1214 = vpack.c.b16 %v1042, %v1040
        %v1215 = vpack.c.b16 %v1043, %v1041
        %v1216 = vpack.c.b16 %v1046, %v1044
        %v1217 = vpack.c.b16 %v1047, %v1045
        %v1218 = vpack.c.b16 %v1050, %v1048
        %v1219 = vpack.c.b16 %v1051, %v1049
        %v1220 = vpack.c.b16 %v1054, %v1052
        %v1221 = vpack.c.b16 %v1055, %v1053
        %v1222 = vpack.c.b16 %v1058, %v1056
        %v1223 = vpack.c.b16 %v1059, %v1057
        %v1224 = vpack.c.b16 %v1062, %v1060
        %v1225 = vpack.c.b16 %v1063, %v1061
        %v1226 = vpack.c.b16 %v1066, %v1064
        %v1227 = vpack.c.b16 %v1067, %v1065
        %v1228 = vpack.c.b16 %v1070, %v1068
        %v1229 = vpack.c.b16 %v1071, %v1069
        %v1230 = vpack.c.b16 %v1074, %v1072
        %v1231 = vpack.c.b16 %v1075, %v1073
        %v1232 = vpack.c.b16 %v1078, %v1076
        %v1233 = vpack.c.b16 %v1079, %v1077
        %v1234 = vpack.c.b16 %v1082, %v1080
        %v1235 = vpack.c.b16 %v1083, %v1081
        %v1236 = vpack.c.b16 %v1086, %v1084
        %v1237 = vpack.c.b16 %v1087, %v1085
        %v1238 = vpack.c.b16 %v1090, %v1088
        %v1239 = vpack.c.b16 %v1091, %v1089
        %v1240 = vpack.c.b16 %v1094, %v1092
        %v1241 = vpack.c.b16 %v1095, %v1093
        %v1242 = vpack.c.b16 %v1098, %v1096
        %v1243 = vpack.c.b16 %v1099, %v1097
        %v1244 = vpack.c.b16 %v1102, %v1100
        %v1245 = vpack.c.b16 %v1103, %v1101
        %v1246 = vpack.c.b16 %v1106, %v1104
        %v1247 = vpack.c.b16 %v1107, %v1105
        %v1248 = vpack.c.b16 %v1110, %v1108
        %v1249 = vpack.c.b16 %v1111, %v1109
        %v1250 = vpack.c.b16 %v1114, %v1112
        %v1251 = vpack.c.b16 %v1115, %v1113
        %v1252 = vpack.c.b16 %v1118, %v1116
        %v1253 = vpack.c.b16 %v1119, %v1117
        %v1254 = vpack.c.b16 %v1122, %v1120
        %v1255 = vpack.c.b16 %v1123, %v1121
        %v1256 = vpack.c.b16 %v1126, %v1124
        %v1257 = vpack.c.b16 %v1127, %v1125
        %v1258 = vpack.c.b16 %v1130, %v1128
        %v1259 = vpack.c.b16 %v1131, %v1129
        %v1260 = vpack.c.b16 %v1134, %v1132
        %v1261 = vpack.c.b16 %v1135, %v1133
        %v1262 = vpack.c.b16 %v1136, %v1136
        %v1263 = vpack.c.b16 %v1137, %v1137
        %vm1388 = vcmask 850944
        %v1390 = vsel %vm1388, %v590, 0
        %v1393 = vsel %vm1388, %v591, 0
        %vm1395 = vcmask 1043456
        %v1397 = vsel %vm1395, %v1262, 0
        %v1400 = vsel %vm1395, %v1263, 0
        %1402 = vmatprep.subr.bf16.mxu0 %v1139
        %1403 = vmatpush1.bf16.msra.mxu0 %v1138
        %1404 = vmatprep.subr.bf16.mxu0 %v1141
        %1405 = vmatpush1.bf16.msra.mxu0 %v1140
        %1406 = vmatprep.subr.bf16.mxu0 %v1143
        %1407 = vmatpush1.bf16.msra.mxu0 %v1142
        %1408 = vmatprep.subr.bf16.mxu0 %v1145
        %1409 = vmatpush1.bf16.msra.mxu0 %v1144
        %1410 = vmatprep.subr.bf16.mxu0 %v1147
        %1411 = vmatpush1.bf16.msra.mxu0 %v1146
        %1412 = vmatprep.subr.bf16.mxu0 %v1149
        %1413 = vmatpush1.bf16.msra.mxu0 %v1148
        %1414 = vmatprep.subr.bf16.mxu0 %v1151
        %1415 = vmatpush1.bf16.msra.mxu0 %v1150
        %1416 = vmatprep.subr.bf16.mxu0 %v1153
        %1417 = vmatpush1.bf16.msra.mxu0 %v1152
        %1418 = vmatprep.subr.bf16.mxu0 %v1155
        %1419 = vmatpush1.bf16.msra.mxu0 %v1154
        %1420 = vmatprep.subr.bf16.mxu0 %v1157
        %1421 = vmatpush1.bf16.msra.mxu0 %v1156
        %1422 = vmatprep.subr.bf16.mxu0 %v1159
        %1423 = vmatpush1.bf16.msra.mxu0 %v1158
        %1424 = vmatprep.subr.bf16.mxu0 %v1161
        %1425 = vmatpush1.bf16.msra.mxu0 %v1160
        %1426 = vmatprep.subr.bf16.mxu0 %v1163
        %1427 = vmatpush1.bf16.msra.mxu0 %v1162
        %1428 = vmatprep.subr.bf16.mxu0 %v1165
        %1429 = vmatpush1.bf16.msra.mxu0 %v1164
        %1430 = vmatprep.subr.bf16.mxu0 %v1167
        %1431 = vmatpush1.bf16.msra.mxu0 %v1166
        %1432 = vmatprep.subr.bf16.mxu0 %v1169
        %1433 = vmatpush1.bf16.msra.mxu0 %v1168
        %1434 = vmatprep.mubr.bf16.mxu0 %v594
        %1435 = vmatmul.mubr.bf16.gmra.mrb[0].mxu0 %v478
        %v1436 = vpop.f32.mrb[0].mxu0
        %v1437 = vadd.f32 %v756, %v1436
        %v1438 = vpop.f32.mrb[0].mxu0
        %v1439 = vadd.f32 %v760, %v1438
        %v1440 = vpop.f32.mrb[0].mxu0
        %v1441 = vadd.f32 %v756, %v1440
        %v1442 = vpop.f32.mrb[0].mxu0
        %v1443 = vadd.f32 %v760, %v1442
        %1444 = vmatprep.mubr.bf16.mxu0 %v597
        %1445 = vmatmul.mubr.bf16.gmra.mrb[0].mxu0 %v480
        %v1446 = vpop.f32.mrb[0].mxu0
        %v1447 = vadd.f32 %v756, %v1446
        %v1448 = vpop.f32.mrb[0].mxu0
        %v1449 = vadd.f32 %v760, %v1448
        %v1450 = vpop.f32.mrb[0].mxu0
        %v1451 = vpop.f32.mrb[0].mxu0
        %1452 = vdwg.mxu0
        %1453 = vmatprep.subr.bf16.mxu0 %v1171
        %1454 = vmatpush1.bf16.msra.mxu0 %v1170
        %1455 = vmatprep.subr.bf16.mxu0 %v1173
        %1456 = vmatpush1.bf16.msra.mxu0 %v1172
        %1457 = vmatprep.subr.bf16.mxu0 %v1175
        %1458 = vmatpush1.bf16.msra.mxu0 %v1174
        %1459 = vmatprep.subr.bf16.mxu0 %v1177
        %1460 = vmatpush1.bf16.msra.mxu0 %v1176
        %1461 = vmatprep.subr.bf16.mxu0 %v1179
        %1462 = vmatpush1.bf16.msra.mxu0 %v1178
        %1463 = vmatprep.subr.bf16.mxu0 %v1181
        %1464 = vmatpush1.bf16.msra.mxu0 %v1180
        %1465 = vmatprep.subr.bf16.mxu0 %v1183
        %1466 = vmatpush1.bf16.msra.mxu0 %v1182
        %1467 = vmatprep.subr.bf16.mxu0 %v1185
        %1468 = vmatpush1.bf16.msra.mxu0 %v1184
        %1469 = vmatprep.subr.bf16.mxu0 %v1187
        %1470 = vmatpush1.bf16.msra.mxu0 %v1186
        %1471 = vmatprep.subr.bf16.mxu0 %v1189
        %1472 = vmatpush1.bf16.msra.mxu0 %v1188
        %1473 = vmatprep.subr.bf16.mxu0 %v1191
        %1474 = vmatpush1.bf16.msra.mxu0 %v1190
        %1475 = vmatprep.subr.bf16.mxu0 %v1193
        %1476 = vmatpush1.bf16.msra.mxu0 %v1192
        %1477 = vmatprep.subr.bf16.mxu0 %v1195
        %1478 = vmatpush1.bf16.msra.mxu0 %v1194
        %1479 = vmatprep.subr.bf16.mxu0 %v1197
        %1480 = vmatpush1.bf16.msra.mxu0 %v1196
        %1481 = vmatprep.subr.bf16.mxu0 %v1199
        %1482 = vmatpush1.bf16.msra.mxu0 %v1198
        %1483 = vmatprep.subr.bf16.mxu0 %v1201
        %1484 = vmatpush1.bf16.msra.mxu0 %v1200
        %1485 = vmatprep.mubr.bf16.mxu0 %v602
        %1486 = vmatmul.mubr.bf16.gmra.mrb[0].mxu0 %v524
        %v1487 = vpop.f32.mrb[0].mxu0
        %v1488 = vadd.f32 %v1437, %v1487
        %v1489 = vpop.f32.mrb[0].mxu0
        %v1490 = vadd.f32 %v1439, %v1489
        %v1491 = vpop.f32.mrb[0].mxu0
        %v1492 = vadd.f32 %v1441, %v1491
        %v1493 = vpop.f32.mrb[0].mxu0
        %v1494 = vadd.f32 %v1443, %v1493
        %1495 = vmatprep.mubr.bf16.mxu0 %v606
        %1496 = vmatmul.mubr.bf16.gmra.mrb[0].mxu0 %v525
        %v1497 = vpop.f32.mrb[0].mxu0
        %v1498 = vadd.f32 %v1447, %v1497
        %v1499 = vpop.f32.mrb[0].mxu0
        %v1500 = vadd.f32 %v1449, %v1499
        %v1501 = vpop.f32.mrb[0].mxu0
        %v1502 = vpop.f32.mrb[0].mxu0
        %1503 = vdwg.mxu0
        %1504 = vmatprep.subr.bf16.mxu0 %v1203
        %1505 = vmatpush1.bf16.msra.mxu0 %v1202
        %1506 = vmatprep.subr.bf16.mxu0 %v1205
        %1507 = vmatpush1.bf16.msra.mxu0 %v1204
        %1508 = vmatprep.subr.bf16.mxu0 %v1207
        %1509 = vmatpush1.bf16.msra.mxu0 %v1206
        %1510 = vmatprep.subr.bf16.mxu0 %v1209
        %1511 = vmatpush1.bf16.msra.mxu0 %v1208
        %1512 = vmatprep.subr.bf16.mxu0 %v1211
        %1513 = vmatpush1.bf16.msra.mxu0 %v1210
        %1514 = vmatprep.subr.bf16.mxu0 %v1213
        %1515 = vmatpush1.bf16.msra.mxu0 %v1212
        %1516 = vmatprep.subr.bf16.mxu0 %v1215
        %1517 = vmatpush1.bf16.msra.mxu0 %v1214
        %1518 = vmatprep.subr.bf16.mxu0 %v1217
        %1519 = vmatpush1.bf16.msra.mxu0 %v1216
        %1520 = vmatprep.subr.bf16.mxu0 %v1219
        %1521 = vmatpush1.bf16.msra.mxu0 %v1218
        %1522 = vmatprep.subr.bf16.mxu0 %v1221
        %1523 = vmatpush1.bf16.msra.mxu0 %v1220
        %1524 = vmatprep.subr.bf16.mxu0 %v1223
        %1525 = vmatpush1.bf16.msra.mxu0 %v1222
        %1526 = vmatprep.subr.bf16.mxu0 %v1225
        %1527 = vmatpush1.bf16.msra.mxu0 %v1224
        %1528 = vmatprep.subr.bf16.mxu0 %v1227
        %1529 = vmatpush1.bf16.msra.mxu0 %v1226
        %1530 = vmatprep.subr.bf16.mxu0 %v1229
        %1531 = vmatpush1.bf16.msra.mxu0 %v1228
        %1532 = vmatprep.subr.bf16.mxu0 %v1231
        %1533 = vmatpush1.bf16.msra.mxu0 %v1230
        %1534 = vmatprep.subr.bf16.mxu0 %v1233
        %1535 = vmatpush1.bf16.msra.mxu0 %v1232
        %1536 = vmatprep.mubr.bf16.mxu0 %v570
        %1537 = vmatmul.mubr.bf16.gmra.mrb[0].mxu0 %v611
        %v1538 = vpop.f32.mrb[0].mxu0
        %v1539 = vadd.f32 %v1488, %v1538
        %v1540 = vpop.f32.mrb[0].mxu0
        %v1541 = vadd.f32 %v1490, %v1540
        %v1542 = vpop.f32.mrb[0].mxu0
        %v1543 = vadd.f32 %v1492, %v1542
        %v1544 = vpop.f32.mrb[0].mxu0
        %v1545 = vadd.f32 %v1494, %v1544
        %1546 = vmatprep.mubr.bf16.mxu0 %v571
        %1547 = vmatmul.mubr.bf16.gmra.mrb[0].mxu0 %v615
        %v1548 = vpop.f32.mrb[0].mxu0
        %v1549 = vadd.f32 %v1498, %v1548
        %v1550 = vpop.f32.mrb[0].mxu0
        %v1551 = vadd.f32 %v1500, %v1550
        %v1552 = vpop.f32.mrb[0].mxu0
        %v1553 = vpop.f32.mrb[0].mxu0
        %1554 = vdwg.mxu0
        %1555 = vmatprep.subr.bf16.mxu0 %v1235
        %1556 = vmatpush1.bf16.msra.mxu0 %v1234
        %1557 = vmatprep.subr.bf16.mxu0 %v1237
        %1558 = vmatpush1.bf16.msra.mxu0 %v1236
        %1559 = vmatprep.subr.bf16.mxu0 %v1239
        %1560 = vmatpush1.bf16.msra.mxu0 %v1238
        %1561 = vmatprep.subr.bf16.mxu0 %v1241
        %1562 = vmatpush1.bf16.msra.mxu0 %v1240
        %1563 = vmatprep.subr.bf16.mxu0 %v1243
        %1564 = vmatpush1.bf16.msra.mxu0 %v1242
        %1565 = vmatprep.subr.bf16.mxu0 %v1245
        %1566 = vmatpush1.bf16.msra.mxu0 %v1244
        %1567 = vmatprep.subr.bf16.mxu0 %v1247
        %1568 = vmatpush1.bf16.msra.mxu0 %v1246
        %1569 = vmatprep.subr.bf16.mxu0 %v1249
        %1570 = vmatpush1.bf16.msra.mxu0 %v1248
        %1571 = vmatprep.subr.bf16.mxu0 %v1251
        %1572 = vmatpush1.bf16.msra.mxu0 %v1250
        %1573 = vmatprep.subr.bf16.mxu0 %v1253
        %1574 = vmatpush1.bf16.msra.mxu0 %v1252
        %1575 = vmatprep.subr.bf16.mxu0 %v1255
        %1576 = vmatpush1.bf16.msra.mxu0 %v1254
        %1577 = vmatprep.subr.bf16.mxu0 %v1257
        %1578 = vmatpush1.bf16.msra.mxu0 %v1256
        %1579 = vmatprep.subr.bf16.mxu0 %v1259
        %1580 = vmatpush1.bf16.msra.mxu0 %v1258
        %1581 = vmatprep.subr.bf16.mxu0 %v1261
        %1582 = vmatpush1.bf16.msra.mxu0 %v1260
        %1583 = vmatprep.subr.bf16.mxu0 %v1400
        %1584 = vmatpush1.bf16.msra.mxu0 %v1397
        %1585 = vmatprep.subr.bf16.mxu0 0
        %1586 = vmatpush1.bf16.msra.mxu0 0
        %1587 = vmatprep.mubr.bf16.mxu0 %v1390
        %1588 = vmatmul.mubr.bf16.gmra.mrb[0].mxu0 %v620
        %v1589 = vpop.f32.mrb[0].mxu0
        %v1590 = vadd.f32 %v1539, %v1589
        %v1591 = vpop.f32.mrb[0].mxu0
        %v1592 = vadd.f32 %v1541, %v1591
        %v1593 = vpop.f32.mrb[0].mxu0
        %v1594 = vadd.f32 %v1543, %v1593
        %v1595 = vpop.f32.mrb[0].mxu0
        %v1596 = vadd.f32 %v1545, %v1595
        %1597 = vmatprep.mubr.bf16.mxu0 %v1393
        %1598 = vmatmul.mubr.bf16.gmra.mrb[0].mxu0 %v624
        %v1599 = vpop.f32.mrb[0].mxu0
        %v1600 = vadd.f32 %v1549, %v1599
        %v1601 = vpop.f32.mrb[0].mxu0
        %v1602 = vadd.f32 %v1551, %v1601
        %v1603 = vpop.f32.mrb[0].mxu0
        %v1604 = vpop.f32.mrb[0].mxu0
        %1605 = vdwg.mxu0
        %v1606 = vmax.f32 %v1590, 0.0
        %v1607 = vmax.f32 %v1592, 0.0
        %v1608 = vmax.f32 %v1594, 0.0
        %v1609 = vmax.f32 %v1596, 0.0
        %v1610 = vmax.f32 %v1600, 0.0
        %v1611 = vmax.f32 %v1602, 0.0
        %v1618 = vcombine.low %v1606, %v1607
        %v1619 = vcombine.high %v1606, %v1607
        %v1621 = vunpack.c.l.s4 1966171168
        %v1622 = vunpack.c.0.s8 %v1621
        %v1623 = vlaneseq
        %v1624 = vshrl.u32 %v1623, 7
        %v1625 = vsub.s32 %v1622, %v1624
        %v1626 = vrot.slane %v1618, %v1625
        %v1628 = vunpack.c.l.s4 1966171168
        %v1629 = vunpack.c.0.s8 %v1628
        %v1630 = vlaneseq
        %v1631 = vshrl.u32 %v1630, 7
        %v1632 = vsub.s32 %v1629, %v1631
        %v1633 = vrot.slane %v1619, %v1632
        %v1634 = vcombine.high %v1626, %v1626
        %v1635 = vcombine.high %v1633, %v1633
        %v1637 = vunpack.c.l.s4 1966171168
        %v1638 = vunpack.c.0.s8 %v1637
        %v1639 = vlaneseq
        %v1640 = vshrl.u32 %v1639, 7
        %v1641 = vsub.s32 %v1638, %v1640
        %v1642 = vrot.slane %v1626, %v1641
        %v1644 = vunpack.c.l.s4 1966171168
        %v1645 = vunpack.c.0.s8 %v1644
        %v1646 = vlaneseq
        %v1647 = vshrl.u32 %v1646, 7
        %v1648 = vsub.s32 %v1645, %v1647
        %v1649 = vrot.slane %v1633, %v1648
        %v1651 = vunpack.c.l.s4 1966171168
        %v1652 = vunpack.c.0.s8 %v1651
        %v1653 = vlaneseq
        %v1654 = vshrl.u32 %v1653, 7
        %v1655 = vsub.s32 %v1652, %v1654
        %v1656 = vrot.slane %v1634, %v1655
        %v1658 = vunpack.c.l.s4 1966171168
        %v1659 = vunpack.c.0.s8 %v1658
        %v1660 = vlaneseq
        %v1661 = vshrl.u32 %v1660, 7
        %v1662 = vsub.s32 %v1659, %v1661
        %v1663 = vrot.slane %v1635, %v1662
        %v1664 = vcombine.high %v1642, %v1642
        %v1665 = vcombine.high %v1649, %v1649
        %v1666 = vcombine.high %v1656, %v1656
        %v1667 = vcombine.high %v1663, %v1663
        %v1668 = vcombine.low %v1608, %v1609
        %v1669 = vcombine.high %v1608, %v1609
        %v1671 = vunpack.c.l.s4 1966171168
        %v1672 = vunpack.c.0.s8 %v1671
        %v1673 = vlaneseq
        %v1674 = vshrl.u32 %v1673, 7
        %v1675 = vsub.s32 %v1672, %v1674
        %v1676 = vrot.slane %v1668, %v1675
        %v1678 = vunpack.c.l.s4 1966171168
        %v1679 = vunpack.c.0.s8 %v1678
        %v1680 = vlaneseq
        %v1681 = vshrl.u32 %v1680, 7
        %v1682 = vsub.s32 %v1679, %v1681
        %v1683 = vrot.slane %v1669, %v1682
        %v1684 = vcombine.high %v1676, %v1676
        %v1685 = vcombine.high %v1683, %v1683
        %v1687 = vunpack.c.l.s4 1966171168
        %v1688 = vunpack.c.0.s8 %v1687
        %v1689 = vlaneseq
        %v1690 = vshrl.u32 %v1689, 7
        %v1691 = vsub.s32 %v1688, %v1690
        %v1692 = vrot.slane %v1676, %v1691
        %v1694 = vunpack.c.l.s4 1966171168
        %v1695 = vunpack.c.0.s8 %v1694
        %v1696 = vlaneseq
        %v1697 = vshrl.u32 %v1696, 7
        %v1698 = vsub.s32 %v1695, %v1697
        %v1699 = vrot.slane %v1683, %v1698
        %v1701 = vunpack.c.l.s4 1966171168
        %v1702 = vunpack.c.0.s8 %v1701
        %v1703 = vlaneseq
        %v1704 = vshrl.u32 %v1703, 7
        %v1705 = vsub.s32 %v1702, %v1704
        %v1706 = vrot.slane %v1684, %v1705
        %v1708 = vunpack.c.l.s4 1966171168
        %v1709 = vunpack.c.0.s8 %v1708
        %v1710 = vlaneseq
        %v1711 = vshrl.u32 %v1710, 7
        %v1712 = vsub.s32 %v1709, %v1711
        %v1713 = vrot.slane %v1685, %v1712
        %v1714 = vcombine.high %v1692, %v1692
        %v1715 = vcombine.high %v1699, %v1699
        %v1716 = vcombine.high %v1706, %v1706
        %v1717 = vcombine.high %v1713, %v1713
        %v1718 = vcombine.low %v1610, %v1611
        %v1720 = vunpack.c.l.s4 1966171168
        %v1721 = vunpack.c.0.s8 %v1720
        %v1722 = vlaneseq
        %v1723 = vshrl.u32 %v1722, 7
        %v1724 = vsub.s32 %v1721, %v1723
        %v1725 = vrot.slane %v1718, %v1724
        %v1726 = vcombine.high %v1725, %v1725
        %v1728 = vunpack.c.l.s4 1966171168
        %v1729 = vunpack.c.0.s8 %v1728
        %v1730 = vlaneseq
        %v1731 = vshrl.u32 %v1730, 7
        %v1732 = vsub.s32 %v1729, %v1731
        %v1733 = vrot.slane %v1725, %v1732
        %v1735 = vunpack.c.l.s4 1966171168
        %v1736 = vunpack.c.0.s8 %v1735
        %v1737 = vlaneseq
        %v1738 = vshrl.u32 %v1737, 7
        %v1739 = vsub.s32 %v1736, %v1738
        %v1740 = vrot.slane %v1726, %v1739
        %v1741 = vcombine.high %v1733, %v1733
        %v1742 = vcombine.high %v1740, %v1740
        %v1743 = vcombine.low %v1642, %v1656
        %v1744 = vcombine.low %v1664, %v1666
        %v1746 = vunpack.c.l.s4 1966171168
        %v1747 = vunpack.c.0.s8 %v1746
        %v1748 = vlaneseq
        %v1749 = vshrl.u32 %v1748, 7
        %v1750 = vsub.s32 %v1747, %v1749
        %v1751 = vrot.slane %v1743, %v1750
        %v1753 = vunpack.c.l.s4 1966171168
        %v1754 = vunpack.c.0.s8 %v1753
        %v1755 = vlaneseq
        %v1756 = vshrl.u32 %v1755, 7
        %v1757 = vsub.s32 %v1754, %v1756
        %v1758 = vrot.slane %v1744, %v1757
        %v1760 = vunpack.c.l.s4 1966171168
        %v1761 = vunpack.c.0.s8 %v1760
        %v1762 = vlaneseq
        %v1763 = vshrl.u32 %v1762, 7
        %v1764 = vsub.s32 %v1761, %v1763
        %v1765 = vrot.slane %v1649, %v1764
        %v1766 = vcombine.low %v1751, %v1758
        %v1767 = vcombine.high %v1751, %v1758
        %v1768 = vcombine.high %v1765, %v1765
        %v1770 = vunpack.c.l.s4 1966171168
        %v1771 = vunpack.c.0.s8 %v1770
        %v1772 = vlaneseq
        %v1773 = vshrl.u32 %v1772, 7
        %v1774 = vsub.s32 %v1771, %v1773
        %v1775 = vrot.slane %v1766, %v1774
        %v1777 = vunpack.c.l.s4 1966171168
        %v1778 = vunpack.c.0.s8 %v1777
        %v1779 = vlaneseq
        %v1780 = vshrl.u32 %v1779, 7
        %v1781 = vsub.s32 %v1778, %v1780
        %v1782 = vrot.slane %v1767, %v1781
        %v1784 = vunpack.c.l.s4 1966171168
        %v1785 = vunpack.c.0.s8 %v1784
        %v1786 = vlaneseq
        %v1787 = vshrl.u32 %v1786, 7
        %v1788 = vsub.s32 %v1785, %v1787
        %v1789 = vrot.slane %v1765, %v1788
        %v1791 = vunpack.c.l.s4 1966171168
        %v1792 = vunpack.c.0.s8 %v1791
        %v1793 = vlaneseq
        %v1794 = vshrl.u32 %v1793, 7
        %v1795 = vsub.s32 %v1792, %v1794
        %v1796 = vrot.slane %v1768, %v1795
        %v1797 = vcombine.low %v1775, %v1789
        %v1798 = vcombine.low %v1782, %v1796
        %v1799 = vcombine.low %v1663, %v1665
        %v1800 = vcombine.low %v1667, %v1692
        %v1802 = vunpack.c.l.s4 1966171168
        %v1803 = vunpack.c.0.s8 %v1802
        %v1804 = vlaneseq
        %v1805 = vshrl.u32 %v1804, 7
        %v1806 = vsub.s32 %v1803, %v1805
        %v1807 = vrot.slane %v1799, %v1806
        %v1809 = vunpack.c.l.s4 1966171168
        %v1810 = vunpack.c.0.s8 %v1809
        %v1811 = vlaneseq
        %v1812 = vshrl.u32 %v1811, 7
        %v1813 = vsub.s32 %v1810, %v1812
        %v1814 = vrot.slane %v1800, %v1813
        %v1816 = vunpack.c.l.s4 1966171168
        %v1817 = vunpack.c.0.s8 %v1816
        %v1818 = vlaneseq
        %v1819 = vshrl.u32 %v1818, 7
        %v1820 = vsub.s32 %v1817, %v1819
        %v1821 = vrot.slane %v1706, %v1820
        %v1822 = vcombine.low %v1807, %v1814
        %v1823 = vcombine.high %v1807, %v1814
        %v1824 = vcombine.high %v1821, %v1821
        %v1826 = vunpack.c.l.s4 1966171168
        %v1827 = vunpack.c.0.s8 %v1826
        %v1828 = vlaneseq
        %v1829 = vshrl.u32 %v1828, 7
        %v1830 = vsub.s32 %v1827, %v1829
        %v1831 = vrot.slane %v1822, %v1830
        %v1833 = vunpack.c.l.s4 1966171168
        %v1834 = vunpack.c.0.s8 %v1833
        %v1835 = vlaneseq
        %v1836 = vshrl.u32 %v1835, 7
        %v1837 = vsub.s32 %v1834, %v1836
        %v1838 = vrot.slane %v1823, %v1837
        %v1840 = vunpack.c.l.s4 1966171168
        %v1841 = vunpack.c.0.s8 %v1840
        %v1842 = vlaneseq
        %v1843 = vshrl.u32 %v1842, 7
        %v1844 = vsub.s32 %v1841, %v1843
        %v1845 = vrot.slane %v1821, %v1844
        %v1847 = vunpack.c.l.s4 1966171168
        %v1848 = vunpack.c.0.s8 %v1847
        %v1849 = vlaneseq
        %v1850 = vshrl.u32 %v1849, 7
        %v1851 = vsub.s32 %v1848, %v1850
        %v1852 = vrot.slane %v1824, %v1851
        %v1853 = vcombine.low %v1831, %v1845
        %v1854 = vcombine.low %v1838, %v1852
        %v1855 = vcombine.low %v1714, %v1716
        %v1856 = vcombine.low %v1699, %v1713
        %v1858 = vunpack.c.l.s4 1966171168
        %v1859 = vunpack.c.0.s8 %v1858
        %v1860 = vlaneseq
        %v1861 = vshrl.u32 %v1860, 7
        %v1862 = vsub.s32 %v1859, %v1861
        %v1863 = vrot.slane %v1855, %v1862
        %v1865 = vunpack.c.l.s4 1966171168
        %v1866 = vunpack.c.0.s8 %v1865
        %v1867 = vlaneseq
        %v1868 = vshrl.u32 %v1867, 7
        %v1869 = vsub.s32 %v1866, %v1868
        %v1870 = vrot.slane %v1856, %v1869
        %v1872 = vunpack.c.l.s4 1966171168
        %v1873 = vunpack.c.0.s8 %v1872
        %v1874 = vlaneseq
        %v1875 = vshrl.u32 %v1874, 7
        %v1876 = vsub.s32 %v1873, %v1875
        %v1877 = vrot.slane %v1715, %v1876
        %v1878 = vcombine.low %v1863, %v1870
        %v1879 = vcombine.high %v1863, %v1870
        %v1880 = vcombine.high %v1877, %v1877
        %v1882 = vunpack.c.l.s4 1966171168
        %v1883 = vunpack.c.0.s8 %v1882
        %v1884 = vlaneseq
        %v1885 = vshrl.u32 %v1884, 7
        %v1886 = vsub.s32 %v1883, %v1885
        %v1887 = vrot.slane %v1878, %v1886
        %v1889 = vunpack.c.l.s4 1966171168
        %v1890 = vunpack.c.0.s8 %v1889
        %v1891 = vlaneseq
        %v1892 = vshrl.u32 %v1891, 7
        %v1893 = vsub.s32 %v1890, %v1892
        %v1894 = vrot.slane %v1879, %v1893
        %v1896 = vunpack.c.l.s4 1966171168
        %v1897 = vunpack.c.0.s8 %v1896
        %v1898 = vlaneseq
        %v1899 = vshrl.u32 %v1898, 7
        %v1900 = vsub.s32 %v1897, %v1899
        %v1901 = vrot.slane %v1877, %v1900
        %v1903 = vunpack.c.l.s4 1966171168
        %v1904 = vunpack.c.0.s8 %v1903
        %v1905 = vlaneseq
        %v1906 = vshrl.u32 %v1905, 7
        %v1907 = vsub.s32 %v1904, %v1906
        %v1908 = vrot.slane %v1880, %v1907
        %v1909 = vcombine.low %v1887, %v1901
        %v1910 = vcombine.low %v1894, %v1908
        %v1911 = vcombine.low %v1717, %v1733
        %v1912 = vcombine.low %v1740, %v1741
        %v1914 = vunpack.c.l.s4 1966171168
        %v1915 = vunpack.c.0.s8 %v1914
        %v1916 = vlaneseq
        %v1917 = vshrl.u32 %v1916, 7
        %v1918 = vsub.s32 %v1915, %v1917
        %v1919 = vrot.slane %v1911, %v1918
        %v1921 = vunpack.c.l.s4 1966171168
        %v1922 = vunpack.c.0.s8 %v1921
        %v1923 = vlaneseq
        %v1924 = vshrl.u32 %v1923, 7
        %v1925 = vsub.s32 %v1922, %v1924
        %v1926 = vrot.slane %v1912, %v1925
        %v1928 = vunpack.c.l.s4 1966171168
        %v1929 = vunpack.c.0.s8 %v1928
        %v1930 = vlaneseq
        %v1931 = vshrl.u32 %v1930, 7
        %v1932 = vsub.s32 %v1929, %v1931
        %v1933 = vrot.slane %v1742, %v1932
        %v1934 = vcombine.low %v1919, %v1926
        %v1935 = vcombine.high %v1919, %v1926
        %v1936 = vcombine.high %v1933, %v1933
        %v1938 = vunpack.c.l.s4 1966171168
        %v1939 = vunpack.c.0.s8 %v1938
        %v1940 = vlaneseq
        %v1941 = vshrl.u32 %v1940, 7
        %v1942 = vsub.s32 %v1939, %v1941
        %v1943 = vrot.slane %v1934, %v1942
        %v1945 = vunpack.c.l.s4 1966171168
        %v1946 = vunpack.c.0.s8 %v1945
        %v1947 = vlaneseq
        %v1948 = vshrl.u32 %v1947, 7
        %v1949 = vsub.s32 %v1946, %v1948
        %v1950 = vrot.slane %v1935, %v1949
        %v1952 = vunpack.c.l.s4 1966171168
        %v1953 = vunpack.c.0.s8 %v1952
        %v1954 = vlaneseq
        %v1955 = vshrl.u32 %v1954, 7
        %v1956 = vsub.s32 %v1953, %v1955
        %v1957 = vrot.slane %v1933, %v1956
        %v1959 = vunpack.c.l.s4 1966171168
        %v1960 = vunpack.c.0.s8 %v1959
        %v1961 = vlaneseq
        %v1962 = vshrl.u32 %v1961, 7
        %v1963 = vsub.s32 %v1960, %v1962
        %v1964 = vrot.slane %v1936, %v1963
        %v1965 = vcombine.low %v1943, %v1957
        %v1966 = vcombine.low %v1950, %v1964
        %vm1975 = vcmask 1044480
        %v1976 = vsel %vm1975, %v1797, -inf
        %v1977 = vrot.slane %v1976, 4
        %v1978 = vmax.f32 %v1976, %v1977
        %v1979 = vrot.slane %v1978, 2
        %v1980 = vmax.f32 %v1978, %v1979
        %v1981 = vrot.slane %v1980, 1
        %v1982 = vmax.f32 %v1980, %v1981
        %vm1983 = vcmask 585728
        %v1984 = vsel %vm1983, %v1798, -inf
        %v1985 = vrot.slane %v1984, 4
        %v1986 = vmax.f32 %v1984, %v1985
        %v1987 = vrot.slane %v1986, 2
        %v1988 = vmax.f32 %v1986, %v1987
        %v1989 = vrot.slane %v1988, 1
        %v1990 = vmax.f32 %v1988, %v1989
        %v1991 = vsel %vm1975, %v1853, -inf
        %v1992 = vrot.slane %v1991, 4
        %v1993 = vmax.f32 %v1991, %v1992
        %v1994 = vrot.slane %v1993, 2
        %v1995 = vmax.f32 %v1993, %v1994
        %v1996 = vrot.slane %v1995, 1
        %v1997 = vmax.f32 %v1995, %v1996
        %v1998 = vsel %vm1983, %v1854, -inf
        %v1999 = vrot.slane %v1998, 4
        %v2000 = vmax.f32 %v1998, %v1999
        %v2001 = vrot.slane %v2000, 2
        %v2002 = vmax.f32 %v2000, %v2001
        %v2003 = vrot.slane %v2002, 1
        %v2004 = vmax.f32 %v2002, %v2003
        %v2005 = vsel %vm1975, %v1909, -inf
        %v2006 = vrot.slane %v2005, 4
        %v2007 = vmax.f32 %v2005, %v2006
        %v2008 = vrot.slane %v2007, 2
        %v2009 = vmax.f32 %v2007, %v2008
        %v2010 = vrot.slane %v2009, 1
        %v2011 = vmax.f32 %v2009, %v2010
        %v2012 = vsel %vm1983, %v1910, -inf
        %v2013 = vrot.slane %v2012, 4
        %v2014 = vmax.f32 %v2012, %v2013
        %v2015 = vrot.slane %v2014, 2
        %v2016 = vmax.f32 %v2014, %v2015
        %v2017 = vrot.slane %v2016, 1
        %v2018 = vmax.f32 %v2016, %v2017
        %v2019 = vsel %vm1975, %v1965, -inf
        %v2020 = vrot.slane %v2019, 4
        %v2021 = vmax.f32 %v2019, %v2020
        %v2022 = vrot.slane %v2021, 2
        %v2023 = vmax.f32 %v2021, %v2022
        %v2024 = vrot.slane %v2023, 1
        %v2025 = vmax.f32 %v2023, %v2024
        %v2026 = vsel %vm1983, %v1966, -inf
        %v2027 = vrot.slane %v2026, 4
        %v2028 = vmax.f32 %v2026, %v2027
        %v2029 = vrot.slane %v2028, 2
        %v2030 = vmax.f32 %v2028, %v2029
        %v2031 = vrot.slane %v2030, 1
        %v2032 = vmax.f32 %v2030, %v2031
        %v2033 = vpack.c.bf16 %v1982, %v1982
        %v2034 = vpack.c.bf16 %v1990, %v1990
        %v2035 = vpack.c.bf16 %v1997, %v1997
        %v2036 = vpack.c.bf16 %v2004, %v2004
        %v2037 = vpack.c.bf16 %v2011, %v2011
        %v2038 = vpack.c.bf16 %v2018, %v2018
        %v2039 = vpack.c.bf16 %v2025, %v2025
        %v2040 = vpack.c.bf16 %v2032, %v2032
        %v2041 = vld [vmem:[%s3] sm:$0xff]
        %v2042 = vld [vmem:[%s3 + $0x8] sm:$0xff]
        %v2043 = vld [vmem:[%s3 + $0x10] sm:$0xff]
        %v2044 = vld [vmem:[%s3 + $0x18] sm:$0xff]
        %v2045 = vld [vmem:[%s3 + $0x20] sm:$0xff]
        %v2046 = vld [vmem:[%s3 + $0x28] sm:$0xff]
        %v2047 = vld [vmem:[%s3 + $0x30] sm:$0xff]
        %v2048 = vld [vmem:[%s3 + $0x38] sm:$0xff]
        %v2049 = vld [vmem:[%s3 + $0x40] sm:$0xff]
        %v2050 = vld [vmem:[%s3 + $0x48] sm:$0xff]
        %v2051 = vld [vmem:[%s3 + $0x50] sm:$0xff]
        %v2052 = vld [vmem:[%s3 + $0x58] sm:$0xff]
        %v2053 = vld [vmem:[%s3 + $0x60] sm:$0xff]
        %v2054 = vld [vmem:[%s3 + $0x68] sm:$0xff]
        %v2055 = vld [vmem:[%s3 + $0x70] sm:$0xff]
        %v2056 = vld [vmem:[%s3 + $0x78] sm:$0xff]
        %v2057 = vld [vmem:[%s3 + $0x80] sm:$0xff]
        %v2058 = vld [vmem:[%s3 + $0x88] sm:$0xff]
        %v2059 = vld [vmem:[%s3 + $0x90] sm:$0xff]
        %v2060 = vld [vmem:[%s3 + $0x98] sm:$0xff]
        %v2061 = vld [vmem:[%s3 + $0xa0] sm:$0xff]
        %v2062 = vld [vmem:[%s3 + $0xa8] sm:$0xff]
        %v2063 = vld [vmem:[%s3 + $0xb0] sm:$0xff]
        %v2064 = vld [vmem:[%s3 + $0xb8] sm:$0xff]
        %v2065 = vld [vmem:[%s3 + $0xc0] sm:$0xff]
        %v2066 = vld [vmem:[%s5] sm:$0x3]
        %v2068 = vlaneseq
        %v2069 = vshrl.u32 %v2068, 7
        %v2070 = vsub.s32 0, %v2069
        %v2071 = vrot.slane %v2066, %v2070
        %v2072 = vlaneseq
        %v2073 = vshrl.u32 %v2072, 7
        %v2074 = vsub.s32 1, %v2073
        %v2075 = vrot.slane %v2066, %v2074
        %v2086 = vunpack.c.l.b16 %v2033
        %v2087 = vunpack.c.l.b16 %v2034
        %v2088 = vunpack.c.l.b16 %v2035
        %v2089 = vunpack.c.l.b16 %v2036
        %v2090 = vunpack.c.l.b16 %v2037
        %v2091 = vunpack.c.l.b16 %v2038
        %v2092 = vunpack.c.l.b16 %v2039
        %v2093 = vunpack.c.l.b16 %v2040
        %vm2094 = vcmask 1041409
        %v2095 = vsel %vm2094, %v2088, %v2086
        %vm2096 = vcmask 1042434
        %v2097 = vsel %vm2096, %v2090, %v2095
        %vm2098 = vcmask 1043459
        %v2099 = vsel %vm2098, %v2092, %v2097
        %v2100 = vsel %vm2094, %v2089, %v2087
        %v2101 = vsel %vm2096, %v2091, %v2100
        %v2102 = vsel %vm2098, %v2093, %v2101
        %v2103 = vpack.c.b16 %v2099, %v2099
        %v2104 = vpack.c.b16 %v2102, %v2102
        %v2131 = vunpack.c.l.b16 %v2041
        %v2132 = vunpack.c.h.b16 %v2041
        %v2133 = vunpack.c.l.b16 %v2042
        %v2134 = vunpack.c.h.b16 %v2042
        %v2135 = vunpack.c.l.b16 %v2043
        %v2136 = vunpack.c.h.b16 %v2043
        %v2137 = vunpack.c.l.b16 %v2044
        %v2138 = vunpack.c.h.b16 %v2044
        %v2139 = vunpack.c.l.b16 %v2045
        %v2140 = vunpack.c.h.b16 %v2045
        %v2141 = vunpack.c.l.b16 %v2046
        %v2142 = vunpack.c.h.b16 %v2046
        %v2143 = vunpack.c.l.b16 %v2047
        %v2144 = vunpack.c.h.b16 %v2047
        %v2145 = vunpack.c.l.b16 %v2048
        %v2146 = vunpack.c.h.b16 %v2048
        %v2147 = vunpack.c.l.b16 %v2049
        %v2148 = vunpack.c.h.b16 %v2049
        %v2149 = vunpack.c.l.b16 %v2050
        %v2150 = vunpack.c.h.b16 %v2050
        %v2151 = vunpack.c.l.b16 %v2051
        %v2152 = vunpack.c.h.b16 %v2051
        %v2153 = vunpack.c.l.b16 %v2052
        %v2154 = vunpack.c.h.b16 %v2052
        %v2155 = vunpack.c.l.b16 %v2053
        %v2156 = vunpack.c.h.b16 %v2053
        %v2157 = vunpack.c.l.b16 %v2054
        %v2158 = vunpack.c.h.b16 %v2054
        %v2159 = vunpack.c.l.b16 %v2055
        %v2160 = vunpack.c.h.b16 %v2055
        %v2161 = vunpack.c.l.b16 %v2056
        %v2162 = vunpack.c.h.b16 %v2056
        %v2163 = vunpack.c.l.b16 %v2057
        %v2164 = vunpack.c.h.b16 %v2057
        %v2165 = vunpack.c.l.b16 %v2058
        %v2166 = vunpack.c.h.b16 %v2058
        %v2167 = vunpack.c.l.b16 %v2059
        %v2168 = vunpack.c.h.b16 %v2059
        %v2169 = vunpack.c.l.b16 %v2060
        %v2170 = vunpack.c.h.b16 %v2060
        %v2171 = vunpack.c.l.b16 %v2061
        %v2172 = vunpack.c.h.b16 %v2061
        %v2173 = vunpack.c.l.b16 %v2062
        %v2174 = vunpack.c.h.b16 %v2062
        %v2175 = vunpack.c.l.b16 %v2063
        %v2176 = vunpack.c.h.b16 %v2063
        %v2177 = vunpack.c.l.b16 %v2064
        %v2178 = vunpack.c.h.b16 %v2064
        %v2179 = vunpack.c.l.b16 %v2065
        %v2180 = vunpack.c.h.b16 %v2065
        %v2181 = vpack.c.b16 %v2133, %v2131
        %v2182 = vpack.c.b16 %v2134, %v2132
        %v2183 = vpack.c.b16 %v2137, %v2135
        %v2184 = vpack.c.b16 %v2138, %v2136
        %v2185 = vpack.c.b16 %v2141, %v2139
        %v2186 = vpack.c.b16 %v2142, %v2140
        %v2187 = vpack.c.b16 %v2145, %v2143
        %v2188 = vpack.c.b16 %v2146, %v2144
        %v2189 = vpack.c.b16 %v2149, %v2147
        %v2190 = vpack.c.b16 %v2150, %v2148
        %v2191 = vpack.c.b16 %v2153, %v2151
        %v2192 = vpack.c.b16 %v2154, %v2152
        %v2193 = vpack.c.b16 %v2157, %v2155
        %v2194 = vpack.c.b16 %v2158, %v2156
        %v2195 = vpack.c.b16 %v2161, %v2159
        %v2196 = vpack.c.b16 %v2162, %v2160
        %v2197 = vpack.c.b16 %v2165, %v2163
        %v2198 = vpack.c.b16 %v2166, %v2164
        %v2199 = vpack.c.b16 %v2169, %v2167
        %v2200 = vpack.c.b16 %v2170, %v2168
        %v2201 = vpack.c.b16 %v2173, %v2171
        %v2202 = vpack.c.b16 %v2174, %v2172
        %v2203 = vpack.c.b16 %v2177, %v2175
        %v2204 = vpack.c.b16 %v2178, %v2176
        %v2205 = vpack.c.b16 %v2179, %v2179
        %v2206 = vpack.c.b16 %v2180, %v2180
        %v2232 = vsel %vm592, %v2104, 0
        %v2235 = vsel %vm1395, %v2205, 0
        %v2238 = vsel %vm1395, %v2206, 0
        %2240 = vmatprep.subr.bf16.mxu0 %v2182
        %2241 = vmatpush1.bf16.msra.mxu0 %v2181
        %2242 = vmatprep.subr.bf16.mxu0 %v2184
        %2243 = vmatpush1.bf16.msra.mxu0 %v2183
        %2244 = vmatprep.subr.bf16.mxu0 %v2186
        %2245 = vmatpush1.bf16.msra.mxu0 %v2185
        %2246 = vmatprep.subr.bf16.mxu0 %v2188
        %2247 = vmatpush1.bf16.msra.mxu0 %v2187
        %2248 = vmatprep.subr.bf16.mxu0 %v2190
        %2249 = vmatpush1.bf16.msra.mxu0 %v2189
        %2250 = vmatprep.subr.bf16.mxu0 %v2192
        %2251 = vmatpush1.bf16.msra.mxu0 %v2191
        %2252 = vmatprep.subr.bf16.mxu0 %v2194
        %2253 = vmatpush1.bf16.msra.mxu0 %v2193
        %2254 = vmatprep.subr.bf16.mxu0 %v2196
        %2255 = vmatpush1.bf16.msra.mxu0 %v2195
        %2256 = vmatprep.subr.bf16.mxu0 %v2198
        %2257 = vmatpush1.bf16.msra.mxu0 %v2197
        %2258 = vmatprep.subr.bf16.mxu0 %v2200
        %2259 = vmatpush1.bf16.msra.mxu0 %v2199
        %2260 = vmatprep.subr.bf16.mxu0 %v2202
        %2261 = vmatpush1.bf16.msra.mxu0 %v2201
        %2262 = vmatprep.subr.bf16.mxu0 %v2204
        %2263 = vmatpush1.bf16.msra.mxu0 %v2203
        %2264 = vmatprep.subr.bf16.mxu0 %v2238
        %2265 = vmatpush1.bf16.msra.mxu0 %v2235
        %2266 = vmatprep.subr.bf16.mxu0 0
        %2267 = vmatpush1.bf16.msra.mxu0 0
        %2268 = vmatprep.subr.bf16.mxu0 0
        %2269 = vmatpush1.bf16.msra.mxu0 0
        %2270 = vmatprep.subr.bf16.mxu0 0
        %2271 = vmatpush1.bf16.msra.mxu0 0
        %2272 = vmatprep.mubr.bf16.mxu0 %v2232
        %2273 = vmatmul.mubr.bf16.gmra.mrb[0].mxu0 %v2103
        %v2274 = vpop.f32.mrb[0].mxu0
        %v2275 = vadd.f32 %v2071, %v2274
        %v2276 = vpop.f32.mrb[0].mxu0
        %v2277 = vadd.f32 %v2075, %v2276
        %v2278 = vpop.f32.mrb[0].mxu0
        %v2279 = vpop.f32.mrb[0].mxu0
        %2280 = vdwg.mxu0
        %v2281 = vld [vmem:[%s4] sm:$0xff]
        %v2282 = vld [vmem:[%s4 + $0x8] sm:$0xff]
        %v2283 = vld [vmem:[%s4 + $0x10] sm:$0xff]
        %v2284 = vld [vmem:[%s4 + $0x18] sm:$0xff]
        %v2285 = vld [vmem:[%s4 + $0x20] sm:$0xff]
        %v2286 = vld [vmem:[%s4 + $0x28] sm:$0xff]
        %v2287 = vld [vmem:[%s4 + $0x30] sm:$0xff]
        %v2288 = vld [vmem:[%s4 + $0x38] sm:$0xff]
        %v2297 = vunpack.c.l.b16 %v2281
        %v2298 = vunpack.c.h.b16 %v2281
        %v2299 = vunpack.c.l.b16 %v2282
        %v2300 = vunpack.c.h.b16 %v2282
        %v2301 = vunpack.c.l.b16 %v2283
        %v2302 = vunpack.c.h.b16 %v2283
        %v2303 = vunpack.c.l.b16 %v2284
        %v2304 = vunpack.c.h.b16 %v2284
        %v2305 = vunpack.c.l.b16 %v2285
        %v2306 = vunpack.c.h.b16 %v2285
        %v2307 = vunpack.c.l.b16 %v2286
        %v2308 = vunpack.c.h.b16 %v2286
        %v2309 = vunpack.c.l.b16 %v2287
        %v2310 = vunpack.c.h.b16 %v2287
        %v2311 = vunpack.c.l.b16 %v2288
        %v2312 = vunpack.c.h.b16 %v2288
        %v2313 = vpack.c.b16 %v2299, %v2297
        %v2314 = vpack.c.b16 %v2300, %v2298
        %v2315 = vpack.c.b16 %v2303, %v2301
        %v2316 = vpack.c.b16 %v2304, %v2302
        %v2317 = vpack.c.b16 %v2307, %v2305
        %v2318 = vpack.c.b16 %v2308, %v2306
        %v2319 = vpack.c.b16 %v2311, %v2309
        %v2320 = vpack.c.b16 %v2312, %v2310
        %vm2329 = vcmask 523264
        %v2331 = vsel %vm2329, 0, 0
        %2333 = vmatprep.subr.bf16.mxu0 %v2314
        %2334 = vmatpush1.bf16.msra.mxu0 %v2313
        %2335 = vmatprep.subr.bf16.mxu0 %v2316
        %2336 = vmatpush1.bf16.msra.mxu0 %v2315
        %2337 = vmatprep.subr.bf16.mxu0 %v2318
        %2338 = vmatpush1.bf16.msra.mxu0 %v2317
        %2339 = vmatprep.subr.bf16.mxu0 %v2320
        %2340 = vmatpush1.bf16.msra.mxu0 %v2319
        %2341 = vmatprep.subr.bf16.mxu0 0
        %2342 = vmatpush1.bf16.msra.mxu0 0
        %2343 = vmatprep.subr.bf16.mxu0 0
        %2344 = vmatpush1.bf16.msra.mxu0 0
        %2345 = vmatprep.subr.bf16.mxu0 0
        %2346 = vmatpush1.bf16.msra.mxu0 0
        %2347 = vmatprep.subr.bf16.mxu0 0
        %2348 = vmatpush1.bf16.msra.mxu0 0
        %2349 = vmatprep.subr.bf16.mxu0 0
        %2350 = vmatpush1.bf16.msra.mxu0 0
        %2351 = vmatprep.subr.bf16.mxu0 0
        %2352 = vmatpush1.bf16.msra.mxu0 0
        %2353 = vmatprep.subr.bf16.mxu0 0
        %2354 = vmatpush1.bf16.msra.mxu0 0
        %2355 = vmatprep.subr.bf16.mxu0 0
        %2356 = vmatpush1.bf16.msra.mxu0 0
        %2357 = vmatprep.subr.bf16.mxu0 0
        %2358 = vmatpush1.bf16.msra.mxu0 0
        %2359 = vmatprep.subr.bf16.mxu0 0
        %2360 = vmatpush1.bf16.msra.mxu0 0
        %2361 = vmatprep.subr.bf16.mxu0 0
        %2362 = vmatpush1.bf16.msra.mxu0 0
        %2363 = vmatprep.subr.bf16.mxu0 0
        %2364 = vmatpush1.bf16.msra.mxu0 0
        %2365 = vmatprep.mubr.bf16.mxu0 0
        %2366 = vmatmul.mubr.bf16.gmra.mrb[0].mxu0 %v2331
        %v2367 = vpop.f32.mrb[0].mxu0
        %v2368 = vadd.f32 0.0, %v2367
        %v2369 = vpop.f32.mrb[0].mxu0
        %v2370 = vadd.f32 0.0, %v2369
        %v2371 = vpop.f32.mrb[0].mxu0
        %v2372 = vpop.f32.mrb[0].mxu0
        %2373 = vdwg.mxu0
        %v2374 = vadd.f32 %v2275, %v2368
        %v2375 = vadd.f32 %v2277, %v2370
        %v2376 = vxor.u32 %v2374, 2147483648
        %v2377 = vxor.u32 %v2375, 2147483648
        %v2378 = vmul.f32 %v2376, 1.442695
        %v2379 = vpow.pop %v2378
        %v2380 = vmul.f32 %v2377, 1.442695
        %v2381 = vpow.pop %v2380
        %v2382 = vadd.f32 %v2379, 1.0
        %v2383 = vadd.f32 %v2381, 1.0
        %v2384 = vrcp.pop %v2382
        %v2385 = vmul.f32 1.0, %v2384
        %v2386 = vrcp.pop %v2383
        %v2387 = vmul.f32 1.0, %v2386
        %v2388 = vtanh.pop %v2375
        %v2389 = vmul.f32 %v2385, 0.0
        %v2390 = vmul.f32 %v2385, %v2388
        %2392 = vrot.lane.b32.xlu0 %v2390, 64
        %v2393 = vpop.permute.xlu0 %2392
        %v2395 = vadd.f32 %v2389, %v2393
        %v2396 = vtanh.pop %v2395
        %v2397 = vmul.f32 %v2387, %v2396
        %v2398 = vpack.c.bf16 %v2397, %v2397
        %2400 = vrot.lane.b32.xlu0 %v2398, 64
        %v2401 = vpop.permute.xlu0 %2400
        %v2403 = vsel %vm2329, %v2401, 0
        %2405 = vmatprep.subr.bf16.mxu0 %v2314
        %2406 = vmatpush1.bf16.msra.mxu0 %v2313
        %2407 = vmatprep.subr.bf16.mxu0 %v2316
        %2408 = vmatpush1.bf16.msra.mxu0 %v2315
        %2409 = vmatprep.subr.bf16.mxu0 %v2318
        %2410 = vmatpush1.bf16.msra.mxu0 %v2317
        %2411 = vmatprep.subr.bf16.mxu0 %v2320
        %2412 = vmatpush1.bf16.msra.mxu0 %v2319
        %2413 = vmatprep.subr.bf16.mxu0 0
        %2414 = vmatpush1.bf16.msra.mxu0 0
        %2415 = vmatprep.subr.bf16.mxu0 0
        %2416 = vmatpush1.bf16.msra.mxu0 0
        %2417 = vmatprep.subr.bf16.mxu0 0
        %2418 = vmatpush1.bf16.msra.mxu0 0
        %2419 = vmatprep.subr.bf16.mxu0 0
        %2420 = vmatpush1.bf16.msra.mxu0 0
        %2421 = vmatprep.subr.bf16.mxu0 0
        %2422 = vmatpush1.bf16.msra.mxu0 0
        %2423 = vmatprep.subr.bf16.mxu0 0
        %2424 = vmatpush1.bf16.msra.mxu0 0
        %2425 = vmatprep.subr.bf16.mxu0 0
        %2426 = vmatpush1.bf16.msra.mxu0 0
        %2427 = vmatprep.subr.bf16.mxu0 0
        %2428 = vmatpush1.bf16.msra.mxu0 0
        %2429 = vmatprep.subr.bf16.mxu0 0
        %2430 = vmatpush1.bf16.msra.mxu0 0
        %2431 = vmatprep.subr.bf16.mxu0 0
        %2432 = vmatpush1.bf16.msra.mxu0 0
        %2433 = vmatprep.subr.bf16.mxu0 0
        %2434 = vmatpush1.bf16.msra.mxu0 0
        %2435 = vmatprep.subr.bf16.mxu0 0
        %2436 = vmatpush1.bf16.msra.mxu0 0
        %2437 = vmatprep.mubr.bf16.mxu0 0
        %2438 = vmatmul.mubr.bf16.gmra.mrb[0].mxu0 %v2403
        %v2439 = vpop.f32.mrb[0].mxu0
        %v2440 = vadd.f32 0.0, %v2439
        %v2441 = vpop.f32.mrb[0].mxu0
        %v2442 = vadd.f32 0.0, %v2441
        %v2443 = vpop.f32.mrb[0].mxu0
        %v2444 = vpop.f32.mrb[0].mxu0
        %2445 = vdwg.mxu0
        %v2448 = vrot.slane %v2440, 7
        %v2449 = vrot.slane %v2442, 7
        %v2452 = vadd.f32 %v2275, %v2448
        %v2453 = vadd.f32 %v2277, %v2449
        %v2454 = vxor.u32 %v2452, 2147483648
        %v2455 = vxor.u32 %v2453, 2147483648
        %v2456 = vmul.f32 %v2454, 1.442695
        %v2457 = vpow.pop %v2456
        %v2458 = vmul.f32 %v2455, 1.442695
        %v2459 = vpow.pop %v2458
        %v2460 = vadd.f32 %v2457, 1.0
        %v2461 = vadd.f32 %v2459, 1.0
        %v2462 = vrcp.pop %v2460
        %v2463 = vmul.f32 1.0, %v2462
        %v2464 = vrcp.pop %v2461
        %v2465 = vmul.f32 1.0, %v2464
        %v2466 = vtanh.pop %v2453
        %v2468 = vrot.slane %v2395, 7
        %v2470 = vmul.f32 %v2463, %v2468
        %v2471 = vmul.f32 %v2463, %v2466
        %2473 = vrot.lane.b32.xlu0 %v2471, 64
        %v2474 = vpop.permute.xlu0 %2473
        %v2476 = vadd.f32 %v2470, %v2474
        %v2477 = vtanh.pop %v2476
        %v2478 = vmul.f32 %v2465, %v2477
        %v2479 = vpack.c.bf16 %v2478, %v2478
        %v2481 = vshrl.u32 %v2479, 16
        %2483 = vrot.lane.b32.xlu0 %v2481, 64
        %v2484 = vpop.permute.xlu0 %2483
        %v2486 = vsel %vm2329, %v2484, 0
        %2488 = vmatprep.subr.bf16.mxu0 %v2314
        %2489 = vmatpush1.bf16.msra.mxu0 %v2313
        %2490 = vmatprep.subr.bf16.mxu0 %v2316
        %2491 = vmatpush1.bf16.msra.mxu0 %v2315
        %2492 = vmatprep.subr.bf16.mxu0 %v2318
        %2493 = vmatpush1.bf16.msra.mxu0 %v2317
        %2494 = vmatprep.subr.bf16.mxu0 %v2320
        %2495 = vmatpush1.bf16.msra.mxu0 %v2319
        %2496 = vmatprep.subr.bf16.mxu0 0
        %2497 = vmatpush1.bf16.msra.mxu0 0
        %2498 = vmatprep.subr.bf16.mxu0 0
        %2499 = vmatpush1.bf16.msra.mxu0 0
        %2500 = vmatprep.subr.bf16.mxu0 0
        %2501 = vmatpush1.bf16.msra.mxu0 0
        %2502 = vmatprep.subr.bf16.mxu0 0
        %2503 = vmatpush1.bf16.msra.mxu0 0
        %2504 = vmatprep.subr.bf16.mxu0 0
        %2505 = vmatpush1.bf16.msra.mxu0 0
        %2506 = vmatprep.subr.bf16.mxu0 0
        %2507 = vmatpush1.bf16.msra.mxu0 0
        %2508 = vmatprep.subr.bf16.mxu0 0
        %2509 = vmatpush1.bf16.msra.mxu0 0
        %2510 = vmatprep.subr.bf16.mxu0 0
        %2511 = vmatpush1.bf16.msra.mxu0 0
        %2512 = vmatprep.subr.bf16.mxu0 0
        %2513 = vmatpush1.bf16.msra.mxu0 0
        %2514 = vmatprep.subr.bf16.mxu0 0
        %2515 = vmatpush1.bf16.msra.mxu0 0
        %2516 = vmatprep.subr.bf16.mxu0 0
        %2517 = vmatpush1.bf16.msra.mxu0 0
        %2518 = vmatprep.subr.bf16.mxu0 0
        %2519 = vmatpush1.bf16.msra.mxu0 0
        %2520 = vmatprep.mubr.bf16.mxu0 0
        %2521 = vmatmul.mubr.bf16.gmra.mrb[0].mxu0 %v2486
        %v2522 = vpop.f32.mrb[0].mxu0
        %v2523 = vadd.f32 0.0, %v2522
        %v2524 = vpop.f32.mrb[0].mxu0
        %v2525 = vadd.f32 0.0, %v2524
        %v2526 = vpop.f32.mrb[0].mxu0
        %v2527 = vpop.f32.mrb[0].mxu0
        %2528 = vdwg.mxu0
        %v2531 = vrot.slane %v2523, 6
        %v2532 = vrot.slane %v2525, 6
        %v2535 = vadd.f32 %v2275, %v2531
        %v2536 = vadd.f32 %v2277, %v2532
        %v2537 = vxor.u32 %v2535, 2147483648
        %v2538 = vxor.u32 %v2536, 2147483648
        %v2539 = vmul.f32 %v2537, 1.442695
        %v2540 = vpow.pop %v2539
        %v2541 = vmul.f32 %v2538, 1.442695
        %v2542 = vpow.pop %v2541
        %v2543 = vadd.f32 %v2540, 1.0
        %v2544 = vadd.f32 %v2542, 1.0
        %v2545 = vrcp.pop %v2543
        %v2546 = vmul.f32 1.0, %v2545
        %v2547 = vrcp.pop %v2544
        %v2548 = vmul.f32 1.0, %v2547
        %v2549 = vtanh.pop %v2536
        %v2551 = vrot.slane %v2476, 7
        %v2553 = vmul.f32 %v2546, %v2551
        %v2554 = vmul.f32 %v2546, %v2549
        %2556 = vrot.lane.b32.xlu0 %v2554, 64
        %v2557 = vpop.permute.xlu0 %2556
        %v2559 = vadd.f32 %v2553, %v2557
        %v2560 = vtanh.pop %v2559
        %v2561 = vmul.f32 %v2548, %v2560
        %v2562 = vpack.c.bf16 %v2561, %v2561
        %v2564 = vrot.slane %v2562, 1
        %2565 = vrot.lane.b32.xlu0 %v2564, 64
        %v2566 = vpop.permute.xlu0 %2565
        %v2568 = vsel %vm2329, %v2566, 0
        %2570 = vmatprep.subr.bf16.mxu0 %v2314
        %2571 = vmatpush1.bf16.msra.mxu0 %v2313
        %2572 = vmatprep.subr.bf16.mxu0 %v2316
        %2573 = vmatpush1.bf16.msra.mxu0 %v2315
        %2574 = vmatprep.subr.bf16.mxu0 %v2318
        %2575 = vmatpush1.bf16.msra.mxu0 %v2317
        %2576 = vmatprep.subr.bf16.mxu0 %v2320
        %2577 = vmatpush1.bf16.msra.mxu0 %v2319
        %2578 = vmatprep.subr.bf16.mxu0 0
        %2579 = vmatpush1.bf16.msra.mxu0 0
        %2580 = vmatprep.subr.bf16.mxu0 0
        %2581 = vmatpush1.bf16.msra.mxu0 0
        %2582 = vmatprep.subr.bf16.mxu0 0
        %2583 = vmatpush1.bf16.msra.mxu0 0
        %2584 = vmatprep.subr.bf16.mxu0 0
        %2585 = vmatpush1.bf16.msra.mxu0 0
        %2586 = vmatprep.subr.bf16.mxu0 0
        %2587 = vmatpush1.bf16.msra.mxu0 0
        %2588 = vmatprep.subr.bf16.mxu0 0
        %2589 = vmatpush1.bf16.msra.mxu0 0
        %2590 = vmatprep.subr.bf16.mxu0 0
        %2591 = vmatpush1.bf16.msra.mxu0 0
        %2592 = vmatprep.subr.bf16.mxu0 0
        %2593 = vmatpush1.bf16.msra.mxu0 0
        %2594 = vmatprep.subr.bf16.mxu0 0
        %2595 = vmatpush1.bf16.msra.mxu0 0
        %2596 = vmatprep.subr.bf16.mxu0 0
        %2597 = vmatpush1.bf16.msra.mxu0 0
        %2598 = vmatprep.subr.bf16.mxu0 0
        %2599 = vmatpush1.bf16.msra.mxu0 0
        %2600 = vmatprep.subr.bf16.mxu0 0
        %2601 = vmatpush1.bf16.msra.mxu0 0
        %2602 = vmatprep.mubr.bf16.mxu0 0
        %2603 = vmatmul.mubr.bf16.gmra.mrb[0].mxu0 %v2568
        %v2604 = vpop.f32.mrb[0].mxu0
        %v2605 = vadd.f32 0.0, %v2604
        %v2606 = vpop.f32.mrb[0].mxu0
        %v2607 = vadd.f32 0.0, %v2606
        %v2608 = vpop.f32.mrb[0].mxu0
        %v2609 = vpop.f32.mrb[0].mxu0
        %2610 = vdwg.mxu0
        %v2613 = vrot.slane %v2605, 5
        %v2614 = vrot.slane %v2607, 5
        %v2617 = vadd.f32 %v2275, %v2613
        %v2618 = vadd.f32 %v2277, %v2614
        %v2619 = vxor.u32 %v2617, 2147483648
        %v2620 = vxor.u32 %v2618, 2147483648
        %v2621 = vmul.f32 %v2619, 1.442695
        %v2622 = vpow.pop %v2621
        %v2623 = vmul.f32 %v2620, 1.442695
        %v2624 = vpow.pop %v2623
        %v2625 = vadd.f32 %v2622, 1.0
        %v2626 = vadd.f32 %v2624, 1.0
        %v2627 = vrcp.pop %v2625
        %v2628 = vmul.f32 1.0, %v2627
        %v2629 = vrcp.pop %v2626
        %v2630 = vmul.f32 1.0, %v2629
        %v2631 = vtanh.pop %v2618
        %v2633 = vrot.slane %v2559, 7
        %v2635 = vmul.f32 %v2628, %v2633
        %v2636 = vmul.f32 %v2628, %v2631
        %2638 = vrot.lane.b32.xlu0 %v2636, 64
        %v2639 = vpop.permute.xlu0 %2638
        %v2641 = vadd.f32 %v2635, %v2639
        %v2642 = vtanh.pop %v2641
        %v2643 = vmul.f32 %v2630, %v2642
        %vm2644 = vcmask 1040384
        %v2645 = vsel %vm2644, %v2397, %v2478
        %vm2646 = vcmask 1041408
        %v2647 = vsel %vm2646, %v2645, %v2561
        %vm2648 = vcmask 1042432
        %v2649 = vsel %vm2648, %v2647, %v2643
        %v2650 = vpack.c.bf16 %v2649, %v2649
        %v2651 = vld [vmem:[%s6] sm:$0xff]
        %v2652 = vld [vmem:[%s6 + $0x8] sm:$0xff]
        %v2653 = vld [vmem:[%s6 + $0x10] sm:$0xff]
        %v2654 = vld [vmem:[%s6 + $0x18] sm:$0xff]
        %v2655 = vld [vmem:[%s6 + $0x20] sm:$0xff]
        %v2656 = vld [vmem:[%s6 + $0x28] sm:$0xff]
        %v2657 = vld [vmem:[%s6 + $0x30] sm:$0xff]
        %v2658 = vld [vmem:[%s6 + $0x38] sm:$0xff]
        %v2659 = vld [vmem:[%s8] sm:$0x3]
        %v2661 = vlaneseq
        %v2662 = vshrl.u32 %v2661, 7
        %v2663 = vsub.s32 0, %v2662
        %v2664 = vrot.slane %v2659, %v2663
        %v2665 = vlaneseq
        %v2666 = vshrl.u32 %v2665, 7
        %v2667 = vsub.s32 1, %v2666
        %v2668 = vrot.slane %v2659, %v2667
        %2672 = vrot.lane.b32.xlu0 %v2650, 64
        %v2673 = vpop.permute.xlu0 %2672
        %v2682 = vunpack.c.l.b16 %v2651
        %v2683 = vunpack.c.h.b16 %v2651
        %v2684 = vunpack.c.l.b16 %v2652
        %v2685 = vunpack.c.h.b16 %v2652
        %v2686 = vunpack.c.l.b16 %v2653
        %v2687 = vunpack.c.h.b16 %v2653
        %v2688 = vunpack.c.l.b16 %v2654
        %v2689 = vunpack.c.h.b16 %v2654
        %v2690 = vunpack.c.l.b16 %v2655
        %v2691 = vunpack.c.h.b16 %v2655
        %v2692 = vunpack.c.l.b16 %v2656
        %v2693 = vunpack.c.h.b16 %v2656
        %v2694 = vunpack.c.l.b16 %v2657
        %v2695 = vunpack.c.h.b16 %v2657
        %v2696 = vunpack.c.l.b16 %v2658
        %v2697 = vunpack.c.h.b16 %v2658
        %v2698 = vpack.c.b16 %v2684, %v2682
        %v2699 = vpack.c.b16 %v2685, %v2683
        %v2700 = vpack.c.b16 %v2688, %v2686
        %v2701 = vpack.c.b16 %v2689, %v2687
        %v2702 = vpack.c.b16 %v2692, %v2690
        %v2703 = vpack.c.b16 %v2693, %v2691
        %v2704 = vpack.c.b16 %v2696, %v2694
        %v2705 = vpack.c.b16 %v2697, %v2695
        %v2715 = vsel %vm2329, %v2673, 0
        %2717 = vmatprep.subr.bf16.mxu0 %v2699
        %2718 = vmatpush1.bf16.msra.mxu0 %v2698
        %2719 = vmatprep.subr.bf16.mxu0 %v2701
        %2720 = vmatpush1.bf16.msra.mxu0 %v2700
        %2721 = vmatprep.subr.bf16.mxu0 %v2703
        %2722 = vmatpush1.bf16.msra.mxu0 %v2702
        %2723 = vmatprep.subr.bf16.mxu0 %v2705
        %2724 = vmatpush1.bf16.msra.mxu0 %v2704
        %2725 = vmatprep.subr.bf16.mxu0 0
        %2726 = vmatpush1.bf16.msra.mxu0 0
        %2727 = vmatprep.subr.bf16.mxu0 0
        %2728 = vmatpush1.bf16.msra.mxu0 0
        %2729 = vmatprep.subr.bf16.mxu0 0
        %2730 = vmatpush1.bf16.msra.mxu0 0
        %2731 = vmatprep.subr.bf16.mxu0 0
        %2732 = vmatpush1.bf16.msra.mxu0 0
        %2733 = vmatprep.subr.bf16.mxu0 0
        %2734 = vmatpush1.bf16.msra.mxu0 0
        %2735 = vmatprep.subr.bf16.mxu0 0
        %2736 = vmatpush1.bf16.msra.mxu0 0
        %2737 = vmatprep.subr.bf16.mxu0 0
        %2738 = vmatpush1.bf16.msra.mxu0 0
        %2739 = vmatprep.subr.bf16.mxu0 0
        %2740 = vmatpush1.bf16.msra.mxu0 0
        %2741 = vmatprep.subr.bf16.mxu0 0
        %2742 = vmatpush1.bf16.msra.mxu0 0
        %2743 = vmatprep.subr.bf16.mxu0 0
        %2744 = vmatpush1.bf16.msra.mxu0 0
        %2745 = vmatprep.subr.bf16.mxu0 0
        %2746 = vmatpush1.bf16.msra.mxu0 0
        %2747 = vmatprep.subr.bf16.mxu0 0
        %2748 = vmatpush1.bf16.msra.mxu0 0
        %2749 = vmatprep.mubr.bf16.mxu0 0
        %2750 = vmatmul.mubr.bf16.gmra.mrb[0].mxu0 %v2715
        %v2751 = vpop.f32.mrb[0].mxu0
        %v2752 = vadd.f32 %v2664, %v2751
        %v2753 = vpop.f32.mrb[0].mxu0
        %v2754 = vadd.f32 %v2668, %v2753
        %v2755 = vpop.f32.mrb[0].mxu0
        %v2756 = vpop.f32.mrb[0].mxu0
        %2757 = vdwg.mxu0
        %v2758 = vld [vmem:[%s7] sm:$0xff]
        %v2759 = vld [vmem:[%s7 + $0x8] sm:$0xff]
        %v2760 = vld [vmem:[%s7 + $0x10] sm:$0xff]
        %v2761 = vld [vmem:[%s7 + $0x18] sm:$0xff]
        %v2762 = vld [vmem:[%s7 + $0x20] sm:$0xff]
        %v2763 = vld [vmem:[%s7 + $0x28] sm:$0xff]
        %v2764 = vld [vmem:[%s7 + $0x30] sm:$0xff]
        %v2765 = vld [vmem:[%s7 + $0x38] sm:$0xff]
        %v2774 = vunpack.c.l.b16 %v2758
        %v2775 = vunpack.c.h.b16 %v2758
        %v2776 = vunpack.c.l.b16 %v2759
        %v2777 = vunpack.c.h.b16 %v2759
        %v2778 = vunpack.c.l.b16 %v2760
        %v2779 = vunpack.c.h.b16 %v2760
        %v2780 = vunpack.c.l.b16 %v2761
        %v2781 = vunpack.c.h.b16 %v2761
        %v2782 = vunpack.c.l.b16 %v2762
        %v2783 = vunpack.c.h.b16 %v2762
        %v2784 = vunpack.c.l.b16 %v2763
        %v2785 = vunpack.c.h.b16 %v2763
        %v2786 = vunpack.c.l.b16 %v2764
        %v2787 = vunpack.c.h.b16 %v2764
        %v2788 = vunpack.c.l.b16 %v2765
        %v2789 = vunpack.c.h.b16 %v2765
        %v2790 = vpack.c.b16 %v2776, %v2774
        %v2791 = vpack.c.b16 %v2777, %v2775
        %v2792 = vpack.c.b16 %v2780, %v2778
        %v2793 = vpack.c.b16 %v2781, %v2779
        %v2794 = vpack.c.b16 %v2784, %v2782
        %v2795 = vpack.c.b16 %v2785, %v2783
        %v2796 = vpack.c.b16 %v2788, %v2786
        %v2797 = vpack.c.b16 %v2789, %v2787
        %2806 = vmatprep.subr.bf16.mxu0 %v2791
        %2807 = vmatpush1.bf16.msra.mxu0 %v2790
        %2808 = vmatprep.subr.bf16.mxu0 %v2793
        %2809 = vmatpush1.bf16.msra.mxu0 %v2792
        %2810 = vmatprep.subr.bf16.mxu0 %v2795
        %2811 = vmatpush1.bf16.msra.mxu0 %v2794
        %2812 = vmatprep.subr.bf16.mxu0 %v2797
        %2813 = vmatpush1.bf16.msra.mxu0 %v2796
        %2814 = vmatprep.subr.bf16.mxu0 0
        %2815 = vmatpush1.bf16.msra.mxu0 0
        %2816 = vmatprep.subr.bf16.mxu0 0
        %2817 = vmatpush1.bf16.msra.mxu0 0
        %2818 = vmatprep.subr.bf16.mxu0 0
        %2819 = vmatpush1.bf16.msra.mxu0 0
        %2820 = vmatprep.subr.bf16.mxu0 0
        %2821 = vmatpush1.bf16.msra.mxu0 0
        %2822 = vmatprep.subr.bf16.mxu0 0
        %2823 = vmatpush1.bf16.msra.mxu0 0
        %2824 = vmatprep.subr.bf16.mxu0 0
        %2825 = vmatpush1.bf16.msra.mxu0 0
        %2826 = vmatprep.subr.bf16.mxu0 0
        %2827 = vmatpush1.bf16.msra.mxu0 0
        %2828 = vmatprep.subr.bf16.mxu0 0
        %2829 = vmatpush1.bf16.msra.mxu0 0
        %2830 = vmatprep.subr.bf16.mxu0 0
        %2831 = vmatpush1.bf16.msra.mxu0 0
        %2832 = vmatprep.subr.bf16.mxu0 0
        %2833 = vmatpush1.bf16.msra.mxu0 0
        %2834 = vmatprep.subr.bf16.mxu0 0
        %2835 = vmatpush1.bf16.msra.mxu0 0
        %2836 = vmatprep.subr.bf16.mxu0 0
        %2837 = vmatpush1.bf16.msra.mxu0 0
        %2838 = vmatprep.mubr.bf16.mxu0 0
        %2839 = vmatmul.mubr.bf16.gmra.mrb[0].mxu0 %v2331
        %v2840 = vpop.f32.mrb[0].mxu0
        %v2841 = vadd.f32 0.0, %v2840
        %v2842 = vpop.f32.mrb[0].mxu0
        %v2843 = vadd.f32 0.0, %v2842
        %v2844 = vpop.f32.mrb[0].mxu0
        %v2845 = vpop.f32.mrb[0].mxu0
        %2846 = vdwg.mxu0
        %v2847 = vadd.f32 %v2752, %v2841
        %v2848 = vadd.f32 %v2754, %v2843
        %v2849 = vxor.u32 %v2847, 2147483648
        %v2850 = vxor.u32 %v2848, 2147483648
        %v2851 = vmul.f32 %v2849, 1.442695
        %v2852 = vpow.pop %v2851
        %v2853 = vmul.f32 %v2850, 1.442695
        %v2854 = vpow.pop %v2853
        %v2855 = vadd.f32 %v2852, 1.0
        %v2856 = vadd.f32 %v2854, 1.0
        %v2857 = vrcp.pop %v2855
        %v2858 = vmul.f32 1.0, %v2857
        %v2859 = vrcp.pop %v2856
        %v2860 = vmul.f32 1.0, %v2859
        %v2861 = vtanh.pop %v2848
        %v2862 = vmul.f32 %v2858, 0.0
        %v2863 = vmul.f32 %v2858, %v2861
        %2865 = vrot.lane.b32.xlu0 %v2863, 64
        %v2866 = vpop.permute.xlu0 %2865
        %v2868 = vadd.f32 %v2862, %v2866
        %v2869 = vtanh.pop %v2868
        %v2870 = vmul.f32 %v2860, %v2869
        %v2871 = vpack.c.bf16 %v2870, %v2870
        %2873 = vrot.lane.b32.xlu0 %v2871, 64
        %v2874 = vpop.permute.xlu0 %2873
        %v2876 = vsel %vm2329, %v2874, 0
        %2878 = vmatprep.subr.bf16.mxu0 %v2791
        %2879 = vmatpush1.bf16.msra.mxu0 %v2790
        %2880 = vmatprep.subr.bf16.mxu0 %v2793
        %2881 = vmatpush1.bf16.msra.mxu0 %v2792
        %2882 = vmatprep.subr.bf16.mxu0 %v2795
        %2883 = vmatpush1.bf16.msra.mxu0 %v2794
        %2884 = vmatprep.subr.bf16.mxu0 %v2797
        %2885 = vmatpush1.bf16.msra.mxu0 %v2796
        %2886 = vmatprep.subr.bf16.mxu0 0
        %2887 = vmatpush1.bf16.msra.mxu0 0
        %2888 = vmatprep.subr.bf16.mxu0 0
        %2889 = vmatpush1.bf16.msra.mxu0 0
        %2890 = vmatprep.subr.bf16.mxu0 0
        %2891 = vmatpush1.bf16.msra.mxu0 0
        %2892 = vmatprep.subr.bf16.mxu0 0
        %2893 = vmatpush1.bf16.msra.mxu0 0
        %2894 = vmatprep.subr.bf16.mxu0 0
        %2895 = vmatpush1.bf16.msra.mxu0 0
        %2896 = vmatprep.subr.bf16.mxu0 0
        %2897 = vmatpush1.bf16.msra.mxu0 0
        %2898 = vmatprep.subr.bf16.mxu0 0
        %2899 = vmatpush1.bf16.msra.mxu0 0
        %2900 = vmatprep.subr.bf16.mxu0 0
        %2901 = vmatpush1.bf16.msra.mxu0 0
        %2902 = vmatprep.subr.bf16.mxu0 0
        %2903 = vmatpush1.bf16.msra.mxu0 0
        %2904 = vmatprep.subr.bf16.mxu0 0
        %2905 = vmatpush1.bf16.msra.mxu0 0
        %2906 = vmatprep.subr.bf16.mxu0 0
        %2907 = vmatpush1.bf16.msra.mxu0 0
        %2908 = vmatprep.subr.bf16.mxu0 0
        %2909 = vmatpush1.bf16.msra.mxu0 0
        %2910 = vmatprep.mubr.bf16.mxu0 0
        %2911 = vmatmul.mubr.bf16.gmra.mrb[0].mxu0 %v2876
        %v2912 = vpop.f32.mrb[0].mxu0
        %v2913 = vadd.f32 0.0, %v2912
        %v2914 = vpop.f32.mrb[0].mxu0
        %v2915 = vadd.f32 0.0, %v2914
        %v2916 = vpop.f32.mrb[0].mxu0
        %v2917 = vpop.f32.mrb[0].mxu0
        %2918 = vdwg.mxu0
        %v2921 = vrot.slane %v2913, 7
        %v2922 = vrot.slane %v2915, 7
        %v2925 = vadd.f32 %v2752, %v2921
        %v2926 = vadd.f32 %v2754, %v2922
        %v2927 = vxor.u32 %v2925, 2147483648
        %v2928 = vxor.u32 %v2926, 2147483648
        %v2929 = vmul.f32 %v2927, 1.442695
        %v2930 = vpow.pop %v2929
        %v2931 = vmul.f32 %v2928, 1.442695
        %v2932 = vpow.pop %v2931
        %v2933 = vadd.f32 %v2930, 1.0
        %v2934 = vadd.f32 %v2932, 1.0
        %v2935 = vrcp.pop %v2933
        %v2936 = vmul.f32 1.0, %v2935
        %v2937 = vrcp.pop %v2934
        %v2938 = vmul.f32 1.0, %v2937
        %v2939 = vtanh.pop %v2926
        %v2941 = vrot.slane %v2868, 7
        %v2943 = vmul.f32 %v2936, %v2941
        %v2944 = vmul.f32 %v2936, %v2939
        %2946 = vrot.lane.b32.xlu0 %v2944, 64
        %v2947 = vpop.permute.xlu0 %2946
        %v2949 = vadd.f32 %v2943, %v2947
        %v2950 = vtanh.pop %v2949
        %v2951 = vmul.f32 %v2938, %v2950
        %v2952 = vpack.c.bf16 %v2951, %v2951
        %v2954 = vshrl.u32 %v2952, 16
        %2956 = vrot.lane.b32.xlu0 %v2954, 64
        %v2957 = vpop.permute.xlu0 %2956
        %v2959 = vsel %vm2329, %v2957, 0
        %2961 = vmatprep.subr.bf16.mxu0 %v2791
        %2962 = vmatpush1.bf16.msra.mxu0 %v2790
        %2963 = vmatprep.subr.bf16.mxu0 %v2793
        %2964 = vmatpush1.bf16.msra.mxu0 %v2792
        %2965 = vmatprep.subr.bf16.mxu0 %v2795
        %2966 = vmatpush1.bf16.msra.mxu0 %v2794
        %2967 = vmatprep.subr.bf16.mxu0 %v2797
        %2968 = vmatpush1.bf16.msra.mxu0 %v2796
        %2969 = vmatprep.subr.bf16.mxu0 0
        %2970 = vmatpush1.bf16.msra.mxu0 0
        %2971 = vmatprep.subr.bf16.mxu0 0
        %2972 = vmatpush1.bf16.msra.mxu0 0
        %2973 = vmatprep.subr.bf16.mxu0 0
        %2974 = vmatpush1.bf16.msra.mxu0 0
        %2975 = vmatprep.subr.bf16.mxu0 0
        %2976 = vmatpush1.bf16.msra.mxu0 0
        %2977 = vmatprep.subr.bf16.mxu0 0
        %2978 = vmatpush1.bf16.msra.mxu0 0
        %2979 = vmatprep.subr.bf16.mxu0 0
        %2980 = vmatpush1.bf16.msra.mxu0 0
        %2981 = vmatprep.subr.bf16.mxu0 0
        %2982 = vmatpush1.bf16.msra.mxu0 0
        %2983 = vmatprep.subr.bf16.mxu0 0
        %2984 = vmatpush1.bf16.msra.mxu0 0
        %2985 = vmatprep.subr.bf16.mxu0 0
        %2986 = vmatpush1.bf16.msra.mxu0 0
        %2987 = vmatprep.subr.bf16.mxu0 0
        %2988 = vmatpush1.bf16.msra.mxu0 0
        %2989 = vmatprep.subr.bf16.mxu0 0
        %2990 = vmatpush1.bf16.msra.mxu0 0
        %2991 = vmatprep.subr.bf16.mxu0 0
        %2992 = vmatpush1.bf16.msra.mxu0 0
        %2993 = vmatprep.mubr.bf16.mxu0 0
        %2994 = vmatmul.mubr.bf16.gmra.mrb[0].mxu0 %v2959
        %v2995 = vpop.f32.mrb[0].mxu0
        %v2996 = vadd.f32 0.0, %v2995
        %v2997 = vpop.f32.mrb[0].mxu0
        %v2998 = vadd.f32 0.0, %v2997
        %v2999 = vpop.f32.mrb[0].mxu0
        %v3000 = vpop.f32.mrb[0].mxu0
        %3001 = vdwg.mxu0
        %v3004 = vrot.slane %v2996, 6
        %v3005 = vrot.slane %v2998, 6
        %v3008 = vadd.f32 %v2752, %v3004
        %v3009 = vadd.f32 %v2754, %v3005
        %v3010 = vxor.u32 %v3008, 2147483648
        %v3011 = vxor.u32 %v3009, 2147483648
        %v3012 = vmul.f32 %v3010, 1.442695
        %v3013 = vpow.pop %v3012
        %v3014 = vmul.f32 %v3011, 1.442695
        %v3015 = vpow.pop %v3014
        %v3016 = vadd.f32 %v3013, 1.0
        %v3017 = vadd.f32 %v3015, 1.0
        %v3018 = vrcp.pop %v3016
        %v3019 = vmul.f32 1.0, %v3018
        %v3020 = vrcp.pop %v3017
        %v3021 = vmul.f32 1.0, %v3020
        %v3022 = vtanh.pop %v3009
        %v3024 = vrot.slane %v2949, 7
        %v3026 = vmul.f32 %v3019, %v3024
        %v3027 = vmul.f32 %v3019, %v3022
        %3029 = vrot.lane.b32.xlu0 %v3027, 64
        %v3030 = vpop.permute.xlu0 %3029
        %v3032 = vadd.f32 %v3026, %v3030
        %v3033 = vtanh.pop %v3032
        %v3034 = vmul.f32 %v3021, %v3033
        %v3035 = vpack.c.bf16 %v3034, %v3034
        %v3037 = vrot.slane %v3035, 1
        %3038 = vrot.lane.b32.xlu0 %v3037, 64
        %v3039 = vpop.permute.xlu0 %3038
        %v3041 = vsel %vm2329, %v3039, 0
        %3043 = vmatprep.subr.bf16.mxu0 %v2791
        %3044 = vmatpush1.bf16.msra.mxu0 %v2790
        %3045 = vmatprep.subr.bf16.mxu0 %v2793
        %3046 = vmatpush1.bf16.msra.mxu0 %v2792
        %3047 = vmatprep.subr.bf16.mxu0 %v2795
        %3048 = vmatpush1.bf16.msra.mxu0 %v2794
        %3049 = vmatprep.subr.bf16.mxu0 %v2797
        %3050 = vmatpush1.bf16.msra.mxu0 %v2796
        %3051 = vmatprep.subr.bf16.mxu0 0
        %3052 = vmatpush1.bf16.msra.mxu0 0
        %3053 = vmatprep.subr.bf16.mxu0 0
        %3054 = vmatpush1.bf16.msra.mxu0 0
        %3055 = vmatprep.subr.bf16.mxu0 0
        %3056 = vmatpush1.bf16.msra.mxu0 0
        %3057 = vmatprep.subr.bf16.mxu0 0
        %3058 = vmatpush1.bf16.msra.mxu0 0
        %3059 = vmatprep.subr.bf16.mxu0 0
        %3060 = vmatpush1.bf16.msra.mxu0 0
        %3061 = vmatprep.subr.bf16.mxu0 0
        %3062 = vmatpush1.bf16.msra.mxu0 0
        %3063 = vmatprep.subr.bf16.mxu0 0
        %3064 = vmatpush1.bf16.msra.mxu0 0
        %3065 = vmatprep.subr.bf16.mxu0 0
        %3066 = vmatpush1.bf16.msra.mxu0 0
        %3067 = vmatprep.subr.bf16.mxu0 0
        %3068 = vmatpush1.bf16.msra.mxu0 0
        %3069 = vmatprep.subr.bf16.mxu0 0
        %3070 = vmatpush1.bf16.msra.mxu0 0
        %3071 = vmatprep.subr.bf16.mxu0 0
        %3072 = vmatpush1.bf16.msra.mxu0 0
        %3073 = vmatprep.subr.bf16.mxu0 0
        %3074 = vmatpush1.bf16.msra.mxu0 0
        %3075 = vmatprep.mubr.bf16.mxu0 0
        %3076 = vmatmul.mubr.bf16.gmra.mrb[0].mxu0 %v3041
        %v3077 = vpop.f32.mrb[0].mxu0
        %v3078 = vadd.f32 0.0, %v3077
        %v3079 = vpop.f32.mrb[0].mxu0
        %v3080 = vadd.f32 0.0, %v3079
        %v3081 = vpop.f32.mrb[0].mxu0
        %v3082 = vpop.f32.mrb[0].mxu0
        %3083 = vdwg.mxu0
        %v3086 = vrot.slane %v3078, 5
        %v3087 = vrot.slane %v3080, 5
        %v3090 = vadd.f32 %v2752, %v3086
        %v3091 = vadd.f32 %v2754, %v3087
        %v3092 = vxor.u32 %v3090, 2147483648
        %v3093 = vxor.u32 %v3091, 2147483648
        %v3094 = vmul.f32 %v3092, 1.442695
        %v3095 = vpow.pop %v3094
        %v3096 = vmul.f32 %v3093, 1.442695
        %v3097 = vpow.pop %v3096
        %v3098 = vadd.f32 %v3095, 1.0
        %v3099 = vadd.f32 %v3097, 1.0
        %v3100 = vrcp.pop %v3098
        %v3101 = vmul.f32 1.0, %v3100
        %v3102 = vrcp.pop %v3099
        %v3103 = vmul.f32 1.0, %v3102
        %v3104 = vtanh.pop %v3091
        %v3106 = vrot.slane %v3032, 7
        %v3108 = vmul.f32 %v3101, %v3106
        %v3109 = vmul.f32 %v3101, %v3104
        %3111 = vrot.lane.b32.xlu0 %v3109, 64
        %v3112 = vpop.permute.xlu0 %3111
        %v3114 = vadd.f32 %v3108, %v3112
        %v3115 = vtanh.pop %v3114
        %v3116 = vmul.f32 %v3103, %v3115
        %v3117 = vsel %vm2644, %v2870, %v2951
        %v3118 = vsel %vm2646, %v3117, %v3034
        %v3119 = vsel %vm2648, %v3118, %v3116
        %v3120 = vpack.c.bf16 %v3119, %v3119
        %v3121 = vld [vmem:[%s9] sm:$0xff]
        %v3122 = vld [vmem:[%s9 + $0x8] sm:$0xff]
        %v3123 = vld [vmem:[%s9 + $0x10] sm:$0xff]
        %v3124 = vld [vmem:[%s9 + $0x18] sm:$0xff]
        %v3125 = vld [vmem:[%s9 + $0x20] sm:$0xff]
        %v3126 = vld [vmem:[%s9 + $0x28] sm:$0xff]
        %v3127 = vld [vmem:[%s9 + $0x30] sm:$0xff]
        %v3128 = vld [vmem:[%s9 + $0x38] sm:$0xff]
        %v3129 = vld [vmem:[%s11] sm:$0x3]
        %v3131 = vlaneseq
        %v3132 = vshrl.u32 %v3131, 7
        %v3133 = vsub.s32 0, %v3132
        %v3134 = vrot.slane %v3129, %v3133
        %v3135 = vlaneseq
        %v3136 = vshrl.u32 %v3135, 7
        %v3137 = vsub.s32 1, %v3136
        %v3138 = vrot.slane %v3129, %v3137
        %3142 = vrot.lane.b32.xlu0 %v3120, 64
        %v3143 = vpop.permute.xlu0 %3142
        %v3152 = vunpack.c.l.b16 %v3121
        %v3153 = vunpack.c.h.b16 %v3121
        %v3154 = vunpack.c.l.b16 %v3122
        %v3155 = vunpack.c.h.b16 %v3122
        %v3156 = vunpack.c.l.b16 %v3123
        %v3157 = vunpack.c.h.b16 %v3123
        %v3158 = vunpack.c.l.b16 %v3124
        %v3159 = vunpack.c.h.b16 %v3124
        %v3160 = vunpack.c.l.b16 %v3125
        %v3161 = vunpack.c.h.b16 %v3125
        %v3162 = vunpack.c.l.b16 %v3126
        %v3163 = vunpack.c.h.b16 %v3126
        %v3164 = vunpack.c.l.b16 %v3127
        %v3165 = vunpack.c.h.b16 %v3127
        %v3166 = vunpack.c.l.b16 %v3128
        %v3167 = vunpack.c.h.b16 %v3128
        %v3168 = vpack.c.b16 %v3154, %v3152
        %v3169 = vpack.c.b16 %v3155, %v3153
        %v3170 = vpack.c.b16 %v3158, %v3156
        %v3171 = vpack.c.b16 %v3159, %v3157
        %v3172 = vpack.c.b16 %v3162, %v3160
        %v3173 = vpack.c.b16 %v3163, %v3161
        %v3174 = vpack.c.b16 %v3166, %v3164
        %v3175 = vpack.c.b16 %v3167, %v3165
        %v3185 = vsel %vm2329, %v3143, 0
        %3187 = vmatprep.subr.bf16.mxu0 %v3169
        %3188 = vmatpush1.bf16.msra.mxu0 %v3168
        %3189 = vmatprep.subr.bf16.mxu0 %v3171
        %3190 = vmatpush1.bf16.msra.mxu0 %v3170
        %3191 = vmatprep.subr.bf16.mxu0 %v3173
        %3192 = vmatpush1.bf16.msra.mxu0 %v3172
        %3193 = vmatprep.subr.bf16.mxu0 %v3175
        %3194 = vmatpush1.bf16.msra.mxu0 %v3174
        %3195 = vmatprep.subr.bf16.mxu0 0
        %3196 = vmatpush1.bf16.msra.mxu0 0
        %3197 = vmatprep.subr.bf16.mxu0 0
        %3198 = vmatpush1.bf16.msra.mxu0 0
        %3199 = vmatprep.subr.bf16.mxu0 0
        %3200 = vmatpush1.bf16.msra.mxu0 0
        %3201 = vmatprep.subr.bf16.mxu0 0
        %3202 = vmatpush1.bf16.msra.mxu0 0
        %3203 = vmatprep.subr.bf16.mxu0 0
        %3204 = vmatpush1.bf16.msra.mxu0 0
        %3205 = vmatprep.subr.bf16.mxu0 0
        %3206 = vmatpush1.bf16.msra.mxu0 0
        %3207 = vmatprep.subr.bf16.mxu0 0
        %3208 = vmatpush1.bf16.msra.mxu0 0
        %3209 = vmatprep.subr.bf16.mxu0 0
        %3210 = vmatpush1.bf16.msra.mxu0 0
        %3211 = vmatprep.subr.bf16.mxu0 0
        %3212 = vmatpush1.bf16.msra.mxu0 0
        %3213 = vmatprep.subr.bf16.mxu0 0
        %3214 = vmatpush1.bf16.msra.mxu0 0
        %3215 = vmatprep.subr.bf16.mxu0 0
        %3216 = vmatpush1.bf16.msra.mxu0 0
        %3217 = vmatprep.subr.bf16.mxu0 0
        %3218 = vmatpush1.bf16.msra.mxu0 0
        %3219 = vmatprep.mubr.bf16.mxu0 0
        %3220 = vmatmul.mubr.bf16.gmra.mrb[0].mxu0 %v3185
        %v3221 = vpop.f32.mrb[0].mxu0
        %v3222 = vadd.f32 %v3134, %v3221
        %v3223 = vpop.f32.mrb[0].mxu0
        %v3224 = vadd.f32 %v3138, %v3223
        %v3225 = vpop.f32.mrb[0].mxu0
        %v3226 = vpop.f32.mrb[0].mxu0
        %3227 = vdwg.mxu0
        %v3228 = vld [vmem:[%s10] sm:$0xff]
        %v3229 = vld [vmem:[%s10 + $0x8] sm:$0xff]
        %v3230 = vld [vmem:[%s10 + $0x10] sm:$0xff]
        %v3231 = vld [vmem:[%s10 + $0x18] sm:$0xff]
        %v3232 = vld [vmem:[%s10 + $0x20] sm:$0xff]
        %v3233 = vld [vmem:[%s10 + $0x28] sm:$0xff]
        %v3234 = vld [vmem:[%s10 + $0x30] sm:$0xff]
        %v3235 = vld [vmem:[%s10 + $0x38] sm:$0xff]
        %v3244 = vunpack.c.l.b16 %v3228
        %v3245 = vunpack.c.h.b16 %v3228
        %v3246 = vunpack.c.l.b16 %v3229
        %v3247 = vunpack.c.h.b16 %v3229
        %v3248 = vunpack.c.l.b16 %v3230
        %v3249 = vunpack.c.h.b16 %v3230
        %v3250 = vunpack.c.l.b16 %v3231
        %v3251 = vunpack.c.h.b16 %v3231
        %v3252 = vunpack.c.l.b16 %v3232
        %v3253 = vunpack.c.h.b16 %v3232
        %v3254 = vunpack.c.l.b16 %v3233
        %v3255 = vunpack.c.h.b16 %v3233
        %v3256 = vunpack.c.l.b16 %v3234
        %v3257 = vunpack.c.h.b16 %v3234
        %v3258 = vunpack.c.l.b16 %v3235
        %v3259 = vunpack.c.h.b16 %v3235
        %v3260 = vpack.c.b16 %v3246, %v3244
        %v3261 = vpack.c.b16 %v3247, %v3245
        %v3262 = vpack.c.b16 %v3250, %v3248
        %v3263 = vpack.c.b16 %v3251, %v3249
        %v3264 = vpack.c.b16 %v3254, %v3252
        %v3265 = vpack.c.b16 %v3255, %v3253
        %v3266 = vpack.c.b16 %v3258, %v3256
        %v3267 = vpack.c.b16 %v3259, %v3257
        %3276 = vmatprep.subr.bf16.mxu0 %v3261
        %3277 = vmatpush1.bf16.msra.mxu0 %v3260
        %3278 = vmatprep.subr.bf16.mxu0 %v3263
        %3279 = vmatpush1.bf16.msra.mxu0 %v3262
        %3280 = vmatprep.subr.bf16.mxu0 %v3265
        %3281 = vmatpush1.bf16.msra.mxu0 %v3264
        %3282 = vmatprep.subr.bf16.mxu0 %v3267
        %3283 = vmatpush1.bf16.msra.mxu0 %v3266
        %3284 = vmatprep.subr.bf16.mxu0 0
        %3285 = vmatpush1.bf16.msra.mxu0 0
        %3286 = vmatprep.subr.bf16.mxu0 0
        %3287 = vmatpush1.bf16.msra.mxu0 0
        %3288 = vmatprep.subr.bf16.mxu0 0
        %3289 = vmatpush1.bf16.msra.mxu0 0
        %3290 = vmatprep.subr.bf16.mxu0 0
        %3291 = vmatpush1.bf16.msra.mxu0 0
        %3292 = vmatprep.subr.bf16.mxu0 0
        %3293 = vmatpush1.bf16.msra.mxu0 0
        %3294 = vmatprep.subr.bf16.mxu0 0
        %3295 = vmatpush1.bf16.msra.mxu0 0
        %3296 = vmatprep.subr.bf16.mxu0 0
        %3297 = vmatpush1.bf16.msra.mxu0 0
        %3298 = vmatprep.subr.bf16.mxu0 0
        %3299 = vmatpush1.bf16.msra.mxu0 0
        %3300 = vmatprep.subr.bf16.mxu0 0
        %3301 = vmatpush1.bf16.msra.mxu0 0
        %3302 = vmatprep.subr.bf16.mxu0 0
        %3303 = vmatpush1.bf16.msra.mxu0 0
        %3304 = vmatprep.subr.bf16.mxu0 0
        %3305 = vmatpush1.bf16.msra.mxu0 0
        %3306 = vmatprep.subr.bf16.mxu0 0
        %3307 = vmatpush1.bf16.msra.mxu0 0
        %3308 = vmatprep.mubr.bf16.mxu0 0
        %3309 = vmatmul.mubr.bf16.gmra.mrb[0].mxu0 %v2331
        %v3310 = vpop.f32.mrb[0].mxu0
        %v3311 = vadd.f32 0.0, %v3310
        %v3312 = vpop.f32.mrb[0].mxu0
        %v3313 = vadd.f32 0.0, %v3312
        %v3314 = vpop.f32.mrb[0].mxu0
        %v3315 = vpop.f32.mrb[0].mxu0
        %3316 = vdwg.mxu0
        %v3317 = vadd.f32 %v3222, %v3311
        %v3318 = vadd.f32 %v3224, %v3313
        %v3319 = vxor.u32 %v3317, 2147483648
        %v3320 = vxor.u32 %v3318, 2147483648
        %v3321 = vmul.f32 %v3319, 1.442695
        %v3322 = vpow.pop %v3321
        %v3323 = vmul.f32 %v3320, 1.442695
        %v3324 = vpow.pop %v3323
        %v3325 = vadd.f32 %v3322, 1.0
        %v3326 = vadd.f32 %v3324, 1.0
        %v3327 = vrcp.pop %v3325
        %v3328 = vmul.f32 1.0, %v3327
        %v3329 = vrcp.pop %v3326
        %v3330 = vmul.f32 1.0, %v3329
        %v3331 = vtanh.pop %v3318
        %v3332 = vmul.f32 %v3328, 0.0
        %v3333 = vmul.f32 %v3328, %v3331
        %3335 = vrot.lane.b32.xlu0 %v3333, 64
        %v3336 = vpop.permute.xlu0 %3335
        %v3338 = vadd.f32 %v3332, %v3336
        %v3339 = vtanh.pop %v3338
        %v3340 = vmul.f32 %v3330, %v3339
        %v3341 = vpack.c.bf16 %v3340, %v3340
        %3343 = vrot.lane.b32.xlu0 %v3341, 64
        %v3344 = vpop.permute.xlu0 %3343
        %v3346 = vsel %vm2329, %v3344, 0
        %3348 = vmatprep.subr.bf16.mxu0 %v3261
        %3349 = vmatpush1.bf16.msra.mxu0 %v3260
        %3350 = vmatprep.subr.bf16.mxu0 %v3263
        %3351 = vmatpush1.bf16.msra.mxu0 %v3262
        %3352 = vmatprep.subr.bf16.mxu0 %v3265
        %3353 = vmatpush1.bf16.msra.mxu0 %v3264
        %3354 = vmatprep.subr.bf16.mxu0 %v3267
        %3355 = vmatpush1.bf16.msra.mxu0 %v3266
        %3356 = vmatprep.subr.bf16.mxu0 0
        %3357 = vmatpush1.bf16.msra.mxu0 0
        %3358 = vmatprep.subr.bf16.mxu0 0
        %3359 = vmatpush1.bf16.msra.mxu0 0
        %3360 = vmatprep.subr.bf16.mxu0 0
        %3361 = vmatpush1.bf16.msra.mxu0 0
        %3362 = vmatprep.subr.bf16.mxu0 0
        %3363 = vmatpush1.bf16.msra.mxu0 0
        %3364 = vmatprep.subr.bf16.mxu0 0
        %3365 = vmatpush1.bf16.msra.mxu0 0
        %3366 = vmatprep.subr.bf16.mxu0 0
        %3367 = vmatpush1.bf16.msra.mxu0 0
        %3368 = vmatprep.subr.bf16.mxu0 0
        %3369 = vmatpush1.bf16.msra.mxu0 0
        %3370 = vmatprep.subr.bf16.mxu0 0
        %3371 = vmatpush1.bf16.msra.mxu0 0
        %3372 = vmatprep.subr.bf16.mxu0 0
        %3373 = vmatpush1.bf16.msra.mxu0 0
        %3374 = vmatprep.subr.bf16.mxu0 0
        %3375 = vmatpush1.bf16.msra.mxu0 0
        %3376 = vmatprep.subr.bf16.mxu0 0
        %3377 = vmatpush1.bf16.msra.mxu0 0
        %3378 = vmatprep.subr.bf16.mxu0 0
        %3379 = vmatpush1.bf16.msra.mxu0 0
        %3380 = vmatprep.mubr.bf16.mxu0 0
        %3381 = vmatmul.mubr.bf16.gmra.mrb[0].mxu0 %v3346
        %v3382 = vpop.f32.mrb[0].mxu0
        %v3383 = vadd.f32 0.0, %v3382
        %v3384 = vpop.f32.mrb[0].mxu0
        %v3385 = vadd.f32 0.0, %v3384
        %v3386 = vpop.f32.mrb[0].mxu0
        %v3387 = vpop.f32.mrb[0].mxu0
        %3388 = vdwg.mxu0
        %v3391 = vrot.slane %v3383, 7
        %v3392 = vrot.slane %v3385, 7
        %v3395 = vadd.f32 %v3222, %v3391
        %v3396 = vadd.f32 %v3224, %v3392
        %v3397 = vxor.u32 %v3395, 2147483648
        %v3398 = vxor.u32 %v3396, 2147483648
        %v3399 = vmul.f32 %v3397, 1.442695
        %v3400 = vpow.pop %v3399
        %v3401 = vmul.f32 %v3398, 1.442695
        %v3402 = vpow.pop %v3401
        %v3403 = vadd.f32 %v3400, 1.0
        %v3404 = vadd.f32 %v3402, 1.0
        %v3405 = vrcp.pop %v3403
        %v3406 = vmul.f32 1.0, %v3405
        %v3407 = vrcp.pop %v3404
        %v3408 = vmul.f32 1.0, %v3407
        %v3409 = vtanh.pop %v3396
        %v3411 = vrot.slane %v3338, 7
        %v3413 = vmul.f32 %v3406, %v3411
        %v3414 = vmul.f32 %v3406, %v3409
        %3416 = vrot.lane.b32.xlu0 %v3414, 64
        %v3417 = vpop.permute.xlu0 %3416
        %v3419 = vadd.f32 %v3413, %v3417
        %v3420 = vtanh.pop %v3419
        %v3421 = vmul.f32 %v3408, %v3420
        %v3422 = vpack.c.bf16 %v3421, %v3421
        %v3424 = vshrl.u32 %v3422, 16
        %3426 = vrot.lane.b32.xlu0 %v3424, 64
        %v3427 = vpop.permute.xlu0 %3426
        %v3429 = vsel %vm2329, %v3427, 0
        %3431 = vmatprep.subr.bf16.mxu0 %v3261
        %3432 = vmatpush1.bf16.msra.mxu0 %v3260
        %3433 = vmatprep.subr.bf16.mxu0 %v3263
        %3434 = vmatpush1.bf16.msra.mxu0 %v3262
        %3435 = vmatprep.subr.bf16.mxu0 %v3265
        %3436 = vmatpush1.bf16.msra.mxu0 %v3264
        %3437 = vmatprep.subr.bf16.mxu0 %v3267
        %3438 = vmatpush1.bf16.msra.mxu0 %v3266
        %3439 = vmatprep.subr.bf16.mxu0 0
        %3440 = vmatpush1.bf16.msra.mxu0 0
        %3441 = vmatprep.subr.bf16.mxu0 0
        %3442 = vmatpush1.bf16.msra.mxu0 0
        %3443 = vmatprep.subr.bf16.mxu0 0
        %3444 = vmatpush1.bf16.msra.mxu0 0
        %3445 = vmatprep.subr.bf16.mxu0 0
        %3446 = vmatpush1.bf16.msra.mxu0 0
        %3447 = vmatprep.subr.bf16.mxu0 0
        %3448 = vmatpush1.bf16.msra.mxu0 0
        %3449 = vmatprep.subr.bf16.mxu0 0
        %3450 = vmatpush1.bf16.msra.mxu0 0
        %3451 = vmatprep.subr.bf16.mxu0 0
        %3452 = vmatpush1.bf16.msra.mxu0 0
        %3453 = vmatprep.subr.bf16.mxu0 0
        %3454 = vmatpush1.bf16.msra.mxu0 0
        %3455 = vmatprep.subr.bf16.mxu0 0
        %3456 = vmatpush1.bf16.msra.mxu0 0
        %3457 = vmatprep.subr.bf16.mxu0 0
        %3458 = vmatpush1.bf16.msra.mxu0 0
        %3459 = vmatprep.subr.bf16.mxu0 0
        %3460 = vmatpush1.bf16.msra.mxu0 0
        %3461 = vmatprep.subr.bf16.mxu0 0
        %3462 = vmatpush1.bf16.msra.mxu0 0
        %3463 = vmatprep.mubr.bf16.mxu0 0
        %3464 = vmatmul.mubr.bf16.gmra.mrb[0].mxu0 %v3429
        %v3465 = vpop.f32.mrb[0].mxu0
        %v3466 = vadd.f32 0.0, %v3465
        %v3467 = vpop.f32.mrb[0].mxu0
        %v3468 = vadd.f32 0.0, %v3467
        %v3469 = vpop.f32.mrb[0].mxu0
        %v3470 = vpop.f32.mrb[0].mxu0
        %3471 = vdwg.mxu0
        %v3474 = vrot.slane %v3466, 6
        %v3475 = vrot.slane %v3468, 6
        %v3478 = vadd.f32 %v3222, %v3474
        %v3479 = vadd.f32 %v3224, %v3475
        %v3480 = vxor.u32 %v3478, 2147483648
        %v3481 = vxor.u32 %v3479, 2147483648
        %v3482 = vmul.f32 %v3480, 1.442695
        %v3483 = vpow.pop %v3482
        %v3484 = vmul.f32 %v3481, 1.442695
        %v3485 = vpow.pop %v3484
        %v3486 = vadd.f32 %v3483, 1.0
        %v3487 = vadd.f32 %v3485, 1.0
        %v3488 = vrcp.pop %v3486
        %v3489 = vmul.f32 1.0, %v3488
        %v3490 = vrcp.pop %v3487
        %v3491 = vmul.f32 1.0, %v3490
        %v3492 = vtanh.pop %v3479
        %v3494 = vrot.slane %v3419, 7
        %v3496 = vmul.f32 %v3489, %v3494
        %v3497 = vmul.f32 %v3489, %v3492
        %3499 = vrot.lane.b32.xlu0 %v3497, 64
        %v3500 = vpop.permute.xlu0 %3499
        %v3502 = vadd.f32 %v3496, %v3500
        %v3503 = vtanh.pop %v3502
        %v3504 = vmul.f32 %v3491, %v3503
        %v3505 = vpack.c.bf16 %v3504, %v3504
        %v3507 = vrot.slane %v3505, 1
        %3508 = vrot.lane.b32.xlu0 %v3507, 64
        %v3509 = vpop.permute.xlu0 %3508
        %v3511 = vsel %vm2329, %v3509, 0
        %3513 = vmatprep.subr.bf16.mxu0 %v3261
        %3514 = vmatpush1.bf16.msra.mxu0 %v3260
        %3515 = vmatprep.subr.bf16.mxu0 %v3263
        %3516 = vmatpush1.bf16.msra.mxu0 %v3262
        %3517 = vmatprep.subr.bf16.mxu0 %v3265
        %3518 = vmatpush1.bf16.msra.mxu0 %v3264
        %3519 = vmatprep.subr.bf16.mxu0 %v3267
        %3520 = vmatpush1.bf16.msra.mxu0 %v3266
        %3521 = vmatprep.subr.bf16.mxu0 0
        %3522 = vmatpush1.bf16.msra.mxu0 0
        %3523 = vmatprep.subr.bf16.mxu0 0
        %3524 = vmatpush1.bf16.msra.mxu0 0
        %3525 = vmatprep.subr.bf16.mxu0 0
        %3526 = vmatpush1.bf16.msra.mxu0 0
        %3527 = vmatprep.subr.bf16.mxu0 0
        %3528 = vmatpush1.bf16.msra.mxu0 0
        %3529 = vmatprep.subr.bf16.mxu0 0
        %3530 = vmatpush1.bf16.msra.mxu0 0
        %3531 = vmatprep.subr.bf16.mxu0 0
        %3532 = vmatpush1.bf16.msra.mxu0 0
        %3533 = vmatprep.subr.bf16.mxu0 0
        %3534 = vmatpush1.bf16.msra.mxu0 0
        %3535 = vmatprep.subr.bf16.mxu0 0
        %3536 = vmatpush1.bf16.msra.mxu0 0
        %3537 = vmatprep.subr.bf16.mxu0 0
        %3538 = vmatpush1.bf16.msra.mxu0 0
        %3539 = vmatprep.subr.bf16.mxu0 0
        %3540 = vmatpush1.bf16.msra.mxu0 0
        %3541 = vmatprep.subr.bf16.mxu0 0
        %3542 = vmatpush1.bf16.msra.mxu0 0
        %3543 = vmatprep.subr.bf16.mxu0 0
        %3544 = vmatpush1.bf16.msra.mxu0 0
        %3545 = vmatprep.mubr.bf16.mxu0 0
        %3546 = vmatmul.mubr.bf16.gmra.mrb[0].mxu0 %v3511
        %v3547 = vpop.f32.mrb[0].mxu0
        %v3548 = vadd.f32 0.0, %v3547
        %v3549 = vpop.f32.mrb[0].mxu0
        %v3550 = vadd.f32 0.0, %v3549
        %v3551 = vpop.f32.mrb[0].mxu0
        %v3552 = vpop.f32.mrb[0].mxu0
        %3553 = vdwg.mxu0
        %v3556 = vrot.slane %v3548, 5
        %v3557 = vrot.slane %v3550, 5
        %v3560 = vadd.f32 %v3222, %v3556
        %v3561 = vadd.f32 %v3224, %v3557
        %v3562 = vxor.u32 %v3560, 2147483648
        %v3563 = vxor.u32 %v3561, 2147483648
        %v3564 = vmul.f32 %v3562, 1.442695
        %v3565 = vpow.pop %v3564
        %v3566 = vmul.f32 %v3563, 1.442695
        %v3567 = vpow.pop %v3566
        %v3568 = vadd.f32 %v3565, 1.0
        %v3569 = vadd.f32 %v3567, 1.0
        %v3570 = vrcp.pop %v3568
        %v3571 = vmul.f32 1.0, %v3570
        %v3572 = vrcp.pop %v3569
        %v3573 = vmul.f32 1.0, %v3572
        %v3574 = vtanh.pop %v3561
        %v3576 = vrot.slane %v3502, 7
        %v3578 = vmul.f32 %v3571, %v3576
        %v3579 = vmul.f32 %v3571, %v3574
        %3581 = vrot.lane.b32.xlu0 %v3579, 64
        %v3582 = vpop.permute.xlu0 %3581
        %v3584 = vadd.f32 %v3578, %v3582
        %v3585 = vtanh.pop %v3584
        %v3586 = vmul.f32 %v3573, %v3585
        %v3587 = vpack.c.bf16 %v3586, %v3586
        %v3588 = vld [vmem:[%s12] sm:$0xf]
        %v3589 = vld [vmem:[%s12 + $0x4] sm:$0xf]
        %v3590 = vld [vmem:[%s12 + $0x8] sm:$0xf]
        %v3591 = vld [vmem:[%s12 + $0xc] sm:$0xf]
        %v3592 = vld [vmem:[%s12 + $0x10] sm:$0xf]
        %v3593 = vld [vmem:[%s12 + $0x14] sm:$0xf]
        %v3594 = vld [vmem:[%s12 + $0x18] sm:$0xf]
        %v3595 = vld [vmem:[%s12 + $0x1c] sm:$0xf]
        %v3596 = vld [vmem:[%s13] sm:$0x1]
        %v3598 = vshrl.u32 %v3587, 16
        %v3600 = vrot.slane %v3598, 1
        %3601 = vrot.lane.b32.xlu0 %v3600, 64
        %v3602 = vpop.permute.xlu0 %3601
        %v3611 = vunpack.c.l.b16 %v3588
        %v3612 = vunpack.c.l.b16 %v3589
        %v3613 = vunpack.c.l.b16 %v3590
        %v3614 = vunpack.c.l.b16 %v3591
        %v3615 = vunpack.c.l.b16 %v3592
        %v3616 = vunpack.c.l.b16 %v3593
        %v3617 = vunpack.c.l.b16 %v3594
        %v3618 = vunpack.c.l.b16 %v3595
        %v3619 = vpack.c.b16 %v3612, %v3611
        %v3620 = vpack.c.b16 %v3614, %v3613
        %v3621 = vpack.c.b16 %v3616, %v3615
        %v3622 = vpack.c.b16 %v3618, %v3617
        %v3628 = vsel %vm2329, %v3602, 0
        %3630 = vmatprep.subr.bf16.mxu0 0
        %3631 = vmatpush1.bf16.msra.mxu0 %v3619
        %3632 = vmatprep.subr.bf16.mxu0 0
        %3633 = vmatpush1.bf16.msra.mxu0 %v3620
        %3634 = vmatprep.subr.bf16.mxu0 0
        %3635 = vmatpush1.bf16.msra.mxu0 %v3621
        %3636 = vmatprep.subr.bf16.mxu0 0
        %3637 = vmatpush1.bf16.msra.mxu0 %v3622
        %3638 = vmatprep.subr.bf16.mxu0 0
        %3639 = vmatpush1.bf16.msra.mxu0 0
        %3640 = vmatprep.subr.bf16.mxu0 0
        %3641 = vmatpush1.bf16.msra.mxu0 0
        %3642 = vmatprep.subr.bf16.mxu0 0
        %3643 = vmatpush1.bf16.msra.mxu0 0
        %3644 = vmatprep.subr.bf16.mxu0 0
        %3645 = vmatpush1.bf16.msra.mxu0 0
        %3646 = vmatprep.subr.bf16.mxu0 0
        %3647 = vmatpush1.bf16.msra.mxu0 0
        %3648 = vmatprep.subr.bf16.mxu0 0
        %3649 = vmatpush1.bf16.msra.mxu0 0
        %3650 = vmatprep.subr.bf16.mxu0 0
        %3651 = vmatpush1.bf16.msra.mxu0 0
        %3652 = vmatprep.subr.bf16.mxu0 0
        %3653 = vmatpush1.bf16.msra.mxu0 0
        %3654 = vmatprep.subr.bf16.mxu0 0
        %3655 = vmatpush1.bf16.msra.mxu0 0
        %3656 = vmatprep.subr.bf16.mxu0 0
        %3657 = vmatpush1.bf16.msra.mxu0 0
        %3658 = vmatprep.subr.bf16.mxu0 0
        %3659 = vmatpush1.bf16.msra.mxu0 0
        %3660 = vmatprep.subr.bf16.mxu0 0
        %3661 = vmatpush1.bf16.msra.mxu0 0
        %3662 = vmatprep.mubr.bf16.mxu0 0
        %3663 = vmatmul.mubr.bf16.gmra.mrb[0].mxu0 %v3628
        %v3664 = vpop.f32.mrb[0].mxu0
        %v3665 = vadd.f32 %v3596, %v3664
        %v3666 = vpop.f32.mrb[0].mxu0
        %v3667 = vpop.f32.mrb[0].mxu0
        %v3668 = vpop.f32.mrb[0].mxu0
        %3669 = vdwg.mxu0
        %vm3670 = vcmask 155648
        %3671 = vst.msk [vmem:[%s459] sm:$0x1] %vm3670, %v3665
        %s3672 = sand.u32 %s335, 1
        %s3673 = scalar_lea.sflag [#allocation3], %s3672
        %s3674 = sand.u32 %s335, 1
        %s3675 = scalar_lea.vmem [#allocation2], %s3674
        // Predicated region
        $region77: #{forward.1} parent=75 // pred_check
          %p3676 = pneg %p345
        $region78: #{forward.1} parent=75 // pred_check_branch
          %3678 = sbr.rel (%p3676) target = $region80
        $region79: #{forward.1} parent=75 // pred_region
          %s3680 = ssub.s32 16, 16
          %3681 = vsyncadd %s3673, %s3680
          %s3682 = smul.addr %s28, 16
          %s3683 = scalar_lea.hbm %s14, %s3682
          %s3685 = sshll.u32 %s3675, 4
          %s3686 = int_to_ptr.vmem [resolvable:$true] %s3685
          %3688 = dma.vmem_to_hbm [thread:$0]  %s3686, 16, %s3683, %s3673
        $region80: #{forward.1} parent=75 // pred_fallthru
          _
      $region76: #{forward.1} parent=5 // pred_fallthru
        _
      %p3689 = scmp.le.s32.totalorder 2, %s23
      // Predicated region
      $region81: #{forward.1} parent=5 // pred_check
        %p3690 = pneg %p3689
      $region82: #{forward.1} parent=5 // pred_check_branch
        %3692 = sbr.rel (%p3690) target = $region84
      $region83: #{forward.1} parent=5 // pred_region
        %s3693 = ssub.s32 %s23, 2
        // Predicated region
        $region85: #{forward.1} parent=83 // pred_check
          %p3694 = pneg %p351
        $region86: #{forward.1} parent=83 // pred_check_branch
          %3696 = sbr.rel (%p3694) target = $region88
        $region87: #{forward.1} parent=83 // pred_region
          %s3697 = sand.u32 %s336, 1
          %s3698 = scalar_lea.sflag [#allocation3], %s3697
          %s3699 = sand.u32 %s336, 1
          %s3700 = scalar_lea.vmem [#allocation2], %s3699
          %3701 = dma.done %s3698, 16
        $region88: #{forward.1} parent=83 // pred_fallthru
          _
      $region84: #{forward.1} parent=5 // pred_fallthru
        _
    $region6: #{forward.1} parent=1 // loop_footer
      %s27 = sadd.s32 1, %s23
    $region7: #{forward.1} parent=1 // loop_footer_branch
      %22 = sbr.rel target = $region3
    $region8: #{forward.1} parent=1 // loop_exit
      _
    %3702 = vsyncpa [#allocation3], 1
    %s3703 = scalar_lea.sflag [#allocation3], 1
    %3704 = vsyncpa %s3703, 1

</llo_original>
